<compile_context>
chip_gen: v7x
topology: tpu7x:2x2x1
jax: 0.10.0
libtpu: 0.0.40
codegen_flags: <defaults>
</compile_context>

<pallas_src>
import functools

import numpy as np
import jax
import jax.numpy as jnp
from jax import lax
from jax.experimental import pallas as pl
from jax.experimental.pallas import tpu as pltpu

LANE = 128      # lane tile (last dim)
SUBLANE = 8     # f32 sublane tile (second-to-last dim)
_XW_VMEM_BUDGET = 4 * 1024 * 1024   # byte budget for the hoisted-projection scratch chunk


def _round_up(x, m):
    return (x + m - 1) // m * m


def _choose_batch_block(batch):
    """Pick batch rows per grid step (multiple of 8, <= 128) and the padded batch size.

    Guarantees >= 2 grid steps so the "parallel" batch axis can use both TensorCores on
    v7x.  For tiny batches the second chunk is pure padding (cheap at those sizes).
    """
    bp0 = _round_up(max(batch, 1), SUBLANE)
    if bp0 >= 2 * LANE:
        bb = LANE
    else:
        bb = max(SUBLANE, _round_up(-(-bp0 // 2), SUBLANE))
    bp = _round_up(max(bp0, 2 * bb), bb)
    return bb, bp


def _vmem_limit_bytes():
    """Per-generation scoped-VMEM budget: v7x has 64 MiB physical, v5e/v6e have 128 MiB."""
    try:
        kind = jax.devices()[0].device_kind.lower()
    except Exception:
        kind = ""
    if "7" in kind:
        return 48 * 1024 * 1024
    return 96 * 1024 * 1024


# ----------------------------- fused Pallas kernel -------------------------- #

def _make_fused_kernel(num_layers, T, BB, Hp, tc, cdt):
    """Fused kernel: num_layers LSTM layers + ReLU + FC in one call.

    Ref order (inputs ... output ... scratch):
      x_ref                       (T, BB, Dp)     time-major input batch-chunk (f32)
      per layer l: w_ih_ref_l     (Din_l, 4*Hp)   input->gates   (compute dtype)
                   w_hh_ref_l     (Hp,    4*Hp)   hidden->gates  (compute dtype)
                   b_ref_l        (1,     4*Hp)   b_ih + b_hh    (f32)
      w_fc_ref                    (Hp, Op)        (compute dtype)
      b_fc_ref                    (1,  Op)        (f32)
      out_ref                     (BB, Op)        (f32)
      seq_a, seq_b                (T, BB, Hp)     VMEM ping-pong inter-layer sequences
      xw_ref                      (tc, BB, 4*Hp)  VMEM hoisted input projection (f32, chunked)
    """

    def kernel(*refs):
        x_ref = refs[0]
        pos = 1
        layer_refs = []
        for _ in range(num_layers):
            layer_refs.append(refs[pos:pos + 3])
            pos += 3
        w_fc_ref, b_fc_ref = refs[pos], refs[pos + 1]
        out_ref = refs[pos + 2]
        seq_a, seq_b, xw_ref = refs[pos + 3], refs[pos + 4], refs[pos + 5]

        def run_layer(in_ref, w_ih_ref, w_hh_ref, b_ref, y_ref, write_y):
            din = in_ref.shape[-1]
            h = jnp.zeros((BB, Hp), jnp.float32)   # h0 = c0 = 0 (matches torch.zeros)
            c = jnp.zeros((BB, Hp), jnp.float32)

            # Time is processed in chunks so the hoisted projection scratch stays bounded.
            for c0 in range(0, T, tc):
                steps = min(tc, T - c0)

                # Hoisted input projection for this chunk: ONE big MXU matmul
                # (steps*BB, din) @ (din, 4Hp) instead of `steps` tiny ones in the loop.
                x_chunk = in_ref[c0:c0 + steps].astype(cdt).reshape(steps * BB, din)
                proj = jnp.dot(x_chunk, w_ih_ref[...],
                               preferred_element_type=jnp.float32) + b_ref[...]
                xw_ref[0:steps] = proj.reshape(steps, BB, 4 * Hp)

                def step(t, carry):
                    h, c = carry
                    gates = xw_ref[t] + jnp.dot(
                        h.astype(cdt), w_hh_ref[...],
                        preferred_element_type=jnp.float32)
                    # Hp is a multiple of 128 -> every gate slice is lane-tile aligned.
                    i_g = jax.nn.sigmoid(gates[:, 0 * Hp:1 * Hp])
                    f_g = jax.nn.sigmoid(gates[:, 1 * Hp:2 * Hp])
                    g_g = jnp.tanh(gates[:, 2 * Hp:3 * Hp])
                    o_g = jax.nn.sigmoid(gates[:, 3 * Hp:4 * Hp])
                    c_new = f_g * c + i_g * g_g
                    h_new = o_g * jnp.tanh(c_new)
                    if write_y:  # the last layer only needs h at t = T-1
                        y_ref[c0 + t] = h_new.astype(y_ref.dtype)
                    return h_new, c_new

                # Full unroll only for short chunks; partial unroll otherwise to keep
                # vreg live ranges bounded (only 64 vregs).
                unroll = steps if steps <= 16 else 8
                h, c = lax.fori_loop(0, steps, step, (h, c), unroll=unroll)

            return h

        cur_in = x_ref
        bufs = (seq_a, seq_b)
        h_last = None
        for l in range(num_layers):
            w_ih_ref, w_hh_ref, b_ref = layer_refs[l]
            h_last = run_layer(cur_in, w_ih_ref, w_hh_ref, b_ref,
                               bufs[l % 2], write_y=(l < num_layers - 1))
            cur_in = bufs[l % 2]

        # Final ReLU + FC fused in the same kernel; lane-dense (Op = multiple of 128).
        out_ref[...] = (
            jnp.dot(jnp.maximum(h_last, 0.0).astype(cdt), w_fc_ref[...],
                    preferred_element_type=jnp.float32)
            + b_fc_ref[...]
        )

    return kernel


# ----------------------------- one-time weight prepacking ------------------- #

def _pad_gate_matrix(w_t, H, Hp, din, dinp):
    """(din, 4H) torch-transposed gate matrix -> (dinp, 4*Hp), each gate Hp-padded."""
    out = jnp.zeros((dinp, 4 * Hp), jnp.float32)
    for g in range(4):
        out = out.at[:din, g * Hp:g * Hp + H].set(w_t[:, g * H:(g + 1) * H])
    return out


def _pad_gate_bias(b, H, Hp):
    out = jnp.zeros((1, 4 * Hp), jnp.float32)
    for g in range(4):
        out = out.at[0, g * Hp:g * Hp + H].set(b[g * H:(g + 1) * H])
    return out


def prepack_params(params, compute_dtype=jnp.bfloat16):
    """One-time transpose + gate-padding + dtype cast of all weights.

    Gate ordering follows PyTorch [i, f, g, o]; biases are combined (b_ih + b_hh) and
    kept f32 (they are added to f32 accumulators).  Matmul operands are cast to
    `compute_dtype` (bf16 by default; pass jnp.float32 for a bit-tighter path).
    """
    H = params["lstm"][0][1].shape[1]            # w_hh: (4H, H)
    Din = params["lstm"][0][0].shape[1]          # w_ih layer 0: (4H, Din)
    O = params["w_fc"].shape[0]
    Hp = _round_up(H, LANE)
    Dp = _round_up(Din, LANE)
    Op = _round_up(O, LANE)

    layers = []
    for li, (w_ih, w_hh, b_ih, b_hh) in enumerate(params["lstm"]):
        din, dinp = (Din, Dp) if li == 0 else (H, Hp)
        w_ih_p = _pad_gate_matrix(jnp.transpose(w_ih).astype(jnp.float32),
                                  H, Hp, din, dinp).astype(compute_dtype)
        w_hh_p = _pad_gate_matrix(jnp.transpose(w_hh).astype(jnp.float32),
                                  H, Hp, H, Hp).astype(compute_dtype)
        b_p = _pad_gate_bias((b_ih + b_hh).astype(jnp.float32), H, Hp)
        layers.append((w_ih_p, w_hh_p, b_p))

    w_fc_p = jnp.zeros((Hp, Op), jnp.float32).at[:H, :O].set(
        jnp.transpose(params["w_fc"]).astype(jnp.float32)).astype(compute_dtype)
    b_fc_p = jnp.zeros((1, Op), jnp.float32).at[0, :O].set(
        params["b_fc"].astype(jnp.float32))

    return {"layers": tuple(layers), "w_fc": w_fc_p, "b_fc": b_fc_p,
            "out_size": int(O)}


# ----------------------------- forward wrapper ------------------------------ #

@functools.partial(jax.jit, static_argnames=("out_size",))
def _lstm_srs_forward(x, layers, w_fc_p, b_fc_p, *, out_size):
    B, T, Din = x.shape
    num_layers = len(layers)
    Hp = layers[0][1].shape[0]            # w_hh_p: (Hp, 4Hp)
    Dp = layers[0][0].shape[0]            # w_ih_p layer 0: (Dp, 4Hp)
    Op = w_fc_p.shape[1]
    cdt = w_fc_p.dtype                    # compute dtype for matmul operands

    BB, Bp = _choose_batch_block(B)

    # Time-major, zero-padded input (padded batch rows / feature lanes stay inert).
    x_tm = jnp.transpose(x, (1, 0, 2)).astype(jnp.float32)
    x_tm = jnp.pad(x_tm, ((0, 0), (0, Bp - B), (0, Dp - Din)))

    # Hoisted-projection time-chunk size: keep the xw scratch within a small VMEM budget.
    tc = max(1, min(T, _XW_VMEM_BUDGET // (BB * 4 * Hp * 4)))

    # Weights never change across the batch grid: single-buffered, whole-array VMEM refs.
    wspec = pl.BlockSpec(memory_space=pltpu.MemorySpace.VMEM)

    inputs = [x_tm]
    in_specs = [pl.BlockSpec((T, BB, Dp), lambda i: (0, i, 0))]
    for (w_ih_p, w_hh_p, b_p) in layers:
        inputs += [w_ih_p, w_hh_p, b_p]
        in_specs += [wspec, wspec, wspec]
    inputs += [w_fc_p, b_fc_p]
    in_specs += [wspec, wspec]

    kernel = _make_fused_kernel(num_layers, T, BB, Hp, tc, cdt)

    out_padded = pl.pallas_call(
        kernel,
        out_shape=jax.ShapeDtypeStruct((Bp, Op), jnp.float32),
        grid=(Bp // BB,),
        in_specs=in_specs,
        out_specs=pl.BlockSpec((BB, Op), lambda i: (i, 0)),
        scratch_shapes=[
            pltpu.VMEM((T, BB, Hp), cdt),               # inter-layer seq (ping)
            pltpu.VMEM((T, BB, Hp), cdt),               # inter-layer seq (pong)
            pltpu.VMEM((tc, BB, 4 * Hp), jnp.float32),  # hoisted x @ W_ih + b (chunked)
        ],
        compiler_params=pltpu.CompilerParams(
            dimension_semantics=("parallel",),          # batch chunks -> both TCs on v7x
            vmem_limit_bytes=_vmem_limit_bytes(),
        ),
    )(*inputs)

    return out_padded[:B, :out_size]


def lstm_srs_forward(x, packed):
    """x: (B, T, input_size) -> (B, output_size). Single fused Pallas call."""
    return _lstm_srs_forward(x, packed["layers"], packed["w_fc"], packed["b_fc"],
                             out_size=packed["out_size"])


# ----------------------------- reference (pure JAX) -------------------------- #

def reference_forward(x, params):
    B, T, _ = x.shape
    seq = jnp.transpose(x, (1, 0, 2)).astype(jnp.float32)
    for (w_ih, w_hh, b_ih, b_hh) in params["lstm"]:
        H = w_hh.shape[1]
        h = jnp.zeros((B, H), jnp.float32)
        c = jnp.zeros((B, H), jnp.float32)
        outs = []
        for t in range(T):
            gates = seq[t] @ w_ih.T + h @ w_hh.T + b_ih + b_hh
            i_g = jax.nn.sigmoid(gates[:, 0 * H:1 * H])
            f_g = jax.nn.sigmoid(gates[:, 1 * H:2 * H])
            g_g = jnp.tanh(gates[:, 2 * H:3 * H])
            o_g = jax.nn.sigmoid(gates[:, 3 * H:4 * H])
            c = f_g * c + i_g * g_g
            h = o_g * jnp.tanh(c)
            outs.append(h)
        seq = jnp.stack(outs, axis=0)
    h_last = seq[-1]
    return jnp.maximum(h_last, 0.0) @ params["w_fc"].T + params["b_fc"]


# ----------------------------- param init ------------------------------------ #

def init_params(key, input_size, hidden_size, num_layers, output_size):
    """Deterministic init mimicking PyTorch's U(-1/sqrt(H), 1/sqrt(H))."""
    k = 1.0 / np.sqrt(hidden_size)
    lstm = []
    for layer in range(num_layers):
        din = input_size if layer == 0 else hidden_size
        key, k1, k2, k3, k4 = jax.random.split(key, 5)
        w_ih = jax.random.uniform(k1, (4 * hidden_size, din), jnp.float32, -k, k)
        w_hh = jax.random.uniform(k2, (4 * hidden_size, hidden_size), jnp.float32, -k, k)
        b_ih = jax.random.uniform(k3, (4 * hidden_size,), jnp.float32, -k, k)
        b_hh = jax.random.uniform(k4, (4 * hidden_size,), jnp.float32, -k, k)
        lstm.append((w_ih, w_hh, b_ih, b_hh))
    key, k5, k6 = jax.random.split(key, 3)
    w_fc = jax.random.uniform(k5, (output_size, hidden_size), jnp.float32, -k, k)
    b_fc = jax.random.uniform(k6, (output_size,), jnp.float32, -k, k)
    return {"lstm": lstm, "w_fc": w_fc, "b_fc": b_fc}


# ----------------------------- main ------------------------------------------ #

if __name__ == "__main__":
    input_size, hidden_size, num_layers, output_size = 16, 32, 2, 4
    batch, seq_len = 2, 8

    key = jax.random.PRNGKey(0)
    key, xkey = jax.random.split(key)
    x = jax.random.normal(xkey, (batch, seq_len, input_size), jnp.float32)
    params = init_params(key, input_size, hidden_size, num_layers, output_size)

    ref = reference_forward(x, params)

    # f32 matmul-operand path: tight check against the f32 reference.
    packed_f32 = prepack_params(params, compute_dtype=jnp.float32)
    out_f32 = jax.block_until_ready(lstm_srs_forward(x, packed_f32))
    np.testing.assert_allclose(np.asarray(out_f32), np.asarray(ref),
                               rtol=1e-4, atol=1e-4)

    # bf16 matmul-operand path (production default): f32 accumulate, looser tolerance.
    packed_bf16 = prepack_params(params, compute_dtype=jnp.bfloat16)
    out = jax.block_until_ready(lstm_srs_forward(x, packed_bf16))
    np.testing.assert_allclose(np.asarray(out), np.asarray(ref),
                               rtol=3e-2, atol=3e-2)

    assert out.shape == (batch, output_size)
    print("KERNEL_OK")
</pallas_src>

<mosaic_0001>
module attributes {stable_mosaic.version = 11 : i64} {
  func.func @kernel(%arg0: i32, %arg1: memref<8x8x128xf32, #tpu.memory_space<vmem>>, %arg2: memref<128x512xf32, #tpu.memory_space<vmem>>, %arg3: memref<128x512xf32, #tpu.memory_space<vmem>>, %arg4: memref<1x512xf32, #tpu.memory_space<vmem>>, %arg5: memref<128x512xf32, #tpu.memory_space<vmem>>, %arg6: memref<128x512xf32, #tpu.memory_space<vmem>>, %arg7: memref<1x512xf32, #tpu.memory_space<vmem>>, %arg8: memref<128x128xf32, #tpu.memory_space<vmem>>, %arg9: memref<1x128xf32, #tpu.memory_space<vmem>>, %arg10: memref<8x128xf32, #tpu.memory_space<vmem>>, %arg11: memref<8x8x128xf32, #tpu.memory_space<vmem>>, %arg12: memref<8x8x128xf32, #tpu.memory_space<vmem>>, %arg13: memref<8x8x512xf32, #tpu.memory_space<vmem>>) attributes {dimension_semantics = [#tpu.dimension_semantics<parallel>], iteration_bounds = array<i64: 2>, scalar_prefetch = 0 : i64, scratch_operands = 3 : i64, tpu.core_type = #tpu.core_type<tc>, window_params = [{transform_indices = @transform_0, window_bounds = array<i64: 8, 8, 128>}, {pipeline_mode = #tpu.pipeline_mode<synchronous>, transform_indices = @transform_1, window_bounds = array<i64: 128, 512>}, {pipeline_mode = #tpu.pipeline_mode<synchronous>, transform_indices = @transform_2, window_bounds = array<i64: 128, 512>}, {pipeline_mode = #tpu.pipeline_mode<synchronous>, transform_indices = @transform_3, window_bounds = array<i64: 1, 512>}, {pipeline_mode = #tpu.pipeline_mode<synchronous>, transform_indices = @transform_4, window_bounds = array<i64: 128, 512>}, {pipeline_mode = #tpu.pipeline_mode<synchronous>, transform_indices = @transform_5, window_bounds = array<i64: 128, 512>}, {pipeline_mode = #tpu.pipeline_mode<synchronous>, transform_indices = @transform_6, window_bounds = array<i64: 1, 512>}, {pipeline_mode = #tpu.pipeline_mode<synchronous>, transform_indices = @transform_7, window_bounds = array<i64: 128, 128>}, {pipeline_mode = #tpu.pipeline_mode<synchronous>, transform_indices = @transform_8, window_bounds = array<i64: 1, 128>}, {transform_indices = @transform_9, window_bounds = array<i64: 8, 128>}]} {
    %cst = arith.constant 0.000000e+00 : f32
    %0 = vector.broadcast %cst : f32 to vector<8x128xf32>
    %cst_0 = arith.constant 0.000000e+00 : f32
    %1 = vector.broadcast %cst_0 : f32 to vector<8x128xf32>
    %c0 = arith.constant 0 : index
    %c0_1 = arith.constant 0 : index
    %c0_2 = arith.constant 0 : index
    %2 = vector.load %arg1[%c0, %c0_1, %c0_2] : memref<8x8x128xf32, #tpu.memory_space<vmem>>, vector<8x8x128xf32>
    %3 = vector.shape_cast %2 : vector<8x8x128xf32> to vector<64x128xf32>
    %c0_3 = arith.constant 0 : index
    %c0_4 = arith.constant 0 : index
    %4 = vector.load %arg2[%c0_3, %c0_4] : memref<128x512xf32, #tpu.memory_space<vmem>>, vector<128x512xf32>
    %cst_5 = arith.constant dense<0.000000e+00> : vector<64x512xf32>
    %5 = tpu.matmul %3, %4, %cst_5 {dimension_numbers = #tpu.dot_dimension_numbers<[1], [0], [0], [1], [0, 0, 1, 1], [], []>} : vector<64x128xf32>, vector<128x512xf32>, vector<64x512xf32> -> vector<64x512xf32>
    %c0_6 = arith.constant 0 : index
    %c0_7 = arith.constant 0 : index
    %6 = vector.load %arg4[%c0_6, %c0_7] : memref<1x512xf32, #tpu.memory_space<vmem>>, vector<1x512xf32>
    %7 = vector.broadcast %6 : vector<1x512xf32> to vector<64x512xf32>
    %8 = arith.addf %5, %7 : vector<64x512xf32>
    %9 = vector.shape_cast %8 : vector<64x512xf32> to vector<8x8x512xf32>
    %c0_8 = arith.constant 0 : index
    %c0_9 = arith.constant 0 : index
    %c0_10 = arith.constant 0 : index
    %10 = vector.load %arg13[%c0_8, %c0_9, %c0_10] : memref<8x8x512xf32, #tpu.memory_space<vmem>>, vector<8x8x512xf32>
    tpu.vector_store %arg13[%c0_8, %c0_9, %c0_10], %9 {strides = array<i32>} : memref<8x8x512xf32, #tpu.memory_space<vmem>>, vector<8x8x512xf32>,
    %c0_i32 = arith.constant 0 : i32
    %11 = arith.index_cast %c0_i32 : i32 to index
    %c0_11 = arith.constant 0 : index
    %c0_12 = arith.constant 0 : index
    %12 = vector.load %arg13[%11, %c0_11, %c0_12] : memref<8x8x512xf32, #tpu.memory_space<vmem>>, vector<1x8x512xf32>
    %13 = vector.shape_cast %12 : vector<1x8x512xf32> to vector<8x512xf32>
    %c0_13 = arith.constant 0 : index
    %c0_14 = arith.constant 0 : index
    %14 = vector.load %arg3[%c0_13, %c0_14] : memref<128x512xf32, #tpu.memory_space<vmem>>, vector<128x512xf32>
    %cst_15 = arith.constant dense<0.000000e+00> : vector<8x512xf32>
    %15 = tpu.matmul %0, %14, %cst_15 {dimension_numbers = #tpu.dot_dimension_numbers<[1], [0], [0], [1], [0, 0, 1, 1], [], []>} : vector<8x128xf32>, vector<128x512xf32>, vector<8x512xf32> -> vector<8x512xf32>
    %16 = arith.addf %13, %15 : vector<8x512xf32>
    %17 = vector.extract_strided_slice %16 {offsets = [0, 0], sizes = [8, 128], strides = [1, 1]} : vector<8x512xf32> to vector<8x128xf32>
    %18 = arith.negf %17 : vector<8x128xf32>
    %19 = math.exp %18 : vector<8x128xf32>
    %cst_16 = arith.constant 1.000000e+00 : f32
    %20 = vector.broadcast %cst_16 : f32 to vector<8x128xf32>
    %21 = arith.addf %20, %19 : vector<8x128xf32>
    %22 = arith.divf %20, %21 : vector<8x128xf32>
    %23 = vector.extract_strided_slice %16 {offsets = [0, 128], sizes = [8, 128], strides = [1, 1]} : vector<8x512xf32> to vector<8x128xf32>
    %24 = arith.negf %23 : vector<8x128xf32>
    %25 = math.exp %24 : vector<8x128xf32>
    %cst_17 = arith.constant 1.000000e+00 : f32
    %26 = vector.broadcast %cst_17 : f32 to vector<8x128xf32>
    %27 = arith.addf %26, %25 : vector<8x128xf32>
    %28 = arith.divf %26, %27 : vector<8x128xf32>
    %29 = vector.extract_strided_slice %16 {offsets = [0, 256], sizes = [8, 128], strides = [1, 1]} : vector<8x512xf32> to vector<8x128xf32>
    %30 = math.tanh %29 : vector<8x128xf32>
    %31 = vector.extract_strided_slice %16 {offsets = [0, 384], sizes = [8, 128], strides = [1, 1]} : vector<8x512xf32> to vector<8x128xf32>
    %32 = arith.negf %31 : vector<8x128xf32>
    %33 = math.exp %32 : vector<8x128xf32>
    %cst_18 = arith.constant 1.000000e+00 : f32
    %34 = vector.broadcast %cst_18 : f32 to vector<8x128xf32>
    %35 = arith.addf %34, %33 : vector<8x128xf32>
    %36 = arith.divf %34, %35 : vector<8x128xf32>
    %37 = arith.mulf %28, %1 : vector<8x128xf32>
    %38 = arith.mulf %22, %30 : vector<8x128xf32>
    %39 = arith.addf %37, %38 : vector<8x128xf32>
    %40 = math.tanh %39 : vector<8x128xf32>
    %41 = arith.mulf %36, %40 : vector<8x128xf32>
    %c0_i32_19 = arith.constant 0 : i32
    %42 = arith.addi %c0_i32_19, %c0_i32 : i32
    %43 = arith.index_cast %42 : i32 to index
    %c0_20 = arith.constant 0 : index
    %c0_21 = arith.constant 0 : index
    %44 = vector.load %arg11[%43, %c0_20, %c0_21] : memref<8x8x128xf32, #tpu.memory_space<vmem>>, vector<1x8x128xf32>
    %45 = vector.shape_cast %44 : vector<1x8x128xf32> to vector<8x128xf32>
    %46 = vector.shape_cast %41 : vector<8x128xf32> to vector<1x8x128xf32>
    tpu.vector_store %arg11[%43, %c0_20, %c0_21], %46 {strides = array<i32>} : memref<8x8x128xf32, #tpu.memory_space<vmem>>, vector<1x8x128xf32>,
    %c1_i32 = arith.constant 1 : i32
    %47 = arith.index_cast %c1_i32 : i32 to index
    %c0_22 = arith.constant 0 : index
    %c0_23 = arith.constant 0 : index
    %48 = vector.load %arg13[%47, %c0_22, %c0_23] : memref<8x8x512xf32, #tpu.memory_space<vmem>>, vector<1x8x512xf32>
    %49 = vector.shape_cast %48 : vector<1x8x512xf32> to vector<8x512xf32>
    %c0_24 = arith.constant 0 : index
    %c0_25 = arith.constant 0 : index
    %50 = vector.load %arg3[%c0_24, %c0_25] : memref<128x512xf32, #tpu.memory_space<vmem>>, vector<128x512xf32>
    %cst_26 = arith.constant dense<0.000000e+00> : vector<8x512xf32>
    %51 = tpu.matmul %41, %50, %cst_26 {dimension_numbers = #tpu.dot_dimension_numbers<[1], [0], [0], [1], [0, 0, 1, 1], [], []>} : vector<8x128xf32>, vector<128x512xf32>, vector<8x512xf32> -> vector<8x512xf32>
    %52 = arith.addf %49, %51 : vector<8x512xf32>
    %53 = vector.extract_strided_slice %52 {offsets = [0, 0], sizes = [8, 128], strides = [1, 1]} : vector<8x512xf32> to vector<8x128xf32>
    %54 = arith.negf %53 : vector<8x128xf32>
    %55 = math.exp %54 : vector<8x128xf32>
    %cst_27 = arith.constant 1.000000e+00 : f32
    %56 = vector.broadcast %cst_27 : f32 to vector<8x128xf32>
    %57 = arith.addf %56, %55 : vector<8x128xf32>
    %58 = arith.divf %56, %57 : vector<8x128xf32>
    %59 = vector.extract_strided_slice %52 {offsets = [0, 128], sizes = [8, 128], strides = [1, 1]} : vector<8x512xf32> to vector<8x128xf32>
    %60 = arith.negf %59 : vector<8x128xf32>
    %61 = math.exp %60 : vector<8x128xf32>
    %cst_28 = arith.constant 1.000000e+00 : f32
    %62 = vector.broadcast %cst_28 : f32 to vector<8x128xf32>
    %63 = arith.addf %62, %61 : vector<8x128xf32>
    %64 = arith.divf %62, %63 : vector<8x128xf32>
    %65 = vector.extract_strided_slice %52 {offsets = [0, 256], sizes = [8, 128], strides = [1, 1]} : vector<8x512xf32> to vector<8x128xf32>
    %66 = math.tanh %65 : vector<8x128xf32>
    %67 = vector.extract_strided_slice %52 {offsets = [0, 384], sizes = [8, 128], strides = [1, 1]} : vector<8x512xf32> to vector<8x128xf32>
    %68 = arith.negf %67 : vector<8x128xf32>
    %69 = math.exp %68 : vector<8x128xf32>
    %cst_29 = arith.constant 1.000000e+00 : f32
    %70 = vector.broadcast %cst_29 : f32 to vector<8x128xf32>
    %71 = arith.addf %70, %69 : vector<8x128xf32>
    %72 = arith.divf %70, %71 : vector<8x128xf32>
    %73 = arith.mulf %64, %39 : vector<8x128xf32>
    %74 = arith.mulf %58, %66 : vector<8x128xf32>
    %75 = arith.addf %73, %74 : vector<8x128xf32>
    %76 = math.tanh %75 : vector<8x128xf32>
    %77 = arith.mulf %72, %76 : vector<8x128xf32>
    %c0_i32_30 = arith.constant 0 : i32
    %78 = arith.addi %c0_i32_30, %c1_i32 : i32
    %79 = arith.index_cast %78 : i32 to index
    %c0_31 = arith.constant 0 : index
    %c0_32 = arith.constant 0 : index
    %80 = vector.load %arg11[%79, %c0_31, %c0_32] : memref<8x8x128xf32, #tpu.memory_space<vmem>>, vector<1x8x128xf32>
    %81 = vector.shape_cast %80 : vector<1x8x128xf32> to vector<8x128xf32>
    %82 = vector.shape_cast %77 : vector<8x128xf32> to vector<1x8x128xf32>
    tpu.vector_store %arg11[%79, %c0_31, %c0_32], %82 {strides = array<i32>} : memref<8x8x128xf32, #tpu.memory_space<vmem>>, vector<1x8x128xf32>,
    %c2_i32 = arith.constant 2 : i32
    %83 = arith.index_cast %c2_i32 : i32 to index
    %c0_33 = arith.constant 0 : index
    %c0_34 = arith.constant 0 : index
    %84 = vector.load %arg13[%83, %c0_33, %c0_34] : memref<8x8x512xf32, #tpu.memory_space<vmem>>, vector<1x8x512xf32>
    %85 = vector.shape_cast %84 : vector<1x8x512xf32> to vector<8x512xf32>
    %c0_35 = arith.constant 0 : index
    %c0_36 = arith.constant 0 : index
    %86 = vector.load %arg3[%c0_35, %c0_36] : memref<128x512xf32, #tpu.memory_space<vmem>>, vector<128x512xf32>
    %cst_37 = arith.constant dense<0.000000e+00> : vector<8x512xf32>
    %87 = tpu.matmul %77, %86, %cst_37 {dimension_numbers = #tpu.dot_dimension_numbers<[1], [0], [0], [1], [0, 0, 1, 1], [], []>} : vector<8x128xf32>, vector<128x512xf32>, vector<8x512xf32> -> vector<8x512xf32>
    %88 = arith.addf %85, %87 : vector<8x512xf32>
    %89 = vector.extract_strided_slice %88 {offsets = [0, 0], sizes = [8, 128], strides = [1, 1]} : vector<8x512xf32> to vector<8x128xf32>
    %90 = arith.negf %89 : vector<8x128xf32>
    %91 = math.exp %90 : vector<8x128xf32>
    %cst_38 = arith.constant 1.000000e+00 : f32
    %92 = vector.broadcast %cst_38 : f32 to vector<8x128xf32>
    %93 = arith.addf %92, %91 : vector<8x128xf32>
    %94 = arith.divf %92, %93 : vector<8x128xf32>
    %95 = vector.extract_strided_slice %88 {offsets = [0, 128], sizes = [8, 128], strides = [1, 1]} : vector<8x512xf32> to vector<8x128xf32>
    %96 = arith.negf %95 : vector<8x128xf32>
    %97 = math.exp %96 : vector<8x128xf32>
    %cst_39 = arith.constant 1.000000e+00 : f32
    %98 = vector.broadcast %cst_39 : f32 to vector<8x128xf32>
    %99 = arith.addf %98, %97 : vector<8x128xf32>
    %100 = arith.divf %98, %99 : vector<8x128xf32>
    %101 = vector.extract_strided_slice %88 {offsets = [0, 256], sizes = [8, 128], strides = [1, 1]} : vector<8x512xf32> to vector<8x128xf32>
    %102 = math.tanh %101 : vector<8x128xf32>
    %103 = vector.extract_strided_slice %88 {offsets = [0, 384], sizes = [8, 128], strides = [1, 1]} : vector<8x512xf32> to vector<8x128xf32>
    %104 = arith.negf %103 : vector<8x128xf32>
    %105 = math.exp %104 : vector<8x128xf32>
    %cst_40 = arith.constant 1.000000e+00 : f32
    %106 = vector.broadcast %cst_40 : f32 to vector<8x128xf32>
    %107 = arith.addf %106, %105 : vector<8x128xf32>
    %108 = arith.divf %106, %107 : vector<8x128xf32>
    %109 = arith.mulf %100, %75 : vector<8x128xf32>
    %110 = arith.mulf %94, %102 : vector<8x128xf32>
    %111 = arith.addf %109, %110 : vector<8x128xf32>
    %112 = math.tanh %111 : vector<8x128xf32>
    %113 = arith.mulf %108, %112 : vector<8x128xf32>
    %c0_i32_41 = arith.constant 0 : i32
    %114 = arith.addi %c0_i32_41, %c2_i32 : i32
    %115 = arith.index_cast %114 : i32 to index
    %c0_42 = arith.constant 0 : index
    %c0_43 = arith.constant 0 : index
    %116 = vector.load %arg11[%115, %c0_42, %c0_43] : memref<8x8x128xf32, #tpu.memory_space<vmem>>, vector<1x8x128xf32>
    %117 = vector.shape_cast %116 : vector<1x8x128xf32> to vector<8x128xf32>
    %118 = vector.shape_cast %113 : vector<8x128xf32> to vector<1x8x128xf32>
    tpu.vector_store %arg11[%115, %c0_42, %c0_43], %118 {strides = array<i32>} : memref<8x8x128xf32, #tpu.memory_space<vmem>>, vector<1x8x128xf32>,
    %c3_i32 = arith.constant 3 : i32
    %119 = arith.index_cast %c3_i32 : i32 to index
    %c0_44 = arith.constant 0 : index
    %c0_45 = arith.constant 0 : index
    %120 = vector.load %arg13[%119, %c0_44, %c0_45] : memref<8x8x512xf32, #tpu.memory_space<vmem>>, vector<1x8x512xf32>
    %121 = vector.shape_cast %120 : vector<1x8x512xf32> to vector<8x512xf32>
    %c0_46 = arith.constant 0 : index
    %c0_47 = arith.constant 0 : index
    %122 = vector.load %arg3[%c0_46, %c0_47] : memref<128x512xf32, #tpu.memory_space<vmem>>, vector<128x512xf32>
    %cst_48 = arith.constant dense<0.000000e+00> : vector<8x512xf32>
    %123 = tpu.matmul %113, %122, %cst_48 {dimension_numbers = #tpu.dot_dimension_numbers<[1], [0], [0], [1], [0, 0, 1, 1], [], []>} : vector<8x128xf32>, vector<128x512xf32>, vector<8x512xf32> -> vector<8x512xf32>
    %124 = arith.addf %121, %123 : vector<8x512xf32>
    %125 = vector.extract_strided_slice %124 {offsets = [0, 0], sizes = [8, 128], strides = [1, 1]} : vector<8x512xf32> to vector<8x128xf32>
    %126 = arith.negf %125 : vector<8x128xf32>
    %127 = math.exp %126 : vector<8x128xf32>
    %cst_49 = arith.constant 1.000000e+00 : f32
    %128 = vector.broadcast %cst_49 : f32 to vector<8x128xf32>
    %129 = arith.addf %128, %127 : vector<8x128xf32>
    %130 = arith.divf %128, %129 : vector<8x128xf32>
    %131 = vector.extract_strided_slice %124 {offsets = [0, 128], sizes = [8, 128], strides = [1, 1]} : vector<8x512xf32> to vector<8x128xf32>
    %132 = arith.negf %131 : vector<8x128xf32>
    %133 = math.exp %132 : vector<8x128xf32>
    %cst_50 = arith.constant 1.000000e+00 : f32
    %134 = vector.broadcast %cst_50 : f32 to vector<8x128xf32>
    %135 = arith.addf %134, %133 : vector<8x128xf32>
    %136 = arith.divf %134, %135 : vector<8x128xf32>
    %137 = vector.extract_strided_slice %124 {offsets = [0, 256], sizes = [8, 128], strides = [1, 1]} : vector<8x512xf32> to vector<8x128xf32>
    %138 = math.tanh %137 : vector<8x128xf32>
    %139 = vector.extract_strided_slice %124 {offsets = [0, 384], sizes = [8, 128], strides = [1, 1]} : vector<8x512xf32> to vector<8x128xf32>
    %140 = arith.negf %139 : vector<8x128xf32>
    %141 = math.exp %140 : vector<8x128xf32>
    %cst_51 = arith.constant 1.000000e+00 : f32
    %142 = vector.broadcast %cst_51 : f32 to vector<8x128xf32>
    %143 = arith.addf %142, %141 : vector<8x128xf32>
    %144 = arith.divf %142, %143 : vector<8x128xf32>
    %145 = arith.mulf %136, %111 : vector<8x128xf32>
    %146 = arith.mulf %130, %138 : vector<8x128xf32>
    %147 = arith.addf %145, %146 : vector<8x128xf32>
    %148 = math.tanh %147 : vector<8x128xf32>
    %149 = arith.mulf %144, %148 : vector<8x128xf32>
    %c0_i32_52 = arith.constant 0 : i32
    %150 = arith.addi %c0_i32_52, %c3_i32 : i32
    %151 = arith.index_cast %150 : i32 to index
    %c0_53 = arith.constant 0 : index
    %c0_54 = arith.constant 0 : index
    %152 = vector.load %arg11[%151, %c0_53, %c0_54] : memref<8x8x128xf32, #tpu.memory_space<vmem>>, vector<1x8x128xf32>
    %153 = vector.shape_cast %152 : vector<1x8x128xf32> to vector<8x128xf32>
    %154 = vector.shape_cast %149 : vector<8x128xf32> to vector<1x8x128xf32>
    tpu.vector_store %arg11[%151, %c0_53, %c0_54], %154 {strides = array<i32>} : memref<8x8x128xf32, #tpu.memory_space<vmem>>, vector<1x8x128xf32>,
    %c4_i32 = arith.constant 4 : i32
    %155 = arith.index_cast %c4_i32 : i32 to index
    %c0_55 = arith.constant 0 : index
    %c0_56 = arith.constant 0 : index
    %156 = vector.load %arg13[%155, %c0_55, %c0_56] : memref<8x8x512xf32, #tpu.memory_space<vmem>>, vector<1x8x512xf32>
    %157 = vector.shape_cast %156 : vector<1x8x512xf32> to vector<8x512xf32>
    %c0_57 = arith.constant 0 : index
    %c0_58 = arith.constant 0 : index
    %158 = vector.load %arg3[%c0_57, %c0_58] : memref<128x512xf32, #tpu.memory_space<vmem>>, vector<128x512xf32>
    %cst_59 = arith.constant dense<0.000000e+00> : vector<8x512xf32>
    %159 = tpu.matmul %149, %158, %cst_59 {dimension_numbers = #tpu.dot_dimension_numbers<[1], [0], [0], [1], [0, 0, 1, 1], [], []>} : vector<8x128xf32>, vector<128x512xf32>, vector<8x512xf32> -> vector<8x512xf32>
    %160 = arith.addf %157, %159 : vector<8x512xf32>
    %161 = vector.extract_strided_slice %160 {offsets = [0, 0], sizes = [8, 128], strides = [1, 1]} : vector<8x512xf32> to vector<8x128xf32>
    %162 = arith.negf %161 : vector<8x128xf32>
    %163 = math.exp %162 : vector<8x128xf32>
    %cst_60 = arith.constant 1.000000e+00 : f32
    %164 = vector.broadcast %cst_60 : f32 to vector<8x128xf32>
    %165 = arith.addf %164, %163 : vector<8x128xf32>
    %166 = arith.divf %164, %165 : vector<8x128xf32>
    %167 = vector.extract_strided_slice %160 {offsets = [0, 128], sizes = [8, 128], strides = [1, 1]} : vector<8x512xf32> to vector<8x128xf32>
    %168 = arith.negf %167 : vector<8x128xf32>
    %169 = math.exp %168 : vector<8x128xf32>
    %cst_61 = arith.constant 1.000000e+00 : f32
    %170 = vector.broadcast %cst_61 : f32 to vector<8x128xf32>
    %171 = arith.addf %170, %169 : vector<8x128xf32>
    %172 = arith.divf %170, %171 : vector<8x128xf32>
    %173 = vector.extract_strided_slice %160 {offsets = [0, 256], sizes = [8, 128], strides = [1, 1]} : vector<8x512xf32> to vector<8x128xf32>
    %174 = math.tanh %173 : vector<8x128xf32>
    %175 = vector.extract_strided_slice %160 {offsets = [0, 384], sizes = [8, 128], strides = [1, 1]} : vector<8x512xf32> to vector<8x128xf32>
    %176 = arith.negf %175 : vector<8x128xf32>
    %177 = math.exp %176 : vector<8x128xf32>
    %cst_62 = arith.constant 1.000000e+00 : f32
    %178 = vector.broadcast %cst_62 : f32 to vector<8x128xf32>
    %179 = arith.addf %178, %177 : vector<8x128xf32>
    %180 = arith.divf %178, %179 : vector<8x128xf32>
    %181 = arith.mulf %172, %147 : vector<8x128xf32>
    %182 = arith.mulf %166, %174 : vector<8x128xf32>
    %183 = arith.addf %181, %182 : vector<8x128xf32>
    %184 = math.tanh %183 : vector<8x128xf32>
    %185 = arith.mulf %180, %184 : vector<8x128xf32>
    %c0_i32_63 = arith.constant 0 : i32
    %186 = arith.addi %c0_i32_63, %c4_i32 : i32
    %187 = arith.index_cast %186 : i32 to index
    %c0_64 = arith.constant 0 : index
    %c0_65 = arith.constant 0 : index
    %188 = vector.load %arg11[%187, %c0_64, %c0_65] : memref<8x8x128xf32, #tpu.memory_space<vmem>>, vector<1x8x128xf32>
    %189 = vector.shape_cast %188 : vector<1x8x128xf32> to vector<8x128xf32>
    %190 = vector.shape_cast %185 : vector<8x128xf32> to vector<1x8x128xf32>
    tpu.vector_store %arg11[%187, %c0_64, %c0_65], %190 {strides = array<i32>} : memref<8x8x128xf32, #tpu.memory_space<vmem>>, vector<1x8x128xf32>,
    %c5_i32 = arith.constant 5 : i32
    %191 = arith.index_cast %c5_i32 : i32 to index
    %c0_66 = arith.constant 0 : index
    %c0_67 = arith.constant 0 : index
    %192 = vector.load %arg13[%191, %c0_66, %c0_67] : memref<8x8x512xf32, #tpu.memory_space<vmem>>, vector<1x8x512xf32>
    %193 = vector.shape_cast %192 : vector<1x8x512xf32> to vector<8x512xf32>
    %c0_68 = arith.constant 0 : index
    %c0_69 = arith.constant 0 : index
    %194 = vector.load %arg3[%c0_68, %c0_69] : memref<128x512xf32, #tpu.memory_space<vmem>>, vector<128x512xf32>
    %cst_70 = arith.constant dense<0.000000e+00> : vector<8x512xf32>
    %195 = tpu.matmul %185, %194, %cst_70 {dimension_numbers = #tpu.dot_dimension_numbers<[1], [0], [0], [1], [0, 0, 1, 1], [], []>} : vector<8x128xf32>, vector<128x512xf32>, vector<8x512xf32> -> vector<8x512xf32>
    %196 = arith.addf %193, %195 : vector<8x512xf32>
    %197 = vector.extract_strided_slice %196 {offsets = [0, 0], sizes = [8, 128], strides = [1, 1]} : vector<8x512xf32> to vector<8x128xf32>
    %198 = arith.negf %197 : vector<8x128xf32>
    %199 = math.exp %198 : vector<8x128xf32>
    %cst_71 = arith.constant 1.000000e+00 : f32
    %200 = vector.broadcast %cst_71 : f32 to vector<8x128xf32>
    %201 = arith.addf %200, %199 : vector<8x128xf32>
    %202 = arith.divf %200, %201 : vector<8x128xf32>
    %203 = vector.extract_strided_slice %196 {offsets = [0, 128], sizes = [8, 128], strides = [1, 1]} : vector<8x512xf32> to vector<8x128xf32>
    %204 = arith.negf %203 : vector<8x128xf32>
    %205 = math.exp %204 : vector<8x128xf32>
    %cst_72 = arith.constant 1.000000e+00 : f32
    %206 = vector.broadcast %cst_72 : f32 to vector<8x128xf32>
    %207 = arith.addf %206, %205 : vector<8x128xf32>
    %208 = arith.divf %206, %207 : vector<8x128xf32>
    %209 = vector.extract_strided_slice %196 {offsets = [0, 256], sizes = [8, 128], strides = [1, 1]} : vector<8x512xf32> to vector<8x128xf32>
    %210 = math.tanh %209 : vector<8x128xf32>
    %211 = vector.extract_strided_slice %196 {offsets = [0, 384], sizes = [8, 128], strides = [1, 1]} : vector<8x512xf32> to vector<8x128xf32>
    %212 = arith.negf %211 : vector<8x128xf32>
    %213 = math.exp %212 : vector<8x128xf32>
    %cst_73 = arith.constant 1.000000e+00 : f32
    %214 = vector.broadcast %cst_73 : f32 to vector<8x128xf32>
    %215 = arith.addf %214, %213 : vector<8x128xf32>
    %216 = arith.divf %214, %215 : vector<8x128xf32>
    %217 = arith.mulf %208, %183 : vector<8x128xf32>
    %218 = arith.mulf %202, %210 : vector<8x128xf32>
    %219 = arith.addf %217, %218 : vector<8x128xf32>
    %220 = math.tanh %219 : vector<8x128xf32>
    %221 = arith.mulf %216, %220 : vector<8x128xf32>
    %c0_i32_74 = arith.constant 0 : i32
    %222 = arith.addi %c0_i32_74, %c5_i32 : i32
    %223 = arith.index_cast %222 : i32 to index
    %c0_75 = arith.constant 0 : index
    %c0_76 = arith.constant 0 : index
    %224 = vector.load %arg11[%223, %c0_75, %c0_76] : memref<8x8x128xf32, #tpu.memory_space<vmem>>, vector<1x8x128xf32>
    %225 = vector.shape_cast %224 : vector<1x8x128xf32> to vector<8x128xf32>
    %226 = vector.shape_cast %221 : vector<8x128xf32> to vector<1x8x128xf32>
    tpu.vector_store %arg11[%223, %c0_75, %c0_76], %226 {strides = array<i32>} : memref<8x8x128xf32, #tpu.memory_space<vmem>>, vector<1x8x128xf32>,
    %c6_i32 = arith.constant 6 : i32
    %227 = arith.index_cast %c6_i32 : i32 to index
    %c0_77 = arith.constant 0 : index
    %c0_78 = arith.constant 0 : index
    %228 = vector.load %arg13[%227, %c0_77, %c0_78] : memref<8x8x512xf32, #tpu.memory_space<vmem>>, vector<1x8x512xf32>
    %229 = vector.shape_cast %228 : vector<1x8x512xf32> to vector<8x512xf32>
    %c0_79 = arith.constant 0 : index
    %c0_80 = arith.constant 0 : index
    %230 = vector.load %arg3[%c0_79, %c0_80] : memref<128x512xf32, #tpu.memory_space<vmem>>, vector<128x512xf32>
    %cst_81 = arith.constant dense<0.000000e+00> : vector<8x512xf32>
    %231 = tpu.matmul %221, %230, %cst_81 {dimension_numbers = #tpu.dot_dimension_numbers<[1], [0], [0], [1], [0, 0, 1, 1], [], []>} : vector<8x128xf32>, vector<128x512xf32>, vector<8x512xf32> -> vector<8x512xf32>
    %232 = arith.addf %229, %231 : vector<8x512xf32>
    %233 = vector.extract_strided_slice %232 {offsets = [0, 0], sizes = [8, 128], strides = [1, 1]} : vector<8x512xf32> to vector<8x128xf32>
    %234 = arith.negf %233 : vector<8x128xf32>
    %235 = math.exp %234 : vector<8x128xf32>
    %cst_82 = arith.constant 1.000000e+00 : f32
    %236 = vector.broadcast %cst_82 : f32 to vector<8x128xf32>
    %237 = arith.addf %236, %235 : vector<8x128xf32>
    %238 = arith.divf %236, %237 : vector<8x128xf32>
    %239 = vector.extract_strided_slice %232 {offsets = [0, 128], sizes = [8, 128], strides = [1, 1]} : vector<8x512xf32> to vector<8x128xf32>
    %240 = arith.negf %239 : vector<8x128xf32>
    %241 = math.exp %240 : vector<8x128xf32>
    %cst_83 = arith.constant 1.000000e+00 : f32
    %242 = vector.broadcast %cst_83 : f32 to vector<8x128xf32>
    %243 = arith.addf %242, %241 : vector<8x128xf32>
    %244 = arith.divf %242, %243 : vector<8x128xf32>
    %245 = vector.extract_strided_slice %232 {offsets = [0, 256], sizes = [8, 128], strides = [1, 1]} : vector<8x512xf32> to vector<8x128xf32>
    %246 = math.tanh %245 : vector<8x128xf32>
    %247 = vector.extract_strided_slice %232 {offsets = [0, 384], sizes = [8, 128], strides = [1, 1]} : vector<8x512xf32> to vector<8x128xf32>
    %248 = arith.negf %247 : vector<8x128xf32>
    %249 = math.exp %248 : vector<8x128xf32>
    %cst_84 = arith.constant 1.000000e+00 : f32
    %250 = vector.broadcast %cst_84 : f32 to vector<8x128xf32>
    %251 = arith.addf %250, %249 : vector<8x128xf32>
    %252 = arith.divf %250, %251 : vector<8x128xf32>
    %253 = arith.mulf %244, %219 : vector<8x128xf32>
    %254 = arith.mulf %238, %246 : vector<8x128xf32>
    %255 = arith.addf %253, %254 : vector<8x128xf32>
    %256 = math.tanh %255 : vector<8x128xf32>
    %257 = arith.mulf %252, %256 : vector<8x128xf32>
    %c0_i32_85 = arith.constant 0 : i32
    %258 = arith.addi %c0_i32_85, %c6_i32 : i32
    %259 = arith.index_cast %258 : i32 to index
    %c0_86 = arith.constant 0 : index
    %c0_87 = arith.constant 0 : index
    %260 = vector.load %arg11[%259, %c0_86, %c0_87] : memref<8x8x128xf32, #tpu.memory_space<vmem>>, vector<1x8x128xf32>
    %261 = vector.shape_cast %260 : vector<1x8x128xf32> to vector<8x128xf32>
    %262 = vector.shape_cast %257 : vector<8x128xf32> to vector<1x8x128xf32>
    tpu.vector_store %arg11[%259, %c0_86, %c0_87], %262 {strides = array<i32>} : memref<8x8x128xf32, #tpu.memory_space<vmem>>, vector<1x8x128xf32>,
    %c7_i32 = arith.constant 7 : i32
    %263 = arith.index_cast %c7_i32 : i32 to index
    %c0_88 = arith.constant 0 : index
    %c0_89 = arith.constant 0 : index
    %264 = vector.load %arg13[%263, %c0_88, %c0_89] : memref<8x8x512xf32, #tpu.memory_space<vmem>>, vector<1x8x512xf32>
    %265 = vector.shape_cast %264 : vector<1x8x512xf32> to vector<8x512xf32>
    %c0_90 = arith.constant 0 : index
    %c0_91 = arith.constant 0 : index
    %266 = vector.load %arg3[%c0_90, %c0_91] : memref<128x512xf32, #tpu.memory_space<vmem>>, vector<128x512xf32>
    %cst_92 = arith.constant dense<0.000000e+00> : vector<8x512xf32>
    %267 = tpu.matmul %257, %266, %cst_92 {dimension_numbers = #tpu.dot_dimension_numbers<[1], [0], [0], [1], [0, 0, 1, 1], [], []>} : vector<8x128xf32>, vector<128x512xf32>, vector<8x512xf32> -> vector<8x512xf32>
    %268 = arith.addf %265, %267 : vector<8x512xf32>
    %269 = vector.extract_strided_slice %268 {offsets = [0, 0], sizes = [8, 128], strides = [1, 1]} : vector<8x512xf32> to vector<8x128xf32>
    %270 = arith.negf %269 : vector<8x128xf32>
    %271 = math.exp %270 : vector<8x128xf32>
    %cst_93 = arith.constant 1.000000e+00 : f32
    %272 = vector.broadcast %cst_93 : f32 to vector<8x128xf32>
    %273 = arith.addf %272, %271 : vector<8x128xf32>
    %274 = arith.divf %272, %273 : vector<8x128xf32>
    %275 = vector.extract_strided_slice %268 {offsets = [0, 128], sizes = [8, 128], strides = [1, 1]} : vector<8x512xf32> to vector<8x128xf32>
    %276 = arith.negf %275 : vector<8x128xf32>
    %277 = math.exp %276 : vector<8x128xf32>
    %cst_94 = arith.constant 1.000000e+00 : f32
    %278 = vector.broadcast %cst_94 : f32 to vector<8x128xf32>
    %279 = arith.addf %278, %277 : vector<8x128xf32>
    %280 = arith.divf %278, %279 : vector<8x128xf32>
    %281 = vector.extract_strided_slice %268 {offsets = [0, 256], sizes = [8, 128], strides = [1, 1]} : vector<8x512xf32> to vector<8x128xf32>
    %282 = math.tanh %281 : vector<8x128xf32>
    %283 = vector.extract_strided_slice %268 {offsets = [0, 384], sizes = [8, 128], strides = [1, 1]} : vector<8x512xf32> to vector<8x128xf32>
    %284 = arith.negf %283 : vector<8x128xf32>
    %285 = math.exp %284 : vector<8x128xf32>
    %cst_95 = arith.constant 1.000000e+00 : f32
    %286 = vector.broadcast %cst_95 : f32 to vector<8x128xf32>
    %287 = arith.addf %286, %285 : vector<8x128xf32>
    %288 = arith.divf %286, %287 : vector<8x128xf32>
    %289 = arith.mulf %280, %255 : vector<8x128xf32>
    %290 = arith.mulf %274, %282 : vector<8x128xf32>
    %291 = arith.addf %289, %290 : vector<8x128xf32>
    %292 = math.tanh %291 : vector<8x128xf32>
    %293 = arith.mulf %288, %292 : vector<8x128xf32>
    %c0_i32_96 = arith.constant 0 : i32
    %294 = arith.addi %c0_i32_96, %c7_i32 : i32
    %295 = arith.index_cast %294 : i32 to index
    %c0_97 = arith.constant 0 : index
    %c0_98 = arith.constant 0 : index
    %296 = vector.load %arg11[%295, %c0_97, %c0_98] : memref<8x8x128xf32, #tpu.memory_space<vmem>>, vector<1x8x128xf32>
    %297 = vector.shape_cast %296 : vector<1x8x128xf32> to vector<8x128xf32>
    %298 = vector.shape_cast %293 : vector<8x128xf32> to vector<1x8x128xf32>
    tpu.vector_store %arg11[%295, %c0_97, %c0_98], %298 {strides = array<i32>} : memref<8x8x128xf32, #tpu.memory_space<vmem>>, vector<1x8x128xf32>,
    %c8_i32 = arith.constant 8 : i32
    %cst_99 = arith.constant 0.000000e+00 : f32
    %299 = vector.broadcast %cst_99 : f32 to vector<8x128xf32>
    %cst_100 = arith.constant 0.000000e+00 : f32
    %300 = vector.broadcast %cst_100 : f32 to vector<8x128xf32>
    %c0_101 = arith.constant 0 : index
    %c0_102 = arith.constant 0 : index
    %c0_103 = arith.constant 0 : index
    %301 = vector.load %arg11[%c0_101, %c0_102, %c0_103] : memref<8x8x128xf32, #tpu.memory_space<vmem>>, vector<8x8x128xf32>
    %302 = vector.shape_cast %301 : vector<8x8x128xf32> to vector<64x128xf32>
    %c0_104 = arith.constant 0 : index
    %c0_105 = arith.constant 0 : index
    %303 = vector.load %arg5[%c0_104, %c0_105] : memref<128x512xf32, #tpu.memory_space<vmem>>, vector<128x512xf32>
    %cst_106 = arith.constant dense<0.000000e+00> : vector<64x512xf32>
    %304 = tpu.matmul %302, %303, %cst_106 {dimension_numbers = #tpu.dot_dimension_numbers<[1], [0], [0], [1], [0, 0, 1, 1], [], []>} : vector<64x128xf32>, vector<128x512xf32>, vector<64x512xf32> -> vector<64x512xf32>
    %c0_107 = arith.constant 0 : index
    %c0_108 = arith.constant 0 : index
    %305 = vector.load %arg7[%c0_107, %c0_108] : memref<1x512xf32, #tpu.memory_space<vmem>>, vector<1x512xf32>
    %306 = vector.broadcast %305 : vector<1x512xf32> to vector<64x512xf32>
    %307 = arith.addf %304, %306 : vector<64x512xf32>
    %308 = vector.shape_cast %307 : vector<64x512xf32> to vector<8x8x512xf32>
    %c0_109 = arith.constant 0 : index
    %c0_110 = arith.constant 0 : index
    %c0_111 = arith.constant 0 : index
    %309 = vector.load %arg13[%c0_109, %c0_110, %c0_111] : memref<8x8x512xf32, #tpu.memory_space<vmem>>, vector<8x8x512xf32>
    tpu.vector_store %arg13[%c0_109, %c0_110, %c0_111], %308 {strides = array<i32>} : memref<8x8x512xf32, #tpu.memory_space<vmem>>, vector<8x8x512xf32>,
    %c0_i32_112 = arith.constant 0 : i32
    %310 = arith.index_cast %c0_i32_112 : i32 to index
    %c0_113 = arith.constant 0 : index
    %c0_114 = arith.constant 0 : index
    %311 = vector.load %arg13[%310, %c0_113, %c0_114] : memref<8x8x512xf32, #tpu.memory_space<vmem>>, vector<1x8x512xf32>
    %312 = vector.shape_cast %311 : vector<1x8x512xf32> to vector<8x512xf32>
    %c0_115 = arith.constant 0 : index
    %c0_116 = arith.constant 0 : index
    %313 = vector.load %arg6[%c0_115, %c0_116] : memref<128x512xf32, #tpu.memory_space<vmem>>, vector<128x512xf32>
    %cst_117 = arith.constant dense<0.000000e+00> : vector<8x512xf32>
    %314 = tpu.matmul %299, %313, %cst_117 {dimension_numbers = #tpu.dot_dimension_numbers<[1], [0], [0], [1], [0, 0, 1, 1], [], []>} : vector<8x128xf32>, vector<128x512xf32>, vector<8x512xf32> -> vector<8x512xf32>
    %315 = arith.addf %312, %314 : vector<8x512xf32>
    %316 = vector.extract_strided_slice %315 {offsets = [0, 0], sizes = [8, 128], strides = [1, 1]} : vector<8x512xf32> to vector<8x128xf32>
    %317 = arith.negf %316 : vector<8x128xf32>
    %318 = math.exp %317 : vector<8x128xf32>
    %cst_118 = arith.constant 1.000000e+00 : f32
    %319 = vector.broadcast %cst_118 : f32 to vector<8x128xf32>
    %320 = arith.addf %319, %318 : vector<8x128xf32>
    %321 = arith.divf %319, %320 : vector<8x128xf32>
    %322 = vector.extract_strided_slice %315 {offsets = [0, 128], sizes = [8, 128], strides = [1, 1]} : vector<8x512xf32> to vector<8x128xf32>
    %323 = arith.negf %322 : vector<8x128xf32>
    %324 = math.exp %323 : vector<8x128xf32>
    %cst_119 = arith.constant 1.000000e+00 : f32
    %325 = vector.broadcast %cst_119 : f32 to vector<8x128xf32>
    %326 = arith.addf %325, %324 : vector<8x128xf32>
    %327 = arith.divf %325, %326 : vector<8x128xf32>
    %328 = vector.extract_strided_slice %315 {offsets = [0, 256], sizes = [8, 128], strides = [1, 1]} : vector<8x512xf32> to vector<8x128xf32>
    %329 = math.tanh %328 : vector<8x128xf32>
    %330 = vector.extract_strided_slice %315 {offsets = [0, 384], sizes = [8, 128], strides = [1, 1]} : vector<8x512xf32> to vector<8x128xf32>
    %331 = arith.negf %330 : vector<8x128xf32>
    %332 = math.exp %331 : vector<8x128xf32>
    %cst_120 = arith.constant 1.000000e+00 : f32
    %333 = vector.broadcast %cst_120 : f32 to vector<8x128xf32>
    %334 = arith.addf %333, %332 : vector<8x128xf32>
    %335 = arith.divf %333, %334 : vector<8x128xf32>
    %336 = arith.mulf %327, %300 : vector<8x128xf32>
    %337 = arith.mulf %321, %329 : vector<8x128xf32>
    %338 = arith.addf %336, %337 : vector<8x128xf32>
    %339 = math.tanh %338 : vector<8x128xf32>
    %340 = arith.mulf %335, %339 : vector<8x128xf32>
    %c1_i32_121 = arith.constant 1 : i32
    %341 = arith.index_cast %c1_i32_121 : i32 to index
    %c0_122 = arith.constant 0 : index
    %c0_123 = arith.constant 0 : index
    %342 = vector.load %arg13[%341, %c0_122, %c0_123] : memref<8x8x512xf32, #tpu.memory_space<vmem>>, vector<1x8x512xf32>
    %343 = vector.shape_cast %342 : vector<1x8x512xf32> to vector<8x512xf32>
    %c0_124 = arith.constant 0 : index
    %c0_125 = arith.constant 0 : index
    %344 = vector.load %arg6[%c0_124, %c0_125] : memref<128x512xf32, #tpu.memory_space<vmem>>, vector<128x512xf32>
    %cst_126 = arith.constant dense<0.000000e+00> : vector<8x512xf32>
    %345 = tpu.matmul %340, %344, %cst_126 {dimension_numbers = #tpu.dot_dimension_numbers<[1], [0], [0], [1], [0, 0, 1, 1], [], []>} : vector<8x128xf32>, vector<128x512xf32>, vector<8x512xf32> -> vector<8x512xf32>
    %346 = arith.addf %343, %345 : vector<8x512xf32>
    %347 = vector.extract_strided_slice %346 {offsets = [0, 0], sizes = [8, 128], strides = [1, 1]} : vector<8x512xf32> to vector<8x128xf32>
    %348 = arith.negf %347 : vector<8x128xf32>
    %349 = math.exp %348 : vector<8x128xf32>
    %cst_127 = arith.constant 1.000000e+00 : f32
    %350 = vector.broadcast %cst_127 : f32 to vector<8x128xf32>
    %351 = arith.addf %350, %349 : vector<8x128xf32>
    %352 = arith.divf %350, %351 : vector<8x128xf32>
    %353 = vector.extract_strided_slice %346 {offsets = [0, 128], sizes = [8, 128], strides = [1, 1]} : vector<8x512xf32> to vector<8x128xf32>
    %354 = arith.negf %353 : vector<8x128xf32>
    %355 = math.exp %354 : vector<8x128xf32>
    %cst_128 = arith.constant 1.000000e+00 : f32
    %356 = vector.broadcast %cst_128 : f32 to vector<8x128xf32>
    %357 = arith.addf %356, %355 : vector<8x128xf32>
    %358 = arith.divf %356, %357 : vector<8x128xf32>
    %359 = vector.extract_strided_slice %346 {offsets = [0, 256], sizes = [8, 128], strides = [1, 1]} : vector<8x512xf32> to vector<8x128xf32>
    %360 = math.tanh %359 : vector<8x128xf32>
    %361 = vector.extract_strided_slice %346 {offsets = [0, 384], sizes = [8, 128], strides = [1, 1]} : vector<8x512xf32> to vector<8x128xf32>
    %362 = arith.negf %361 : vector<8x128xf32>
    %363 = math.exp %362 : vector<8x128xf32>
    %cst_129 = arith.constant 1.000000e+00 : f32
    %364 = vector.broadcast %cst_129 : f32 to vector<8x128xf32>
    %365 = arith.addf %364, %363 : vector<8x128xf32>
    %366 = arith.divf %364, %365 : vector<8x128xf32>
    %367 = arith.mulf %358, %338 : vector<8x128xf32>
    %368 = arith.mulf %352, %360 : vector<8x128xf32>
    %369 = arith.addf %367, %368 : vector<8x128xf32>
    %370 = math.tanh %369 : vector<8x128xf32>
    %371 = arith.mulf %366, %370 : vector<8x128xf32>
    %c2_i32_130 = arith.constant 2 : i32
    %372 = arith.index_cast %c2_i32_130 : i32 to index
    %c0_131 = arith.constant 0 : index
    %c0_132 = arith.constant 0 : index
    %373 = vector.load %arg13[%372, %c0_131, %c0_132] : memref<8x8x512xf32, #tpu.memory_space<vmem>>, vector<1x8x512xf32>
    %374 = vector.shape_cast %373 : vector<1x8x512xf32> to vector<8x512xf32>
    %c0_133 = arith.constant 0 : index
    %c0_134 = arith.constant 0 : index
    %375 = vector.load %arg6[%c0_133, %c0_134] : memref<128x512xf32, #tpu.memory_space<vmem>>, vector<128x512xf32>
    %cst_135 = arith.constant dense<0.000000e+00> : vector<8x512xf32>
    %376 = tpu.matmul %371, %375, %cst_135 {dimension_numbers = #tpu.dot_dimension_numbers<[1], [0], [0], [1], [0, 0, 1, 1], [], []>} : vector<8x128xf32>, vector<128x512xf32>, vector<8x512xf32> -> vector<8x512xf32>
    %377 = arith.addf %374, %376 : vector<8x512xf32>
    %378 = vector.extract_strided_slice %377 {offsets = [0, 0], sizes = [8, 128], strides = [1, 1]} : vector<8x512xf32> to vector<8x128xf32>
    %379 = arith.negf %378 : vector<8x128xf32>
    %380 = math.exp %379 : vector<8x128xf32>
    %cst_136 = arith.constant 1.000000e+00 : f32
    %381 = vector.broadcast %cst_136 : f32 to vector<8x128xf32>
    %382 = arith.addf %381, %380 : vector<8x128xf32>
    %383 = arith.divf %381, %382 : vector<8x128xf32>
    %384 = vector.extract_strided_slice %377 {offsets = [0, 128], sizes = [8, 128], strides = [1, 1]} : vector<8x512xf32> to vector<8x128xf32>
    %385 = arith.negf %384 : vector<8x128xf32>
    %386 = math.exp %385 : vector<8x128xf32>
    %cst_137 = arith.constant 1.000000e+00 : f32
    %387 = vector.broadcast %cst_137 : f32 to vector<8x128xf32>
    %388 = arith.addf %387, %386 : vector<8x128xf32>
    %389 = arith.divf %387, %388 : vector<8x128xf32>
    %390 = vector.extract_strided_slice %377 {offsets = [0, 256], sizes = [8, 128], strides = [1, 1]} : vector<8x512xf32> to vector<8x128xf32>
    %391 = math.tanh %390 : vector<8x128xf32>
    %392 = vector.extract_strided_slice %377 {offsets = [0, 384], sizes = [8, 128], strides = [1, 1]} : vector<8x512xf32> to vector<8x128xf32>
    %393 = arith.negf %392 : vector<8x128xf32>
    %394 = math.exp %393 : vector<8x128xf32>
    %cst_138 = arith.constant 1.000000e+00 : f32
    %395 = vector.broadcast %cst_138 : f32 to vector<8x128xf32>
    %396 = arith.addf %395, %394 : vector<8x128xf32>
    %397 = arith.divf %395, %396 : vector<8x128xf32>
    %398 = arith.mulf %389, %369 : vector<8x128xf32>
    %399 = arith.mulf %383, %391 : vector<8x128xf32>
    %400 = arith.addf %398, %399 : vector<8x128xf32>
    %401 = math.tanh %400 : vector<8x128xf32>
    %402 = arith.mulf %397, %401 : vector<8x128xf32>
    %c3_i32_139 = arith.constant 3 : i32
    %403 = arith.index_cast %c3_i32_139 : i32 to index
    %c0_140 = arith.constant 0 : index
    %c0_141 = arith.constant 0 : index
    %404 = vector.load %arg13[%403, %c0_140, %c0_141] : memref<8x8x512xf32, #tpu.memory_space<vmem>>, vector<1x8x512xf32>
    %405 = vector.shape_cast %404 : vector<1x8x512xf32> to vector<8x512xf32>
    %c0_142 = arith.constant 0 : index
    %c0_143 = arith.constant 0 : index
    %406 = vector.load %arg6[%c0_142, %c0_143] : memref<128x512xf32, #tpu.memory_space<vmem>>, vector<128x512xf32>
    %cst_144 = arith.constant dense<0.000000e+00> : vector<8x512xf32>
    %407 = tpu.matmul %402, %406, %cst_144 {dimension_numbers = #tpu.dot_dimension_numbers<[1], [0], [0], [1], [0, 0, 1, 1], [], []>} : vector<8x128xf32>, vector<128x512xf32>, vector<8x512xf32> -> vector<8x512xf32>
    %408 = arith.addf %405, %407 : vector<8x512xf32>
    %409 = vector.extract_strided_slice %408 {offsets = [0, 0], sizes = [8, 128], strides = [1, 1]} : vector<8x512xf32> to vector<8x128xf32>
    %410 = arith.negf %409 : vector<8x128xf32>
    %411 = math.exp %410 : vector<8x128xf32>
    %cst_145 = arith.constant 1.000000e+00 : f32
    %412 = vector.broadcast %cst_145 : f32 to vector<8x128xf32>
    %413 = arith.addf %412, %411 : vector<8x128xf32>
    %414 = arith.divf %412, %413 : vector<8x128xf32>
    %415 = vector.extract_strided_slice %408 {offsets = [0, 128], sizes = [8, 128], strides = [1, 1]} : vector<8x512xf32> to vector<8x128xf32>
    %416 = arith.negf %415 : vector<8x128xf32>
    %417 = math.exp %416 : vector<8x128xf32>
    %cst_146 = arith.constant 1.000000e+00 : f32
    %418 = vector.broadcast %cst_146 : f32 to vector<8x128xf32>
    %419 = arith.addf %418, %417 : vector<8x128xf32>
    %420 = arith.divf %418, %419 : vector<8x128xf32>
    %421 = vector.extract_strided_slice %408 {offsets = [0, 256], sizes = [8, 128], strides = [1, 1]} : vector<8x512xf32> to vector<8x128xf32>
    %422 = math.tanh %421 : vector<8x128xf32>
    %423 = vector.extract_strided_slice %408 {offsets = [0, 384], sizes = [8, 128], strides = [1, 1]} : vector<8x512xf32> to vector<8x128xf32>
    %424 = arith.negf %423 : vector<8x128xf32>
    %425 = math.exp %424 : vector<8x128xf32>
    %cst_147 = arith.constant 1.000000e+00 : f32
    %426 = vector.broadcast %cst_147 : f32 to vector<8x128xf32>
    %427 = arith.addf %426, %425 : vector<8x128xf32>
    %428 = arith.divf %426, %427 : vector<8x128xf32>
    %429 = arith.mulf %420, %400 : vector<8x128xf32>
    %430 = arith.mulf %414, %422 : vector<8x128xf32>
    %431 = arith.addf %429, %430 : vector<8x128xf32>
    %432 = math.tanh %431 : vector<8x128xf32>
    %433 = arith.mulf %428, %432 : vector<8x128xf32>
    %c4_i32_148 = arith.constant 4 : i32
    %434 = arith.index_cast %c4_i32_148 : i32 to index
    %c0_149 = arith.constant 0 : index
    %c0_150 = arith.constant 0 : index
    %435 = vector.load %arg13[%434, %c0_149, %c0_150] : memref<8x8x512xf32, #tpu.memory_space<vmem>>, vector<1x8x512xf32>
    %436 = vector.shape_cast %435 : vector<1x8x512xf32> to vector<8x512xf32>
    %c0_151 = arith.constant 0 : index
    %c0_152 = arith.constant 0 : index
    %437 = vector.load %arg6[%c0_151, %c0_152] : memref<128x512xf32, #tpu.memory_space<vmem>>, vector<128x512xf32>
    %cst_153 = arith.constant dense<0.000000e+00> : vector<8x512xf32>
    %438 = tpu.matmul %433, %437, %cst_153 {dimension_numbers = #tpu.dot_dimension_numbers<[1], [0], [0], [1], [0, 0, 1, 1], [], []>} : vector<8x128xf32>, vector<128x512xf32>, vector<8x512xf32> -> vector<8x512xf32>
    %439 = arith.addf %436, %438 : vector<8x512xf32>
    %440 = vector.extract_strided_slice %439 {offsets = [0, 0], sizes = [8, 128], strides = [1, 1]} : vector<8x512xf32> to vector<8x128xf32>
    %441 = arith.negf %440 : vector<8x128xf32>
    %442 = math.exp %441 : vector<8x128xf32>
    %cst_154 = arith.constant 1.000000e+00 : f32
    %443 = vector.broadcast %cst_154 : f32 to vector<8x128xf32>
    %444 = arith.addf %443, %442 : vector<8x128xf32>
    %445 = arith.divf %443, %444 : vector<8x128xf32>
    %446 = vector.extract_strided_slice %439 {offsets = [0, 128], sizes = [8, 128], strides = [1, 1]} : vector<8x512xf32> to vector<8x128xf32>
    %447 = arith.negf %446 : vector<8x128xf32>
    %448 = math.exp %447 : vector<8x128xf32>
    %cst_155 = arith.constant 1.000000e+00 : f32
    %449 = vector.broadcast %cst_155 : f32 to vector<8x128xf32>
    %450 = arith.addf %449, %448 : vector<8x128xf32>
    %451 = arith.divf %449, %450 : vector<8x128xf32>
    %452 = vector.extract_strided_slice %439 {offsets = [0, 256], sizes = [8, 128], strides = [1, 1]} : vector<8x512xf32> to vector<8x128xf32>
    %453 = math.tanh %452 : vector<8x128xf32>
    %454 = vector.extract_strided_slice %439 {offsets = [0, 384], sizes = [8, 128], strides = [1, 1]} : vector<8x512xf32> to vector<8x128xf32>
    %455 = arith.negf %454 : vector<8x128xf32>
    %456 = math.exp %455 : vector<8x128xf32>
    %cst_156 = arith.constant 1.000000e+00 : f32
    %457 = vector.broadcast %cst_156 : f32 to vector<8x128xf32>
    %458 = arith.addf %457, %456 : vector<8x128xf32>
    %459 = arith.divf %457, %458 : vector<8x128xf32>
    %460 = arith.mulf %451, %431 : vector<8x128xf32>
    %461 = arith.mulf %445, %453 : vector<8x128xf32>
    %462 = arith.addf %460, %461 : vector<8x128xf32>
    %463 = math.tanh %462 : vector<8x128xf32>
    %464 = arith.mulf %459, %463 : vector<8x128xf32>
    %c5_i32_157 = arith.constant 5 : i32
    %465 = arith.index_cast %c5_i32_157 : i32 to index
    %c0_158 = arith.constant 0 : index
    %c0_159 = arith.constant 0 : index
    %466 = vector.load %arg13[%465, %c0_158, %c0_159] : memref<8x8x512xf32, #tpu.memory_space<vmem>>, vector<1x8x512xf32>
    %467 = vector.shape_cast %466 : vector<1x8x512xf32> to vector<8x512xf32>
    %c0_160 = arith.constant 0 : index
    %c0_161 = arith.constant 0 : index
    %468 = vector.load %arg6[%c0_160, %c0_161] : memref<128x512xf32, #tpu.memory_space<vmem>>, vector<128x512xf32>
    %cst_162 = arith.constant dense<0.000000e+00> : vector<8x512xf32>
    %469 = tpu.matmul %464, %468, %cst_162 {dimension_numbers = #tpu.dot_dimension_numbers<[1], [0], [0], [1], [0, 0, 1, 1], [], []>} : vector<8x128xf32>, vector<128x512xf32>, vector<8x512xf32> -> vector<8x512xf32>
    %470 = arith.addf %467, %469 : vector<8x512xf32>
    %471 = vector.extract_strided_slice %470 {offsets = [0, 0], sizes = [8, 128], strides = [1, 1]} : vector<8x512xf32> to vector<8x128xf32>
    %472 = arith.negf %471 : vector<8x128xf32>
    %473 = math.exp %472 : vector<8x128xf32>
    %cst_163 = arith.constant 1.000000e+00 : f32
    %474 = vector.broadcast %cst_163 : f32 to vector<8x128xf32>
    %475 = arith.addf %474, %473 : vector<8x128xf32>
    %476 = arith.divf %474, %475 : vector<8x128xf32>
    %477 = vector.extract_strided_slice %470 {offsets = [0, 128], sizes = [8, 128], strides = [1, 1]} : vector<8x512xf32> to vector<8x128xf32>
    %478 = arith.negf %477 : vector<8x128xf32>
    %479 = math.exp %478 : vector<8x128xf32>
    %cst_164 = arith.constant 1.000000e+00 : f32
    %480 = vector.broadcast %cst_164 : f32 to vector<8x128xf32>
    %481 = arith.addf %480, %479 : vector<8x128xf32>
    %482 = arith.divf %480, %481 : vector<8x128xf32>
    %483 = vector.extract_strided_slice %470 {offsets = [0, 256], sizes = [8, 128], strides = [1, 1]} : vector<8x512xf32> to vector<8x128xf32>
    %484 = math.tanh %483 : vector<8x128xf32>
    %485 = vector.extract_strided_slice %470 {offsets = [0, 384], sizes = [8, 128], strides = [1, 1]} : vector<8x512xf32> to vector<8x128xf32>
    %486 = arith.negf %485 : vector<8x128xf32>
    %487 = math.exp %486 : vector<8x128xf32>
    %cst_165 = arith.constant 1.000000e+00 : f32
    %488 = vector.broadcast %cst_165 : f32 to vector<8x128xf32>
    %489 = arith.addf %488, %487 : vector<8x128xf32>
    %490 = arith.divf %488, %489 : vector<8x128xf32>
    %491 = arith.mulf %482, %462 : vector<8x128xf32>
    %492 = arith.mulf %476, %484 : vector<8x128xf32>
    %493 = arith.addf %491, %492 : vector<8x128xf32>
    %494 = math.tanh %493 : vector<8x128xf32>
    %495 = arith.mulf %490, %494 : vector<8x128xf32>
    %c6_i32_166 = arith.constant 6 : i32
    %496 = arith.index_cast %c6_i32_166 : i32 to index
    %c0_167 = arith.constant 0 : index
    %c0_168 = arith.constant 0 : index
    %497 = vector.load %arg13[%496, %c0_167, %c0_168] : memref<8x8x512xf32, #tpu.memory_space<vmem>>, vector<1x8x512xf32>
    %498 = vector.shape_cast %497 : vector<1x8x512xf32> to vector<8x512xf32>
    %c0_169 = arith.constant 0 : index
    %c0_170 = arith.constant 0 : index
    %499 = vector.load %arg6[%c0_169, %c0_170] : memref<128x512xf32, #tpu.memory_space<vmem>>, vector<128x512xf32>
    %cst_171 = arith.constant dense<0.000000e+00> : vector<8x512xf32>
    %500 = tpu.matmul %495, %499, %cst_171 {dimension_numbers = #tpu.dot_dimension_numbers<[1], [0], [0], [1], [0, 0, 1, 1], [], []>} : vector<8x128xf32>, vector<128x512xf32>, vector<8x512xf32> -> vector<8x512xf32>
    %501 = arith.addf %498, %500 : vector<8x512xf32>
    %502 = vector.extract_strided_slice %501 {offsets = [0, 0], sizes = [8, 128], strides = [1, 1]} : vector<8x512xf32> to vector<8x128xf32>
    %503 = arith.negf %502 : vector<8x128xf32>
    %504 = math.exp %503 : vector<8x128xf32>
    %cst_172 = arith.constant 1.000000e+00 : f32
    %505 = vector.broadcast %cst_172 : f32 to vector<8x128xf32>
    %506 = arith.addf %505, %504 : vector<8x128xf32>
    %507 = arith.divf %505, %506 : vector<8x128xf32>
    %508 = vector.extract_strided_slice %501 {offsets = [0, 128], sizes = [8, 128], strides = [1, 1]} : vector<8x512xf32> to vector<8x128xf32>
    %509 = arith.negf %508 : vector<8x128xf32>
    %510 = math.exp %509 : vector<8x128xf32>
    %cst_173 = arith.constant 1.000000e+00 : f32
    %511 = vector.broadcast %cst_173 : f32 to vector<8x128xf32>
    %512 = arith.addf %511, %510 : vector<8x128xf32>
    %513 = arith.divf %511, %512 : vector<8x128xf32>
    %514 = vector.extract_strided_slice %501 {offsets = [0, 256], sizes = [8, 128], strides = [1, 1]} : vector<8x512xf32> to vector<8x128xf32>
    %515 = math.tanh %514 : vector<8x128xf32>
    %516 = vector.extract_strided_slice %501 {offsets = [0, 384], sizes = [8, 128], strides = [1, 1]} : vector<8x512xf32> to vector<8x128xf32>
    %517 = arith.negf %516 : vector<8x128xf32>
    %518 = math.exp %517 : vector<8x128xf32>
    %cst_174 = arith.constant 1.000000e+00 : f32
    %519 = vector.broadcast %cst_174 : f32 to vector<8x128xf32>
    %520 = arith.addf %519, %518 : vector<8x128xf32>
    %521 = arith.divf %519, %520 : vector<8x128xf32>
    %522 = arith.mulf %513, %493 : vector<8x128xf32>
    %523 = arith.mulf %507, %515 : vector<8x128xf32>
    %524 = arith.addf %522, %523 : vector<8x128xf32>
    %525 = math.tanh %524 : vector<8x128xf32>
    %526 = arith.mulf %521, %525 : vector<8x128xf32>
    %c7_i32_175 = arith.constant 7 : i32
    %527 = arith.index_cast %c7_i32_175 : i32 to index
    %c0_176 = arith.constant 0 : index
    %c0_177 = arith.constant 0 : index
    %528 = vector.load %arg13[%527, %c0_176, %c0_177] : memref<8x8x512xf32, #tpu.memory_space<vmem>>, vector<1x8x512xf32>
    %529 = vector.shape_cast %528 : vector<1x8x512xf32> to vector<8x512xf32>
    %c0_178 = arith.constant 0 : index
    %c0_179 = arith.constant 0 : index
    %530 = vector.load %arg6[%c0_178, %c0_179] : memref<128x512xf32, #tpu.memory_space<vmem>>, vector<128x512xf32>
    %cst_180 = arith.constant dense<0.000000e+00> : vector<8x512xf32>
    %531 = tpu.matmul %526, %530, %cst_180 {dimension_numbers = #tpu.dot_dimension_numbers<[1], [0], [0], [1], [0, 0, 1, 1], [], []>} : vector<8x128xf32>, vector<128x512xf32>, vector<8x512xf32> -> vector<8x512xf32>
    %532 = arith.addf %529, %531 : vector<8x512xf32>
    %533 = vector.extract_strided_slice %532 {offsets = [0, 0], sizes = [8, 128], strides = [1, 1]} : vector<8x512xf32> to vector<8x128xf32>
    %534 = arith.negf %533 : vector<8x128xf32>
    %535 = math.exp %534 : vector<8x128xf32>
    %cst_181 = arith.constant 1.000000e+00 : f32
    %536 = vector.broadcast %cst_181 : f32 to vector<8x128xf32>
    %537 = arith.addf %536, %535 : vector<8x128xf32>
    %538 = arith.divf %536, %537 : vector<8x128xf32>
    %539 = vector.extract_strided_slice %532 {offsets = [0, 128], sizes = [8, 128], strides = [1, 1]} : vector<8x512xf32> to vector<8x128xf32>
    %540 = arith.negf %539 : vector<8x128xf32>
    %541 = math.exp %540 : vector<8x128xf32>
    %cst_182 = arith.constant 1.000000e+00 : f32
    %542 = vector.broadcast %cst_182 : f32 to vector<8x128xf32>
    %543 = arith.addf %542, %541 : vector<8x128xf32>
    %544 = arith.divf %542, %543 : vector<8x128xf32>
    %545 = vector.extract_strided_slice %532 {offsets = [0, 256], sizes = [8, 128], strides = [1, 1]} : vector<8x512xf32> to vector<8x128xf32>
    %546 = math.tanh %545 : vector<8x128xf32>
    %547 = vector.extract_strided_slice %532 {offsets = [0, 384], sizes = [8, 128], strides = [1, 1]} : vector<8x512xf32> to vector<8x128xf32>
    %548 = arith.negf %547 : vector<8x128xf32>
    %549 = math.exp %548 : vector<8x128xf32>
    %cst_183 = arith.constant 1.000000e+00 : f32
    %550 = vector.broadcast %cst_183 : f32 to vector<8x128xf32>
    %551 = arith.addf %550, %549 : vector<8x128xf32>
    %552 = arith.divf %550, %551 : vector<8x128xf32>
    %553 = arith.mulf %544, %524 : vector<8x128xf32>
    %554 = arith.mulf %538, %546 : vector<8x128xf32>
    %555 = arith.addf %553, %554 : vector<8x128xf32>
    %556 = math.tanh %555 : vector<8x128xf32>
    %557 = arith.mulf %552, %556 : vector<8x128xf32>
    %c8_i32_184 = arith.constant 8 : i32
    %cst_185 = arith.constant 0.000000e+00 : f32
    %558 = vector.broadcast %cst_185 : f32 to vector<8x128xf32>
    %559 = arith.maximumf %557, %558 : vector<8x128xf32>
    %c0_186 = arith.constant 0 : index
    %c0_187 = arith.constant 0 : index
    %560 = vector.load %arg8[%c0_186, %c0_187] : memref<128x128xf32, #tpu.memory_space<vmem>>, vector<128x128xf32>
    %cst_188 = arith.constant dense<0.000000e+00> : vector<8x128xf32>
    %561 = tpu.matmul %559, %560, %cst_188 {dimension_numbers = #tpu.dot_dimension_numbers<[1], [0], [0], [1], [0, 0, 1, 1], [], []>} : vector<8x128xf32>, vector<128x128xf32>, vector<8x128xf32> -> vector<8x128xf32>
    %c0_189 = arith.constant 0 : index
    %c0_190 = arith.constant 0 : index
    %562 = vector.load %arg9[%c0_189, %c0_190] : memref<1x128xf32, #tpu.memory_space<vmem>>, vector<1x128xf32>
    %563 = vector.broadcast %562 : vector<1x128xf32> to vector<8x128xf32>
    %564 = arith.addf %561, %563 : vector<8x128xf32>
    %c0_191 = arith.constant 0 : index
    %c0_192 = arith.constant 0 : index
    %565 = vector.load %arg10[%c0_191, %c0_192] : memref<8x128xf32, #tpu.memory_space<vmem>>, vector<8x128xf32>
    tpu.vector_store %arg10[%c0_191, %c0_192], %564 {strides = array<i32>} : memref<8x128xf32, #tpu.memory_space<vmem>>, vector<8x128xf32>,
    return
  }
  func.func @transform_0(%arg0: i32) -> (i32, i32, i32) {
    %c0_i32 = arith.constant 0 : i32
    %c0_i32_0 = arith.constant 0 : i32
    %c0_i32_1 = arith.constant 0 : i32
    return %c0_i32, %arg0, %c0_i32_0 : i32, i32, i32
  }
  func.func @transform_1(%arg0: i32) -> (i32, i32) {
    %c0_i32 = arith.constant 0 : i32
    %c0_i32_0 = arith.constant 0 : i32
    %c0_i32_1 = arith.constant 0 : i32
    return %c0_i32, %c0_i32_0 : i32, i32
  }
  func.func @transform_2(%arg0: i32) -> (i32, i32) {
    %c0_i32 = arith.constant 0 : i32
    %c0_i32_0 = arith.constant 0 : i32
    %c0_i32_1 = arith.constant 0 : i32
    return %c0_i32, %c0_i32_0 : i32, i32
  }
  func.func @transform_3(%arg0: i32) -> (i32, i32) {
    %c0_i32 = arith.constant 0 : i32
    %c0_i32_0 = arith.constant 0 : i32
    %c0_i32_1 = arith.constant 0 : i32
    return %c0_i32, %c0_i32_0 : i32, i32
  }
  func.func @transform_4(%arg0: i32) -> (i32, i32) {
    %c0_i32 = arith.constant 0 : i32
    %c0_i32_0 = arith.constant 0 : i32
    %c0_i32_1 = arith.constant 0 : i32
    return %c0_i32, %c0_i32_0 : i32, i32
  }
  func.func @transform_5(%arg0: i32) -> (i32, i32) {
    %c0_i32 = arith.constant 0 : i32
    %c0_i32_0 = arith.constant 0 : i32
    %c0_i32_1 = arith.constant 0 : i32
    return %c0_i32, %c0_i32_0 : i32, i32
  }
  func.func @transform_6(%arg0: i32) -> (i32, i32) {
    %c0_i32 = arith.constant 0 : i32
    %c0_i32_0 = arith.constant 0 : i32
    %c0_i32_1 = arith.constant 0 : i32
    return %c0_i32, %c0_i32_0 : i32, i32
  }
  func.func @transform_7(%arg0: i32) -> (i32, i32) {
    %c0_i32 = arith.constant 0 : i32
    %c0_i32_0 = arith.constant 0 : i32
    %c0_i32_1 = arith.constant 0 : i32
    return %c0_i32, %c0_i32_0 : i32, i32
  }
  func.func @transform_8(%arg0: i32) -> (i32, i32) {
    %c0_i32 = arith.constant 0 : i32
    %c0_i32_0 = arith.constant 0 : i32
    %c0_i32_1 = arith.constant 0 : i32
    return %c0_i32, %c0_i32_0 : i32, i32
  }
  func.func @transform_9(%arg0: i32) -> (i32, i32) {
    %c0_i32 = arith.constant 0 : i32
    %c0_i32_0 = arith.constant 0 : i32
    return %arg0, %c0_i32 : i32, i32
  }
}

</mosaic_0001>

<llo_original>
// kernel: _lstm_srs_forward.1
$region0: #{_lstm_srs_forward.1}
  #allocation0 [shape = 'u32[]', space=smem, size = 0x4, offset = 0x4, fixed_abs, tag = 'smem constant byte address 0x4 - core index']
  #allocation1 [shape = 'u32[144,128]{1,0:T(1,128)}', space=vmem, size = 0x12000, scoped, tag = 'internal scratch']
  #allocation2 [shape = 'f32[8,8,128]{2,1,0:T(8,128)}', space=vmem, size = 0x8000, scoped, tag = 'scratch operand']
  #allocation3 [shape = 'f32[8,8,128]{2,1,0:T(8,128)}', space=vmem, size = 0x8000, scoped, tag = 'scratch operand']
  #allocation4 [shape = 'f32[8,8,512]{2,1,0:T(8,128)}', space=vmem, size = 0x20000, scoped, tag = 'scratch operand']
  %s0 = inlined_call_operand.hbm [shape: f32[8,16,128], index: 0, kind: input, shape index: {}]
  %s1 = inlined_call_operand.hbm [shape: f32[128,512], index: 1, kind: input, shape index: {}]
  %s2 = inlined_call_operand.hbm [shape: f32[128,512], index: 2, kind: input, shape index: {}]
  %s3 = inlined_call_operand.hbm [shape: f32[1,512], index: 3, kind: input, shape index: {}]
  %s4 = inlined_call_operand.hbm [shape: f32[128,512], index: 4, kind: input, shape index: {}]
  %s5 = inlined_call_operand.hbm [shape: f32[128,512], index: 5, kind: input, shape index: {}]
  %s6 = inlined_call_operand.hbm [shape: f32[1,512], index: 6, kind: input, shape index: {}]
  %s7 = inlined_call_operand.hbm [shape: f32[128,128], index: 7, kind: input, shape index: {}]
  %s8 = inlined_call_operand.hbm [shape: f32[1,128], index: 8, kind: input, shape index: {}]
  %s9 = inlined_call_operand.hbm [shape: f32[16,128], index: 9, kind: output, shape index: {}]
  %s10 = sld [smem:[#allocation0]]
  $region105: #{_lstm_srs_forward.1} parent=0
    _
  %s12 = ssub.s32 1, %s10
  %s13 = scalar_select 0, %s12, %s10
  $region1: #{_lstm_srs_forward.1} parent=0
    #allocation5 [shape = 'u8[65536]{0}', space=vmem, size = 0x10000, scoped, tag = 'input window, operand 0']
    #allocation6 [shape = 's32[2]{0}', space=sflag, size = 0x8, scoped, tag = 'scoped memory for _lstm_srs_forward.1']
    #allocation7 [shape = 's32[2]{0}', space=sflag, size = 0x8, scoped, tag = 'scoped memory for _lstm_srs_forward.1']
    #allocation8 [shape = 'u8[262144]{0}', space=vmem, size = 0x40000, scoped, tag = 'input window, operand 1, single buffered']
    #allocation9 [shape = 's32[1]{0}', space=sflag, size = 0x4, scoped, tag = 'scoped memory for _lstm_srs_forward.1']
    #allocation10 [shape = 'u8[262144]{0}', space=vmem, size = 0x40000, scoped, tag = 'input window, operand 2, single buffered']
    #allocation11 [shape = 'u8[2048]{0}', space=vmem, size = 0x800, scoped, tag = 'input window, operand 3, single buffered']
    #allocation12 [shape = 's32[1]{0}', space=sflag, size = 0x4, scoped, tag = 'scoped memory for _lstm_srs_forward.1']
    #allocation13 [shape = 'u8[262144]{0}', space=vmem, size = 0x40000, scoped, tag = 'input window, operand 4, single buffered']
    #allocation14 [shape = 'u8[262144]{0}', space=vmem, size = 0x40000, scoped, tag = 'input window, operand 5, single buffered']
    #allocation15 [shape = 's32[1]{0}', space=sflag, size = 0x4, scoped, tag = 'scoped memory for _lstm_srs_forward.1']
    #allocation16 [shape = 'u8[2048]{0}', space=vmem, size = 0x800, scoped, tag = 'input window, operand 6, single buffered']
    #allocation17 [shape = 'u8[65536]{0}', space=vmem, size = 0x10000, scoped, tag = 'input window, operand 7, single buffered']
    #allocation18 [shape = 's32[1]{0}', space=sflag, size = 0x4, scoped, tag = 'scoped memory for _lstm_srs_forward.1']
    #allocation19 [shape = 'u8[512]{0}', space=vmem, size = 0x400, scoped, tag = 'input window, operand 8, single buffered']
    #allocation20 [shape = 'u8[8192]{0}', space=vmem, size = 0x2000, scoped, tag = 'output window, operand 0']
    %14 = vsyncpa [#allocation6], 0
    %s15 = scalar_lea.sflag [#allocation6], 1
    %16 = vsyncpa %s15, 0
    %17 = vsyncpa [#allocation9], 0
    %18 = vsyncpa [#allocation12], 0
    %19 = vsyncpa [#allocation15], 0
    %20 = vsyncpa [#allocation18], 0
    %21 = vsyncpa [#allocation7], 0
    %s22 = scalar_lea.sflag [#allocation7], 1
    %23 = vsyncpa %s22, 0
    loop: start=0, step=1, limit=4
    $region2: #{_lstm_srs_forward.1} parent=1 // loop_pre_header
      _
    $region3: #{_lstm_srs_forward.1} parent=1 // loop_header
      %s25 = sphi 0, %s29
      %p26 = scmp.ge.s32.totalorder %s25, 4
      %s35 = sphi 0, %s37
      %s38 = sphi 0, %s35
      %s39 = sphi 0, %s38
      %s55 = sphi 0, %s39
      %s59 = sphi 0, %s59
      %s61 = sphi 0, %s59
      %s62 = sphi 0, %s61
      %s76 = sphi 0, %s62
      %s80 = sphi 0, %s80
      %s82 = sphi 0, %s80
      %s83 = sphi 0, %s82
      %s97 = sphi 0, %s83
      %s101 = sphi 0, %s101
      %s103 = sphi 0, %s101
      %s104 = sphi 0, %s103
      %s118 = sphi 0, %s104
      %s122 = sphi 0, %s122
      %s124 = sphi 0, %s122
      %s125 = sphi 0, %s124
      %s139 = sphi 0, %s125
      %s143 = sphi 0, %s143
      %s145 = sphi 0, %s143
      %s146 = sphi 0, %s145
      %s160 = sphi 0, %s146
      %s164 = sphi 0, %s164
      %s166 = sphi 0, %s164
      %s167 = sphi 0, %s166
      %s181 = sphi 0, %s167
      %s185 = sphi 0, %s185
      %s187 = sphi 0, %s185
      %s188 = sphi 0, %s187
      %s202 = sphi 0, %s188
      %s206 = sphi 0, %s206
      %s208 = sphi 0, %s206
      %s209 = sphi 0, %s208
      %s223 = sphi 0, %s209
      %s229 = sphi 0, %s231
      %s232 = sphi 0, %s229
      %s233 = sphi 0, %s232
      %s249 = sphi 0, %s233
    $region4: #{_lstm_srs_forward.1} parent=1 // loop_header_branch
      %28 = sbr.rel (%p26) target = $region8
    $region5: #{_lstm_srs_forward.1} parent=1 // loop_body
      %s30 = ssub.s32 %s25, 1
      %s31 = ssub.s32 %s25, 2
      %s32 = sadd.s32 %s25, 1
      %s33 = ssub.s32 %s25, %s32
      %p34 = scmp.eq.s32.totalorder %s33, 0
      %s36 = sadd.s32 %s35, 1
      %s37 = scalar_select %p34, %s35, %s36
      %p40 = pneg %p34
      %p41 = scmp.eq.s32.totalorder %s25, 1
      %p42 = por %p40, %p41
      %p43 = scmp.ne.s32.totalorder %s35, %s38
      %p44 = scmp.eq.s32.totalorder %s25, 0
      %p45 = por %p43, %p44
      %p46 = scmp.ne.s32.totalorder %s35, %s38
      %p47 = scmp.eq.s32.totalorder %s30, 1
      %p48 = por %p46, %p47
      %p49 = scmp.ne.s32.totalorder %s38, %s39
      %p50 = scmp.eq.s32.totalorder %s30, 0
      %p51 = por %p49, %p50
      %p52 = scmp.ne.s32.totalorder %s38, %s39
      %p53 = scmp.eq.s32.totalorder %s31, 1
      %p54 = por %p52, %p53
      %p56 = scmp.ne.s32.totalorder %s39, %s55
      %p57 = scmp.eq.s32.totalorder %s31, 0
      %p58 = por %p56, %p57
      %s60 = sadd.s32 %s59, 1
      %p63 = scmp.eq.s32.totalorder %s25, 1
      %p64 = scmp.ne.s32.totalorder %s59, %s61
      %p65 = scmp.eq.s32.totalorder %s25, 0
      %p66 = por %p64, %p65
      %p67 = scmp.ne.s32.totalorder %s59, %s61
      %p68 = scmp.eq.s32.totalorder %s30, 1
      %p69 = por %p67, %p68
      %p70 = scmp.ne.s32.totalorder %s61, %s62
      %p71 = scmp.eq.s32.totalorder %s30, 0
      %p72 = por %p70, %p71
      %p73 = scmp.ne.s32.totalorder %s61, %s62
      %p74 = scmp.eq.s32.totalorder %s31, 1
      %p75 = por %p73, %p74
      %p77 = scmp.ne.s32.totalorder %s62, %s76
      %p78 = scmp.eq.s32.totalorder %s31, 0
      %p79 = por %p77, %p78
      %s81 = sadd.s32 %s80, 1
      %p84 = scmp.eq.s32.totalorder %s25, 1
      %p85 = scmp.ne.s32.totalorder %s80, %s82
      %p86 = scmp.eq.s32.totalorder %s25, 0
      %p87 = por %p85, %p86
      %p88 = scmp.ne.s32.totalorder %s80, %s82
      %p89 = scmp.eq.s32.totalorder %s30, 1
      %p90 = por %p88, %p89
      %p91 = scmp.ne.s32.totalorder %s82, %s83
      %p92 = scmp.eq.s32.totalorder %s30, 0
      %p93 = por %p91, %p92
      %p94 = scmp.ne.s32.totalorder %s82, %s83
      %p95 = scmp.eq.s32.totalorder %s31, 1
      %p96 = por %p94, %p95
      %p98 = scmp.ne.s32.totalorder %s83, %s97
      %p99 = scmp.eq.s32.totalorder %s31, 0
      %p100 = por %p98, %p99
      %s102 = sadd.s32 %s101, 1
      %p105 = scmp.eq.s32.totalorder %s25, 1
      %p106 = scmp.ne.s32.totalorder %s101, %s103
      %p107 = scmp.eq.s32.totalorder %s25, 0
      %p108 = por %p106, %p107
      %p109 = scmp.ne.s32.totalorder %s101, %s103
      %p110 = scmp.eq.s32.totalorder %s30, 1
      %p111 = por %p109, %p110
      %p112 = scmp.ne.s32.totalorder %s103, %s104
      %p113 = scmp.eq.s32.totalorder %s30, 0
      %p114 = por %p112, %p113
      %p115 = scmp.ne.s32.totalorder %s103, %s104
      %p116 = scmp.eq.s32.totalorder %s31, 1
      %p117 = por %p115, %p116
      %p119 = scmp.ne.s32.totalorder %s104, %s118
      %p120 = scmp.eq.s32.totalorder %s31, 0
      %p121 = por %p119, %p120
      %s123 = sadd.s32 %s122, 1
      %p126 = scmp.eq.s32.totalorder %s25, 1
      %p127 = scmp.ne.s32.totalorder %s122, %s124
      %p128 = scmp.eq.s32.totalorder %s25, 0
      %p129 = por %p127, %p128
      %p130 = scmp.ne.s32.totalorder %s122, %s124
      %p131 = scmp.eq.s32.totalorder %s30, 1
      %p132 = por %p130, %p131
      %p133 = scmp.ne.s32.totalorder %s124, %s125
      %p134 = scmp.eq.s32.totalorder %s30, 0
      %p135 = por %p133, %p134
      %p136 = scmp.ne.s32.totalorder %s124, %s125
      %p137 = scmp.eq.s32.totalorder %s31, 1
      %p138 = por %p136, %p137
      %p140 = scmp.ne.s32.totalorder %s125, %s139
      %p141 = scmp.eq.s32.totalorder %s31, 0
      %p142 = por %p140, %p141
      %s144 = sadd.s32 %s143, 1
      %p147 = scmp.eq.s32.totalorder %s25, 1
      %p148 = scmp.ne.s32.totalorder %s143, %s145
      %p149 = scmp.eq.s32.totalorder %s25, 0
      %p150 = por %p148, %p149
      %p151 = scmp.ne.s32.totalorder %s143, %s145
      %p152 = scmp.eq.s32.totalorder %s30, 1
      %p153 = por %p151, %p152
      %p154 = scmp.ne.s32.totalorder %s145, %s146
      %p155 = scmp.eq.s32.totalorder %s30, 0
      %p156 = por %p154, %p155
      %p157 = scmp.ne.s32.totalorder %s145, %s146
      %p158 = scmp.eq.s32.totalorder %s31, 1
      %p159 = por %p157, %p158
      %p161 = scmp.ne.s32.totalorder %s146, %s160
      %p162 = scmp.eq.s32.totalorder %s31, 0
      %p163 = por %p161, %p162
      %s165 = sadd.s32 %s164, 1
      %p168 = scmp.eq.s32.totalorder %s25, 1
      %p169 = scmp.ne.s32.totalorder %s164, %s166
      %p170 = scmp.eq.s32.totalorder %s25, 0
      %p171 = por %p169, %p170
      %p172 = scmp.ne.s32.totalorder %s164, %s166
      %p173 = scmp.eq.s32.totalorder %s30, 1
      %p174 = por %p172, %p173
      %p175 = scmp.ne.s32.totalorder %s166, %s167
      %p176 = scmp.eq.s32.totalorder %s30, 0
      %p177 = por %p175, %p176
      %p178 = scmp.ne.s32.totalorder %s166, %s167
      %p179 = scmp.eq.s32.totalorder %s31, 1
      %p180 = por %p178, %p179
      %p182 = scmp.ne.s32.totalorder %s167, %s181
      %p183 = scmp.eq.s32.totalorder %s31, 0
      %p184 = por %p182, %p183
      %s186 = sadd.s32 %s185, 1
      %p189 = scmp.eq.s32.totalorder %s25, 1
      %p190 = scmp.ne.s32.totalorder %s185, %s187
      %p191 = scmp.eq.s32.totalorder %s25, 0
      %p192 = por %p190, %p191
      %p193 = scmp.ne.s32.totalorder %s185, %s187
      %p194 = scmp.eq.s32.totalorder %s30, 1
      %p195 = por %p193, %p194
      %p196 = scmp.ne.s32.totalorder %s187, %s188
      %p197 = scmp.eq.s32.totalorder %s30, 0
      %p198 = por %p196, %p197
      %p199 = scmp.ne.s32.totalorder %s187, %s188
      %p200 = scmp.eq.s32.totalorder %s31, 1
      %p201 = por %p199, %p200
      %p203 = scmp.ne.s32.totalorder %s188, %s202
      %p204 = scmp.eq.s32.totalorder %s31, 0
      %p205 = por %p203, %p204
      %s207 = sadd.s32 %s206, 1
      %p210 = scmp.eq.s32.totalorder %s25, 1
      %p211 = scmp.ne.s32.totalorder %s206, %s208
      %p212 = scmp.eq.s32.totalorder %s25, 0
      %p213 = por %p211, %p212
      %p214 = scmp.ne.s32.totalorder %s206, %s208
      %p215 = scmp.eq.s32.totalorder %s30, 1
      %p216 = por %p214, %p215
      %p217 = scmp.ne.s32.totalorder %s208, %s209
      %p218 = scmp.eq.s32.totalorder %s30, 0
      %p219 = por %p217, %p218
      %p220 = scmp.ne.s32.totalorder %s208, %s209
      %p221 = scmp.eq.s32.totalorder %s31, 1
      %p222 = por %p220, %p221
      %p224 = scmp.ne.s32.totalorder %s209, %s223
      %p225 = scmp.eq.s32.totalorder %s31, 0
      %p226 = por %p224, %p225
      %s227 = ssub.s32 %s25, %s32
      %p228 = scmp.eq.s32.totalorder %s227, 0
      %s230 = sadd.s32 %s229, 1
      %s231 = scalar_select %p228, %s229, %s230
      %p234 = pneg %p228
      %p235 = scmp.eq.s32.totalorder %s25, 1
      %p236 = por %p234, %p235
      %p237 = scmp.ne.s32.totalorder %s229, %s232
      %p238 = scmp.eq.s32.totalorder %s25, 0
      %p239 = por %p237, %p238
      %p240 = scmp.ne.s32.totalorder %s229, %s232
      %p241 = scmp.eq.s32.totalorder %s30, 1
      %p242 = por %p240, %p241
      %p243 = scmp.ne.s32.totalorder %s232, %s233
      %p244 = scmp.eq.s32.totalorder %s30, 0
      %p245 = por %p243, %p244
      %p246 = scmp.ne.s32.totalorder %s232, %s233
      %p247 = scmp.eq.s32.totalorder %s31, 1
      %p248 = por %p246, %p247
      %p250 = scmp.ne.s32.totalorder %s233, %s249
      %p251 = scmp.eq.s32.totalorder %s31, 0
      %p252 = por %p250, %p251
      %p253 = scmp.le.s32.totalorder 1, %s25
      %p254 = scmp.lt.s32.totalorder %s25, 3
      %p255 = pnand %p253, %p254
      %p256 = pneg %p255
      // Predicated region
      $region9: #{_lstm_srs_forward.1} parent=5 // pred_check
        _
      $region10: #{_lstm_srs_forward.1} parent=5 // pred_check_branch
        %258 = sbr.rel (%p255) target = $region12
      $region11: #{_lstm_srs_forward.1} parent=5 // pred_region
        %s259 = ssub.s32 %s25, 1
        // Predicated region
        $region13: #{_lstm_srs_forward.1} parent=11 // pred_check
          %p260 = pneg %p72
        $region14: #{_lstm_srs_forward.1} parent=11 // pred_check_branch
          %262 = sbr.rel (%p260) target = $region16
        $region15: #{_lstm_srs_forward.1} parent=11 // pred_region
          %s264 = ssub.s32 8192, 8192
          %265 = vsyncadd [#allocation9], %s264
          %s266 = sshll.u32 [#allocation8], 4
          %s267 = int_to_ptr.vmem [resolvable:$true] %s266
          %272 = dma.hbm_to_vmem [thread:$0]  %s1, 8192, %s267, [#allocation9], 512, 512, 32
        $region16: #{_lstm_srs_forward.1} parent=11 // pred_fallthru
          _
        // Predicated region
        $region17: #{_lstm_srs_forward.1} parent=11 // pred_check
          %p273 = pneg %p93
        $region18: #{_lstm_srs_forward.1} parent=11 // pred_check_branch
          %275 = sbr.rel (%p273) target = $region20
        $region19: #{_lstm_srs_forward.1} parent=11 // pred_region
          %s277 = ssub.s32 8192, 8192
          %278 = vsyncadd [#allocation9], %s277
          %s279 = sshll.u32 [#allocation10], 4
          %s280 = int_to_ptr.vmem [resolvable:$true] %s279
          %285 = dma.hbm_to_vmem [thread:$0]  %s2, 8192, %s280, [#allocation9], 512, 512, 32
        $region20: #{_lstm_srs_forward.1} parent=11 // pred_fallthru
          _
        // Predicated region
        $region21: #{_lstm_srs_forward.1} parent=11 // pred_check
          %p286 = pneg %p114
        $region22: #{_lstm_srs_forward.1} parent=11 // pred_check_branch
          %288 = sbr.rel (%p286) target = $region24
        $region23: #{_lstm_srs_forward.1} parent=11 // pred_region
          %s290 = ssub.s32 64, 64
          %291 = vsyncadd [#allocation12], %s290
          %s293 = sshll.u32 [#allocation11], 4
          %s294 = int_to_ptr.vmem [resolvable:$true] %s293
          %296 = dma.hbm_to_vmem [thread:$0]  %s3, 64, %s294, [#allocation12]
        $region24: #{_lstm_srs_forward.1} parent=11 // pred_fallthru
          _
        // Predicated region
        $region25: #{_lstm_srs_forward.1} parent=11 // pred_check
          %p297 = pneg %p135
        $region26: #{_lstm_srs_forward.1} parent=11 // pred_check_branch
          %299 = sbr.rel (%p297) target = $region28
        $region27: #{_lstm_srs_forward.1} parent=11 // pred_region
          %s301 = ssub.s32 8192, 8192
          %302 = vsyncadd [#allocation12], %s301
          %s303 = sshll.u32 [#allocation13], 4
          %s304 = int_to_ptr.vmem [resolvable:$true] %s303
          %309 = dma.hbm_to_vmem [thread:$0]  %s4, 8192, %s304, [#allocation12], 512, 512, 32
        $region28: #{_lstm_srs_forward.1} parent=11 // pred_fallthru
          _
        // Predicated region
        $region29: #{_lstm_srs_forward.1} parent=11 // pred_check
          %p310 = pneg %p156
        $region30: #{_lstm_srs_forward.1} parent=11 // pred_check_branch
          %312 = sbr.rel (%p310) target = $region32
        $region31: #{_lstm_srs_forward.1} parent=11 // pred_region
          %s314 = ssub.s32 8192, 8192
          %315 = vsyncadd [#allocation15], %s314
          %s316 = sshll.u32 [#allocation14], 4
          %s317 = int_to_ptr.vmem [resolvable:$true] %s316
          %322 = dma.hbm_to_vmem [thread:$0]  %s5, 8192, %s317, [#allocation15], 512, 512, 32
        $region32: #{_lstm_srs_forward.1} parent=11 // pred_fallthru
          _
        // Predicated region
        $region33: #{_lstm_srs_forward.1} parent=11 // pred_check
          %p323 = pneg %p177
        $region34: #{_lstm_srs_forward.1} parent=11 // pred_check_branch
          %325 = sbr.rel (%p323) target = $region36
        $region35: #{_lstm_srs_forward.1} parent=11 // pred_region
          %s327 = ssub.s32 64, 64
          %328 = vsyncadd [#allocation15], %s327
          %s330 = sshll.u32 [#allocation16], 4
          %s331 = int_to_ptr.vmem [resolvable:$true] %s330
          %333 = dma.hbm_to_vmem [thread:$0]  %s6, 64, %s331, [#allocation15]
        $region36: #{_lstm_srs_forward.1} parent=11 // pred_fallthru
          _
        // Predicated region
        $region37: #{_lstm_srs_forward.1} parent=11 // pred_check
          %p334 = pneg %p198
        $region38: #{_lstm_srs_forward.1} parent=11 // pred_check_branch
          %336 = sbr.rel (%p334) target = $region40
        $region39: #{_lstm_srs_forward.1} parent=11 // pred_region
          %s338 = ssub.s32 2048, 2048
          %339 = vsyncadd [#allocation18], %s338
          %s340 = sshll.u32 [#allocation17], 4
          %s341 = int_to_ptr.vmem [resolvable:$true] %s340
          %346 = dma.hbm_to_vmem [thread:$0]  %s7, 2048, %s341, [#allocation18], 128, 128, 8
        $region40: #{_lstm_srs_forward.1} parent=11 // pred_fallthru
          _
        // Predicated region
        $region41: #{_lstm_srs_forward.1} parent=11 // pred_check
          %p347 = pneg %p219
        $region42: #{_lstm_srs_forward.1} parent=11 // pred_check_branch
          %349 = sbr.rel (%p347) target = $region44
        $region43: #{_lstm_srs_forward.1} parent=11 // pred_region
          %s351 = ssub.s32 16, 16
          %352 = vsyncadd [#allocation18], %s351
          %s354 = sshll.u32 [#allocation19], 4
          %s355 = int_to_ptr.vmem [resolvable:$true] %s354
          %357 = dma.hbm_to_vmem [thread:$0]  %s8, 16, %s355, [#allocation18]
        $region44: #{_lstm_srs_forward.1} parent=11 // pred_fallthru
          _
      $region12: #{_lstm_srs_forward.1} parent=5 // pred_fallthru
        _
      %p358 = scmp.lt.s32.totalorder %s25, 2
      // Predicated region
      $region45: #{_lstm_srs_forward.1} parent=5 // pred_check
        %p359 = pneg %p358
      $region46: #{_lstm_srs_forward.1} parent=5 // pred_check_branch
        %361 = sbr.rel (%p359) target = $region48
      $region47: #{_lstm_srs_forward.1} parent=5 // pred_region
        // Predicated region
        $region49: #{_lstm_srs_forward.1} parent=47 // pred_check
          %p362 = pneg %p45
        $region50: #{_lstm_srs_forward.1} parent=47 // pred_check_branch
          %364 = sbr.rel (%p362) target = $region52
        $region51: #{_lstm_srs_forward.1} parent=47 // pred_region
          %s365 = sand.u32 %s35, 1
          %s366 = scalar_lea.sflag [#allocation6], %s365
          %s367 = sand.u32 %s35, 1
          %s368 = smul.addr %s367, 64
          %s369 = scalar_lea.vmem [#allocation5], %s368
          %s371 = ssub.s32 1024, 1024
          %372 = vsyncadd %s366, %s371
          %s373 = smul.addr %s25, 128
          %s374 = scalar_lea.hbm %s0, %s373
          %s375 = sshll.u32 %s369, 4
          %s376 = int_to_ptr.vmem [resolvable:$true] %s375
          %381 = dma.hbm_to_vmem [thread:$0]  %s374, 1024, %s376, %s366, 256, 128, 8
        $region52: #{_lstm_srs_forward.1} parent=47 // pred_fallthru
          _
      $region48: #{_lstm_srs_forward.1} parent=5 // pred_fallthru
        _
      %p382 = scmp.le.s32.totalorder 1, %s25
      %p383 = scmp.lt.s32.totalorder %s25, 3
      %p384 = pnand %p382, %p383
      %p385 = pneg %p384
      // Predicated region
      $region53: #{_lstm_srs_forward.1} parent=5 // pred_check
        _
      $region54: #{_lstm_srs_forward.1} parent=5 // pred_check_branch
        %387 = sbr.rel (%p384) target = $region56
      $region55: #{_lstm_srs_forward.1} parent=5 // pred_region
        %s388 = ssub.s32 %s25, 1
        %s389 = sand.u32 %s38, 1
        %s390 = scalar_lea.sflag [#allocation6], %s389
        %s391 = sand.u32 %s38, 1
        %s392 = smul.addr %s391, 64
        %s393 = scalar_lea.vmem [#allocation5], %s392
        // Predicated region
        $region57: #{_lstm_srs_forward.1} parent=55 // pred_check
          %p394 = pneg %p51
        $region58: #{_lstm_srs_forward.1} parent=55 // pred_check_branch
          %396 = sbr.rel (%p394) target = $region60
        $region59: #{_lstm_srs_forward.1} parent=55 // pred_region
          %397 = dma.done %s390, 1024
        $region60: #{_lstm_srs_forward.1} parent=55 // pred_fallthru
          _
        // Predicated region
        $region61: #{_lstm_srs_forward.1} parent=55 // pred_check
          %p398 = pneg %p72
        $region62: #{_lstm_srs_forward.1} parent=55 // pred_check_branch
          %400 = sbr.rel (%p398) target = $region64
        $region63: #{_lstm_srs_forward.1} parent=55 // pred_region
          %401 = dma.done [#allocation9], 8192
        $region64: #{_lstm_srs_forward.1} parent=55 // pred_fallthru
          _
        // Predicated region
        $region65: #{_lstm_srs_forward.1} parent=55 // pred_check
          %p402 = pneg %p93
        $region66: #{_lstm_srs_forward.1} parent=55 // pred_check_branch
          %404 = sbr.rel (%p402) target = $region68
        $region67: #{_lstm_srs_forward.1} parent=55 // pred_region
          %405 = dma.done [#allocation9], 8192
        $region68: #{_lstm_srs_forward.1} parent=55 // pred_fallthru
          _
        // Predicated region
        $region69: #{_lstm_srs_forward.1} parent=55 // pred_check
          %p406 = pneg %p114
        $region70: #{_lstm_srs_forward.1} parent=55 // pred_check_branch
          %408 = sbr.rel (%p406) target = $region72
        $region71: #{_lstm_srs_forward.1} parent=55 // pred_region
          %409 = dma.done [#allocation12], 64
        $region72: #{_lstm_srs_forward.1} parent=55 // pred_fallthru
          _
        // Predicated region
        $region73: #{_lstm_srs_forward.1} parent=55 // pred_check
          %p410 = pneg %p135
        $region74: #{_lstm_srs_forward.1} parent=55 // pred_check_branch
          %412 = sbr.rel (%p410) target = $region76
        $region75: #{_lstm_srs_forward.1} parent=55 // pred_region
          %413 = dma.done [#allocation12], 8192
        $region76: #{_lstm_srs_forward.1} parent=55 // pred_fallthru
          _
        // Predicated region
        $region77: #{_lstm_srs_forward.1} parent=55 // pred_check
          %p414 = pneg %p156
        $region78: #{_lstm_srs_forward.1} parent=55 // pred_check_branch
          %416 = sbr.rel (%p414) target = $region80
        $region79: #{_lstm_srs_forward.1} parent=55 // pred_region
          %417 = dma.done [#allocation15], 8192
        $region80: #{_lstm_srs_forward.1} parent=55 // pred_fallthru
          _
        // Predicated region
        $region81: #{_lstm_srs_forward.1} parent=55 // pred_check
          %p418 = pneg %p177
        $region82: #{_lstm_srs_forward.1} parent=55 // pred_check_branch
          %420 = sbr.rel (%p418) target = $region84
        $region83: #{_lstm_srs_forward.1} parent=55 // pred_region
          %421 = dma.done [#allocation15], 64
        $region84: #{_lstm_srs_forward.1} parent=55 // pred_fallthru
          _
        // Predicated region
        $region85: #{_lstm_srs_forward.1} parent=55 // pred_check
          %p422 = pneg %p198
        $region86: #{_lstm_srs_forward.1} parent=55 // pred_check_branch
          %424 = sbr.rel (%p422) target = $region88
        $region87: #{_lstm_srs_forward.1} parent=55 // pred_region
          %425 = dma.done [#allocation18], 2048
        $region88: #{_lstm_srs_forward.1} parent=55 // pred_fallthru
          _
        // Predicated region
        $region89: #{_lstm_srs_forward.1} parent=55 // pred_check
          %p426 = pneg %p219
        $region90: #{_lstm_srs_forward.1} parent=55 // pred_check_branch
          %428 = sbr.rel (%p426) target = $region92
        $region91: #{_lstm_srs_forward.1} parent=55 // pred_region
          %429 = dma.done [#allocation18], 16
        $region92: #{_lstm_srs_forward.1} parent=55 // pred_fallthru
          _
        %s430 = sand.u32 %s38, 1
        %s431 = scalar_lea.sflag [#allocation6], %s430
        %s432 = sand.u32 %s38, 1
        %s433 = smul.addr %s432, 64
        %s434 = scalar_lea.vmem [#allocation5], %s433
        %p435 = pneg %p51
        %p436 = pneg %p48
        %p437 = pneg %p72
        %p438 = pneg %p69
        %p439 = pneg %p93
        %p440 = pneg %p90
        %p441 = pneg %p114
        %p442 = pneg %p111
        %p443 = pneg %p135
        %p444 = pneg %p132
        %p445 = pneg %p156
        %p446 = pneg %p153
        %p447 = pneg %p177
        %p448 = pneg %p174
        %p449 = pneg %p198
        %p450 = pneg %p195
        %p451 = pneg %p219
        %p452 = pneg %p216
        %p453 = pneg %p245
        %p454 = pneg %p242
        %s455 = sand.u32 %s232, 1
        %s456 = scalar_lea.sflag [#allocation7], %s455
        %s457 = sand.u32 %s232, 1
        %s458 = smul.addr %s457, 8
        %s459 = scalar_lea.vmem [#allocation20], %s458
        %v460 = vld [vmem:[%s393] sm:$0xff]
        %v461 = vld [vmem:[%s393 + $0x8] sm:$0xff]
        %v462 = vld [vmem:[%s393 + $0x10] sm:$0xff]
        %v463 = vld [vmem:[%s393 + $0x18] sm:$0xff]
        %v464 = vld [vmem:[%s393 + $0x20] sm:$0xff]
        %v465 = vld [vmem:[%s393 + $0x28] sm:$0xff]
        %v466 = vld [vmem:[%s393 + $0x30] sm:$0xff]
        %v467 = vld [vmem:[%s393 + $0x38] sm:$0xff]
        %v468 = vld [vmem:[#allocation8] sm:$0xff]
        %v469 = vld [vmem:[#allocation8 + $0x8] sm:$0xff]
        %v470 = vld [vmem:[#allocation8 + $0x10] sm:$0xff]
        %v471 = vld [vmem:[#allocation8 + $0x18] sm:$0xff]
        %v472 = vld [vmem:[#allocation8 + $0x20] sm:$0xff]
        %v473 = vld [vmem:[#allocation8 + $0x28] sm:$0xff]
        %v474 = vld [vmem:[#allocation8 + $0x30] sm:$0xff]
        %v475 = vld [vmem:[#allocation8 + $0x38] sm:$0xff]
        %v476 = vld [vmem:[#allocation8 + $0x40] sm:$0xff]
        %v477 = vld [vmem:[#allocation8 + $0x48] sm:$0xff]
        %v478 = vld [vmem:[#allocation8 + $0x50] sm:$0xff]
        %v479 = vld [vmem:[#allocation8 + $0x58] sm:$0xff]
        %v480 = vld [vmem:[#allocation8 + $0x60] sm:$0xff]
        %v481 = vld [vmem:[#allocation8 + $0x68] sm:$0xff]
        %v482 = vld [vmem:[#allocation8 + $0x70] sm:$0xff]
        %v483 = vld [vmem:[#allocation8 + $0x78] sm:$0xff]
        %v484 = vld [vmem:[#allocation8 + $0x80] sm:$0xff]
        %v485 = vld [vmem:[#allocation8 + $0x88] sm:$0xff]
        %v486 = vld [vmem:[#allocation8 + $0x90] sm:$0xff]
        %v487 = vld [vmem:[#allocation8 + $0x98] sm:$0xff]
        %v488 = vld [vmem:[#allocation8 + $0xa0] sm:$0xff]
        %v489 = vld [vmem:[#allocation8 + $0xa8] sm:$0xff]
        %v490 = vld [vmem:[#allocation8 + $0xb0] sm:$0xff]
        %v491 = vld [vmem:[#allocation8 + $0xb8] sm:$0xff]
        %v492 = vld [vmem:[#allocation8 + $0xc0] sm:$0xff]
        %v493 = vld [vmem:[#allocation8 + $0xc8] sm:$0xff]
        %v494 = vld [vmem:[#allocation8 + $0xd0] sm:$0xff]
        %v495 = vld [vmem:[#allocation8 + $0xd8] sm:$0xff]
        %v496 = vld [vmem:[#allocation8 + $0xe0] sm:$0xff]
        %v497 = vld [vmem:[#allocation8 + $0xe8] sm:$0xff]
        %v498 = vld [vmem:[#allocation8 + $0xf0] sm:$0xff]
        %v499 = vld [vmem:[#allocation8 + $0xf8] sm:$0xff]
        %v500 = vld [vmem:[#allocation8 + $0x100] sm:$0xff]
        %v501 = vld [vmem:[#allocation8 + $0x108] sm:$0xff]
        %v502 = vld [vmem:[#allocation8 + $0x110] sm:$0xff]
        %v503 = vld [vmem:[#allocation8 + $0x118] sm:$0xff]
        %v504 = vld [vmem:[#allocation8 + $0x120] sm:$0xff]
        %v505 = vld [vmem:[#allocation8 + $0x128] sm:$0xff]
        %v506 = vld [vmem:[#allocation8 + $0x130] sm:$0xff]
        %v507 = vld [vmem:[#allocation8 + $0x138] sm:$0xff]
        %v508 = vld [vmem:[#allocation8 + $0x140] sm:$0xff]
        %v509 = vld [vmem:[#allocation8 + $0x148] sm:$0xff]
        %v510 = vld [vmem:[#allocation8 + $0x150] sm:$0xff]
        %v511 = vld [vmem:[#allocation8 + $0x158] sm:$0xff]
        %v512 = vld [vmem:[#allocation8 + $0x160] sm:$0xff]
        %v513 = vld [vmem:[#allocation8 + $0x168] sm:$0xff]
        %v514 = vld [vmem:[#allocation8 + $0x170] sm:$0xff]
        %v515 = vld [vmem:[#allocation8 + $0x178] sm:$0xff]
        %v516 = vld [vmem:[#allocation8 + $0x180] sm:$0xff]
        %v517 = vld [vmem:[#allocation8 + $0x188] sm:$0xff]
        %v518 = vld [vmem:[#allocation8 + $0x190] sm:$0xff]
        %v519 = vld [vmem:[#allocation8 + $0x198] sm:$0xff]
        %v520 = vld [vmem:[#allocation8 + $0x1a0] sm:$0xff]
        %v521 = vld [vmem:[#allocation8 + $0x1a8] sm:$0xff]
        %v522 = vld [vmem:[#allocation8 + $0x1b0] sm:$0xff]
        %v523 = vld [vmem:[#allocation8 + $0x1b8] sm:$0xff]
        %v524 = vld [vmem:[#allocation8 + $0x1c0] sm:$0xff]
        %v525 = vld [vmem:[#allocation8 + $0x1c8] sm:$0xff]
        %v526 = vld [vmem:[#allocation8 + $0x1d0] sm:$0xff]
        %v527 = vld [vmem:[#allocation8 + $0x1d8] sm:$0xff]
        %v528 = vld [vmem:[#allocation8 + $0x1e0] sm:$0xff]
        %v529 = vld [vmem:[#allocation8 + $0x1e8] sm:$0xff]
        %v530 = vld [vmem:[#allocation8 + $0x1f0] sm:$0xff]
        %v531 = vld [vmem:[#allocation8 + $0x1f8] sm:$0xff]
        %v532 = vld [vmem:[#allocation11] sm:$0xf]
        %v534 = vlaneseq
        %v535 = vshrl.u32 %v534, 7
        %v536 = vsub.s32 0, %v535
        %v537 = vrot.slane %v532, %v536
        %v538 = vlaneseq
        %v539 = vshrl.u32 %v538, 7
        %v540 = vsub.s32 1, %v539
        %v541 = vrot.slane %v532, %v540
        %v542 = vlaneseq
        %v543 = vshrl.u32 %v542, 7
        %v544 = vsub.s32 2, %v543
        %v545 = vrot.slane %v532, %v544
        %v546 = vlaneseq
        %v547 = vshrl.u32 %v546, 7
        %v548 = vsub.s32 3, %v547
        %v549 = vrot.slane %v532, %v548
        %554 = vmatprep.subr.mxu0 %v469
        %555 = vmatpush1.msra.mxu0 %v468
        %556 = vmatprep.subr.mxu0 %v473
        %557 = vmatpush1.msra.mxu0 %v472
        %558 = vmatprep.subr.mxu0 %v477
        %559 = vmatpush1.msra.mxu0 %v476
        %560 = vmatprep.subr.mxu0 %v481
        %561 = vmatpush1.msra.mxu0 %v480
        %562 = vmatprep.subr.mxu0 %v485
        %563 = vmatpush1.msra.mxu0 %v484
        %564 = vmatprep.subr.mxu0 %v489
        %565 = vmatpush1.msra.mxu0 %v488
        %566 = vmatprep.subr.mxu0 %v493
        %567 = vmatpush1.msra.mxu0 %v492
        %568 = vmatprep.subr.mxu0 %v497
        %569 = vmatpush1.msra.mxu0 %v496
        %570 = vmatprep.subr.mxu0 %v501
        %571 = vmatpush1.msra.mxu0 %v500
        %572 = vmatprep.subr.mxu0 %v505
        %573 = vmatpush1.msra.mxu0 %v504
        %574 = vmatprep.subr.mxu0 %v509
        %575 = vmatpush1.msra.mxu0 %v508
        %576 = vmatprep.subr.mxu0 %v513
        %577 = vmatpush1.msra.mxu0 %v512
        %578 = vmatprep.subr.mxu0 %v517
        %579 = vmatpush1.msra.mxu0 %v516
        %580 = vmatprep.subr.mxu0 %v521
        %581 = vmatpush1.msra.mxu0 %v520
        %582 = vmatprep.subr.mxu0 %v525
        %583 = vmatpush1.msra.mxu0 %v524
        %584 = vmatprep.subr.mxu0 %v529
        %585 = vmatpush1.msra.mxu0 %v528
        %586 = vmatprep.subr.mxu0 0.0
        %587 = vmatpush1.msra.mxu0 0.0
        %588 = vmatprep.subr.mxu0 0.0
        %589 = vmatpush1.msra.mxu0 0.0
        %590 = vmatprep.subr.mxu0 0.0
        %591 = vmatpush1.msra.mxu0 0.0
        %592 = vmatprep.subr.mxu0 0.0
        %593 = vmatpush1.msra.mxu0 0.0
        %594 = vmatprep.subr.mxu0 0.0
        %595 = vmatpush1.msra.mxu0 0.0
        %596 = vmatprep.subr.mxu0 0.0
        %597 = vmatpush1.msra.mxu0 0.0
        %598 = vmatprep.subr.mxu0 0.0
        %599 = vmatpush1.msra.mxu0 0.0
        %600 = vmatprep.subr.mxu0 0.0
        %601 = vmatpush1.msra.mxu0 0.0
        %602 = vmatprep.subr.mxu0 0.0
        %603 = vmatpush1.msra.mxu0 0.0
        %604 = vmatprep.subr.mxu0 0.0
        %605 = vmatpush1.msra.mxu0 0.0
        %606 = vmatprep.subr.mxu0 0.0
        %607 = vmatpush1.msra.mxu0 0.0
        %608 = vmatprep.subr.mxu0 0.0
        %609 = vmatpush1.msra.mxu0 0.0
        %610 = vmatprep.subr.mxu0 0.0
        %611 = vmatpush1.msra.mxu0 0.0
        %612 = vmatprep.subr.mxu0 0.0
        %613 = vmatpush1.msra.mxu0 0.0
        %614 = vmatprep.subr.mxu0 0.0
        %615 = vmatpush1.msra.mxu0 0.0
        %616 = vmatprep.subr.mxu0 0.0
        %617 = vmatpush1.msra.mxu0 0.0
        %618 = vmatprep.mubr.f32.mxu0 0.0
        %619 = vmatmul.mubr.f32.gmra.mrb[0].mxu0 %v460
        %v620 = vpop.f32.mrb[0].mxu0
        %v621 = vadd.f32 %v537, %v620
        %v622 = vpop.f32.mrb[0].mxu0
        %v623 = vadd.f32 %v541, %v622
        %624 = vmatprep.mubr.f32.mxu0 0.0
        %625 = vmatmul.mubr.f32.gmra.mrb[0].mxu0 %v461
        %v626 = vpop.f32.mrb[0].mxu0
        %v627 = vadd.f32 %v537, %v626
        %v628 = vpop.f32.mrb[0].mxu0
        %v629 = vadd.f32 %v541, %v628
        %630 = vmatprep.mubr.f32.mxu0 0.0
        %631 = vmatmul.mubr.f32.gmra.mrb[0].mxu0 %v462
        %v632 = vpop.f32.mrb[0].mxu0
        %v633 = vadd.f32 %v537, %v632
        %v634 = vpop.f32.mrb[0].mxu0
        %v635 = vadd.f32 %v541, %v634
        %636 = vmatprep.mubr.f32.mxu0 0.0
        %637 = vmatmul.mubr.f32.gmra.mrb[0].mxu0 %v463
        %v638 = vpop.f32.mrb[0].mxu0
        %v639 = vadd.f32 %v537, %v638
        %v640 = vpop.f32.mrb[0].mxu0
        %v641 = vadd.f32 %v541, %v640
        %642 = vmatprep.mubr.f32.mxu0 0.0
        %643 = vmatmul.mubr.f32.gmra.mrb[0].mxu0 %v464
        %v644 = vpop.f32.mrb[0].mxu0
        %v645 = vadd.f32 %v537, %v644
        %v646 = vpop.f32.mrb[0].mxu0
        %v647 = vadd.f32 %v541, %v646
        %648 = vmatprep.mubr.f32.mxu0 0.0
        %649 = vmatmul.mubr.f32.gmra.mrb[0].mxu0 %v465
        %v650 = vpop.f32.mrb[0].mxu0
        %v651 = vadd.f32 %v537, %v650
        %v652 = vpop.f32.mrb[0].mxu0
        %v653 = vadd.f32 %v541, %v652
        %654 = vmatprep.mubr.f32.mxu0 0.0
        %655 = vmatmul.mubr.f32.gmra.mrb[0].mxu0 %v466
        %v656 = vpop.f32.mrb[0].mxu0
        %v657 = vadd.f32 %v537, %v656
        %v658 = vpop.f32.mrb[0].mxu0
        %v659 = vadd.f32 %v541, %v658
        %660 = vmatprep.mubr.f32.mxu0 0.0
        %661 = vmatmul.mubr.f32.gmra.mrb[0].mxu0 %v467
        %v662 = vpop.f32.mrb[0].mxu0
        %v663 = vadd.f32 %v537, %v662
        %v664 = vpop.f32.mrb[0].mxu0
        %v665 = vadd.f32 %v541, %v664
        %666 = vdwg.mxu0
        %667 = vmatprep.subr.mxu0 %v471
        %668 = vmatpush1.msra.mxu0 %v470
        %669 = vmatprep.subr.mxu0 %v475
        %670 = vmatpush1.msra.mxu0 %v474
        %671 = vmatprep.subr.mxu0 %v479
        %672 = vmatpush1.msra.mxu0 %v478
        %673 = vmatprep.subr.mxu0 %v483
        %674 = vmatpush1.msra.mxu0 %v482
        %675 = vmatprep.subr.mxu0 %v487
        %676 = vmatpush1.msra.mxu0 %v486
        %677 = vmatprep.subr.mxu0 %v491
        %678 = vmatpush1.msra.mxu0 %v490
        %679 = vmatprep.subr.mxu0 %v495
        %680 = vmatpush1.msra.mxu0 %v494
        %681 = vmatprep.subr.mxu0 %v499
        %682 = vmatpush1.msra.mxu0 %v498
        %683 = vmatprep.subr.mxu0 %v503
        %684 = vmatpush1.msra.mxu0 %v502
        %685 = vmatprep.subr.mxu0 %v507
        %686 = vmatpush1.msra.mxu0 %v506
        %687 = vmatprep.subr.mxu0 %v511
        %688 = vmatpush1.msra.mxu0 %v510
        %689 = vmatprep.subr.mxu0 %v515
        %690 = vmatpush1.msra.mxu0 %v514
        %691 = vmatprep.subr.mxu0 %v519
        %692 = vmatpush1.msra.mxu0 %v518
        %693 = vmatprep.subr.mxu0 %v523
        %694 = vmatpush1.msra.mxu0 %v522
        %695 = vmatprep.subr.mxu0 %v527
        %696 = vmatpush1.msra.mxu0 %v526
        %697 = vmatprep.subr.mxu0 %v531
        %698 = vmatpush1.msra.mxu0 %v530
        %699 = vmatprep.subr.mxu0 0.0
        %700 = vmatpush1.msra.mxu0 0.0
        %701 = vmatprep.subr.mxu0 0.0
        %702 = vmatpush1.msra.mxu0 0.0
        %703 = vmatprep.subr.mxu0 0.0
        %704 = vmatpush1.msra.mxu0 0.0
        %705 = vmatprep.subr.mxu0 0.0
        %706 = vmatpush1.msra.mxu0 0.0
        %707 = vmatprep.subr.mxu0 0.0
        %708 = vmatpush1.msra.mxu0 0.0
        %709 = vmatprep.subr.mxu0 0.0
        %710 = vmatpush1.msra.mxu0 0.0
        %711 = vmatprep.subr.mxu0 0.0
        %712 = vmatpush1.msra.mxu0 0.0
        %713 = vmatprep.subr.mxu0 0.0
        %714 = vmatpush1.msra.mxu0 0.0
        %715 = vmatprep.subr.mxu0 0.0
        %716 = vmatpush1.msra.mxu0 0.0
        %717 = vmatprep.subr.mxu0 0.0
        %718 = vmatpush1.msra.mxu0 0.0
        %719 = vmatprep.subr.mxu0 0.0
        %720 = vmatpush1.msra.mxu0 0.0
        %721 = vmatprep.subr.mxu0 0.0
        %722 = vmatpush1.msra.mxu0 0.0
        %723 = vmatprep.subr.mxu0 0.0
        %724 = vmatpush1.msra.mxu0 0.0
        %725 = vmatprep.subr.mxu0 0.0
        %726 = vmatpush1.msra.mxu0 0.0
        %727 = vmatprep.subr.mxu0 0.0
        %728 = vmatpush1.msra.mxu0 0.0
        %729 = vmatprep.subr.mxu0 0.0
        %730 = vmatpush1.msra.mxu0 0.0
        %731 = vmatprep.mubr.f32.mxu0 0.0
        %732 = vmatmul.mubr.f32.gmra.mrb[0].mxu0 %v460
        %v733 = vpop.f32.mrb[0].mxu0
        %v734 = vadd.f32 %v545, %v733
        %v735 = vpop.f32.mrb[0].mxu0
        %v736 = vadd.f32 %v549, %v735
        %737 = vmatprep.mubr.f32.mxu0 0.0
        %738 = vmatmul.mubr.f32.gmra.mrb[0].mxu0 %v461
        %v739 = vpop.f32.mrb[0].mxu0
        %v740 = vadd.f32 %v545, %v739
        %v741 = vpop.f32.mrb[0].mxu0
        %v742 = vadd.f32 %v549, %v741
        %743 = vmatprep.mubr.f32.mxu0 0.0
        %744 = vmatmul.mubr.f32.gmra.mrb[0].mxu0 %v462
        %v745 = vpop.f32.mrb[0].mxu0
        %v746 = vadd.f32 %v545, %v745
        %v747 = vpop.f32.mrb[0].mxu0
        %v748 = vadd.f32 %v549, %v747
        %749 = vmatprep.mubr.f32.mxu0 0.0
        %750 = vmatmul.mubr.f32.gmra.mrb[0].mxu0 %v463
        %v751 = vpop.f32.mrb[0].mxu0
        %v752 = vadd.f32 %v545, %v751
        %v753 = vpop.f32.mrb[0].mxu0
        %v754 = vadd.f32 %v549, %v753
        %755 = vmatprep.mubr.f32.mxu0 0.0
        %756 = vmatmul.mubr.f32.gmra.mrb[0].mxu0 %v464
        %v757 = vpop.f32.mrb[0].mxu0
        %v758 = vadd.f32 %v545, %v757
        %v759 = vpop.f32.mrb[0].mxu0
        %v760 = vadd.f32 %v549, %v759
        %761 = vmatprep.mubr.f32.mxu0 0.0
        %762 = vmatmul.mubr.f32.gmra.mrb[0].mxu0 %v465
        %v763 = vpop.f32.mrb[0].mxu0
        %v764 = vadd.f32 %v545, %v763
        %v765 = vpop.f32.mrb[0].mxu0
        %v766 = vadd.f32 %v549, %v765
        %767 = vmatprep.mubr.f32.mxu0 0.0
        %768 = vmatmul.mubr.f32.gmra.mrb[0].mxu0 %v466
        %v769 = vpop.f32.mrb[0].mxu0
        %v770 = vadd.f32 %v545, %v769
        %v771 = vpop.f32.mrb[0].mxu0
        %v772 = vadd.f32 %v549, %v771
        %773 = vmatprep.mubr.f32.mxu0 0.0
        %774 = vmatmul.mubr.f32.gmra.mrb[0].mxu0 %v467
        %v775 = vpop.f32.mrb[0].mxu0
        %v776 = vadd.f32 %v545, %v775
        %v777 = vpop.f32.mrb[0].mxu0
        %v778 = vadd.f32 %v549, %v777
        %779 = vdwg.mxu0
        %780 = vst [vmem:[#allocation4] sm:$0xff] %v621
        %781 = vst [vmem:[#allocation4 + $0x8] sm:$0xff] %v623
        %782 = vst [vmem:[#allocation4 + $0x10] sm:$0xff] %v734
        %783 = vst [vmem:[#allocation4 + $0x18] sm:$0xff] %v736
        %784 = vst [vmem:[#allocation4 + $0x20] sm:$0xff] %v627
        %785 = vst [vmem:[#allocation4 + $0x28] sm:$0xff] %v629
        %786 = vst [vmem:[#allocation4 + $0x30] sm:$0xff] %v740
        %787 = vst [vmem:[#allocation4 + $0x38] sm:$0xff] %v742
        %788 = vst [vmem:[#allocation4 + $0x40] sm:$0xff] %v633
        %789 = vst [vmem:[#allocation4 + $0x48] sm:$0xff] %v635
        %790 = vst [vmem:[#allocation4 + $0x50] sm:$0xff] %v746
        %791 = vst [vmem:[#allocation4 + $0x58] sm:$0xff] %v748
        %792 = vst [vmem:[#allocation4 + $0x60] sm:$0xff] %v639
        %793 = vst [vmem:[#allocation4 + $0x68] sm:$0xff] %v641
        %794 = vst [vmem:[#allocation4 + $0x70] sm:$0xff] %v752
        %795 = vst [vmem:[#allocation4 + $0x78] sm:$0xff] %v754
        %796 = vst [vmem:[#allocation4 + $0x80] sm:$0xff] %v645
        %797 = vst [vmem:[#allocation4 + $0x88] sm:$0xff] %v647
        %798 = vst [vmem:[#allocation4 + $0x90] sm:$0xff] %v758
        %799 = vst [vmem:[#allocation4 + $0x98] sm:$0xff] %v760
        %800 = vst [vmem:[#allocation4 + $0xa0] sm:$0xff] %v651
        %801 = vst [vmem:[#allocation4 + $0xa8] sm:$0xff] %v653
        %802 = vst [vmem:[#allocation4 + $0xb0] sm:$0xff] %v764
        %803 = vst [vmem:[#allocation4 + $0xb8] sm:$0xff] %v766
        %804 = vst [vmem:[#allocation4 + $0xc0] sm:$0xff] %v657
        %805 = vst [vmem:[#allocation4 + $0xc8] sm:$0xff] %v659
        %806 = vst [vmem:[#allocation4 + $0xd0] sm:$0xff] %v770
        %807 = vst [vmem:[#allocation4 + $0xd8] sm:$0xff] %v772
        %808 = vst [vmem:[#allocation4 + $0xe0] sm:$0xff] %v663
        %809 = vst [vmem:[#allocation4 + $0xe8] sm:$0xff] %v665
        %810 = vst [vmem:[#allocation4 + $0xf0] sm:$0xff] %v776
        %811 = vst [vmem:[#allocation4 + $0xf8] sm:$0xff] %v778
        %v812 = vld [vmem:[#allocation4] sm:$0xff]
        %v813 = vld [vmem:[#allocation4 + $0x8] sm:$0xff]
        %v814 = vld [vmem:[#allocation4 + $0x10] sm:$0xff]
        %v815 = vld [vmem:[#allocation4 + $0x18] sm:$0xff]
        %v816 = vld [vmem:[#allocation10] sm:$0xff]
        %v817 = vld [vmem:[#allocation10 + $0x8] sm:$0xff]
        %v818 = vld [vmem:[#allocation10 + $0x10] sm:$0xff]
        %v819 = vld [vmem:[#allocation10 + $0x18] sm:$0xff]
        %v820 = vld [vmem:[#allocation10 + $0x20] sm:$0xff]
        %v821 = vld [vmem:[#allocation10 + $0x28] sm:$0xff]
        %v822 = vld [vmem:[#allocation10 + $0x30] sm:$0xff]
        %v823 = vld [vmem:[#allocation10 + $0x38] sm:$0xff]
        %v824 = vld [vmem:[#allocation10 + $0x40] sm:$0xff]
        %v825 = vld [vmem:[#allocation10 + $0x48] sm:$0xff]
        %v826 = vld [vmem:[#allocation10 + $0x50] sm:$0xff]
        %v827 = vld [vmem:[#allocation10 + $0x58] sm:$0xff]
        %v828 = vld [vmem:[#allocation10 + $0x60] sm:$0xff]
        %v829 = vld [vmem:[#allocation10 + $0x68] sm:$0xff]
        %v830 = vld [vmem:[#allocation10 + $0x70] sm:$0xff]
        %v831 = vld [vmem:[#allocation10 + $0x78] sm:$0xff]
        %v832 = vld [vmem:[#allocation10 + $0x80] sm:$0xff]
        %v833 = vld [vmem:[#allocation10 + $0x88] sm:$0xff]
        %v834 = vld [vmem:[#allocation10 + $0x90] sm:$0xff]
        %v835 = vld [vmem:[#allocation10 + $0x98] sm:$0xff]
        %v836 = vld [vmem:[#allocation10 + $0xa0] sm:$0xff]
        %v837 = vld [vmem:[#allocation10 + $0xa8] sm:$0xff]
        %v838 = vld [vmem:[#allocation10 + $0xb0] sm:$0xff]
        %v839 = vld [vmem:[#allocation10 + $0xb8] sm:$0xff]
        %v840 = vld [vmem:[#allocation10 + $0xc0] sm:$0xff]
        %v841 = vld [vmem:[#allocation10 + $0xc8] sm:$0xff]
        %v842 = vld [vmem:[#allocation10 + $0xd0] sm:$0xff]
        %v843 = vld [vmem:[#allocation10 + $0xd8] sm:$0xff]
        %v844 = vld [vmem:[#allocation10 + $0xe0] sm:$0xff]
        %v845 = vld [vmem:[#allocation10 + $0xe8] sm:$0xff]
        %v846 = vld [vmem:[#allocation10 + $0xf0] sm:$0xff]
        %v847 = vld [vmem:[#allocation10 + $0xf8] sm:$0xff]
        %v848 = vld [vmem:[#allocation10 + $0x100] sm:$0xff]
        %v849 = vld [vmem:[#allocation10 + $0x108] sm:$0xff]
        %v850 = vld [vmem:[#allocation10 + $0x110] sm:$0xff]
        %v851 = vld [vmem:[#allocation10 + $0x118] sm:$0xff]
        %v852 = vld [vmem:[#allocation10 + $0x120] sm:$0xff]
        %v853 = vld [vmem:[#allocation10 + $0x128] sm:$0xff]
        %v854 = vld [vmem:[#allocation10 + $0x130] sm:$0xff]
        %v855 = vld [vmem:[#allocation10 + $0x138] sm:$0xff]
        %v856 = vld [vmem:[#allocation10 + $0x140] sm:$0xff]
        %v857 = vld [vmem:[#allocation10 + $0x148] sm:$0xff]
        %v858 = vld [vmem:[#allocation10 + $0x150] sm:$0xff]
        %v859 = vld [vmem:[#allocation10 + $0x158] sm:$0xff]
        %v860 = vld [vmem:[#allocation10 + $0x160] sm:$0xff]
        %v861 = vld [vmem:[#allocation10 + $0x168] sm:$0xff]
        %v862 = vld [vmem:[#allocation10 + $0x170] sm:$0xff]
        %v863 = vld [vmem:[#allocation10 + $0x178] sm:$0xff]
        %v864 = vld [vmem:[#allocation10 + $0x180] sm:$0xff]
        %v865 = vld [vmem:[#allocation10 + $0x188] sm:$0xff]
        %v866 = vld [vmem:[#allocation10 + $0x190] sm:$0xff]
        %v867 = vld [vmem:[#allocation10 + $0x198] sm:$0xff]
        %v868 = vld [vmem:[#allocation10 + $0x1a0] sm:$0xff]
        %v869 = vld [vmem:[#allocation10 + $0x1a8] sm:$0xff]
        %v870 = vld [vmem:[#allocation10 + $0x1b0] sm:$0xff]
        %v871 = vld [vmem:[#allocation10 + $0x1b8] sm:$0xff]
        %v872 = vld [vmem:[#allocation10 + $0x1c0] sm:$0xff]
        %v873 = vld [vmem:[#allocation10 + $0x1c8] sm:$0xff]
        %v874 = vld [vmem:[#allocation10 + $0x1d0] sm:$0xff]
        %v875 = vld [vmem:[#allocation10 + $0x1d8] sm:$0xff]
        %v876 = vld [vmem:[#allocation10 + $0x1e0] sm:$0xff]
        %v877 = vld [vmem:[#allocation10 + $0x1e8] sm:$0xff]
        %v878 = vld [vmem:[#allocation10 + $0x1f0] sm:$0xff]
        %v879 = vld [vmem:[#allocation10 + $0x1f8] sm:$0xff]
        %880 = vmatprep.subr.mxu0 %v817
        %881 = vmatpush1.msra.mxu0 %v816
        %882 = vmatprep.subr.mxu0 %v821
        %883 = vmatpush1.msra.mxu0 %v820
        %884 = vmatprep.subr.mxu0 %v825
        %885 = vmatpush1.msra.mxu0 %v824
        %886 = vmatprep.subr.mxu0 %v829
        %887 = vmatpush1.msra.mxu0 %v828
        %888 = vmatprep.subr.mxu0 %v833
        %889 = vmatpush1.msra.mxu0 %v832
        %890 = vmatprep.subr.mxu0 %v837
        %891 = vmatpush1.msra.mxu0 %v836
        %892 = vmatprep.subr.mxu0 %v841
        %893 = vmatpush1.msra.mxu0 %v840
        %894 = vmatprep.subr.mxu0 %v845
        %895 = vmatpush1.msra.mxu0 %v844
        %896 = vmatprep.subr.mxu0 %v849
        %897 = vmatpush1.msra.mxu0 %v848
        %898 = vmatprep.subr.mxu0 %v853
        %899 = vmatpush1.msra.mxu0 %v852
        %900 = vmatprep.subr.mxu0 %v857
        %901 = vmatpush1.msra.mxu0 %v856
        %902 = vmatprep.subr.mxu0 %v861
        %903 = vmatpush1.msra.mxu0 %v860
        %904 = vmatprep.subr.mxu0 %v865
        %905 = vmatpush1.msra.mxu0 %v864
        %906 = vmatprep.subr.mxu0 %v869
        %907 = vmatpush1.msra.mxu0 %v868
        %908 = vmatprep.subr.mxu0 %v873
        %909 = vmatpush1.msra.mxu0 %v872
        %910 = vmatprep.subr.mxu0 %v877
        %911 = vmatpush1.msra.mxu0 %v876
        %912 = vmatprep.subr.mxu0 0.0
        %913 = vmatpush1.msra.mxu0 0.0
        %914 = vmatprep.subr.mxu0 0.0
        %915 = vmatpush1.msra.mxu0 0.0
        %916 = vmatprep.subr.mxu0 0.0
        %917 = vmatpush1.msra.mxu0 0.0
        %918 = vmatprep.subr.mxu0 0.0
        %919 = vmatpush1.msra.mxu0 0.0
        %920 = vmatprep.subr.mxu0 0.0
        %921 = vmatpush1.msra.mxu0 0.0
        %922 = vmatprep.subr.mxu0 0.0
        %923 = vmatpush1.msra.mxu0 0.0
        %924 = vmatprep.subr.mxu0 0.0
        %925 = vmatpush1.msra.mxu0 0.0
        %926 = vmatprep.subr.mxu0 0.0
        %927 = vmatpush1.msra.mxu0 0.0
        %928 = vmatprep.subr.mxu0 0.0
        %929 = vmatpush1.msra.mxu0 0.0
        %930 = vmatprep.subr.mxu0 0.0
        %931 = vmatpush1.msra.mxu0 0.0
        %932 = vmatprep.subr.mxu0 0.0
        %933 = vmatpush1.msra.mxu0 0.0
        %934 = vmatprep.subr.mxu0 0.0
        %935 = vmatpush1.msra.mxu0 0.0
        %936 = vmatprep.subr.mxu0 0.0
        %937 = vmatpush1.msra.mxu0 0.0
        %938 = vmatprep.subr.mxu0 0.0
        %939 = vmatpush1.msra.mxu0 0.0
        %940 = vmatprep.subr.mxu0 0.0
        %941 = vmatpush1.msra.mxu0 0.0
        %942 = vmatprep.subr.mxu0 0.0
        %943 = vmatpush1.msra.mxu0 0.0
        %944 = vmatprep.mubr.f32.mxu0 0.0
        %945 = vmatmul.mubr.f32.gmra.mrb[0].mxu0 0.0
        %v946 = vpop.f32.mrb[0].mxu0
        %v947 = vadd.f32 0.0, %v946
        %v948 = vpop.f32.mrb[0].mxu0
        %v949 = vadd.f32 0.0, %v948
        %950 = vdwg.mxu0
        %951 = vmatprep.subr.mxu0 %v819
        %952 = vmatpush1.msra.mxu0 %v818
        %953 = vmatprep.subr.mxu0 %v823
        %954 = vmatpush1.msra.mxu0 %v822
        %955 = vmatprep.subr.mxu0 %v827
        %956 = vmatpush1.msra.mxu0 %v826
        %957 = vmatprep.subr.mxu0 %v831
        %958 = vmatpush1.msra.mxu0 %v830
        %959 = vmatprep.subr.mxu0 %v835
        %960 = vmatpush1.msra.mxu0 %v834
        %961 = vmatprep.subr.mxu0 %v839
        %962 = vmatpush1.msra.mxu0 %v838
        %963 = vmatprep.subr.mxu0 %v843
        %964 = vmatpush1.msra.mxu0 %v842
        %965 = vmatprep.subr.mxu0 %v847
        %966 = vmatpush1.msra.mxu0 %v846
        %967 = vmatprep.subr.mxu0 %v851
        %968 = vmatpush1.msra.mxu0 %v850
        %969 = vmatprep.subr.mxu0 %v855
        %970 = vmatpush1.msra.mxu0 %v854
        %971 = vmatprep.subr.mxu0 %v859
        %972 = vmatpush1.msra.mxu0 %v858
        %973 = vmatprep.subr.mxu0 %v863
        %974 = vmatpush1.msra.mxu0 %v862
        %975 = vmatprep.subr.mxu0 %v867
        %976 = vmatpush1.msra.mxu0 %v866
        %977 = vmatprep.subr.mxu0 %v871
        %978 = vmatpush1.msra.mxu0 %v870
        %979 = vmatprep.subr.mxu0 %v875
        %980 = vmatpush1.msra.mxu0 %v874
        %981 = vmatprep.subr.mxu0 %v879
        %982 = vmatpush1.msra.mxu0 %v878
        %983 = vmatprep.subr.mxu0 0.0
        %984 = vmatpush1.msra.mxu0 0.0
        %985 = vmatprep.subr.mxu0 0.0
        %986 = vmatpush1.msra.mxu0 0.0
        %987 = vmatprep.subr.mxu0 0.0
        %988 = vmatpush1.msra.mxu0 0.0
        %989 = vmatprep.subr.mxu0 0.0
        %990 = vmatpush1.msra.mxu0 0.0
        %991 = vmatprep.subr.mxu0 0.0
        %992 = vmatpush1.msra.mxu0 0.0
        %993 = vmatprep.subr.mxu0 0.0
        %994 = vmatpush1.msra.mxu0 0.0
        %995 = vmatprep.subr.mxu0 0.0
        %996 = vmatpush1.msra.mxu0 0.0
        %997 = vmatprep.subr.mxu0 0.0
        %998 = vmatpush1.msra.mxu0 0.0
        %999 = vmatprep.subr.mxu0 0.0
        %1000 = vmatpush1.msra.mxu0 0.0
        %1001 = vmatprep.subr.mxu0 0.0
        %1002 = vmatpush1.msra.mxu0 0.0
        %1003 = vmatprep.subr.mxu0 0.0
        %1004 = vmatpush1.msra.mxu0 0.0
        %1005 = vmatprep.subr.mxu0 0.0
        %1006 = vmatpush1.msra.mxu0 0.0
        %1007 = vmatprep.subr.mxu0 0.0
        %1008 = vmatpush1.msra.mxu0 0.0
        %1009 = vmatprep.subr.mxu0 0.0
        %1010 = vmatpush1.msra.mxu0 0.0
        %1011 = vmatprep.subr.mxu0 0.0
        %1012 = vmatpush1.msra.mxu0 0.0
        %1013 = vmatprep.subr.mxu0 0.0
        %1014 = vmatpush1.msra.mxu0 0.0
        %1015 = vmatprep.mubr.f32.mxu0 0.0
        %1016 = vmatmul.mubr.f32.gmra.mrb[0].mxu0 0.0
        %v1017 = vpop.f32.mrb[0].mxu0
        %v1018 = vadd.f32 0.0, %v1017
        %v1019 = vpop.f32.mrb[0].mxu0
        %v1020 = vadd.f32 0.0, %v1019
        %1021 = vdwg.mxu0
        %v1022 = vadd.f32 %v812, %v947
        %v1023 = vadd.f32 %v813, %v949
        %v1024 = vadd.f32 %v814, %v1018
        %v1025 = vadd.f32 %v815, %v1020
        %v1026 = vxor.u32 %v1022, 2147483648
        %v1027 = vmul.f32 %v1026, 1.442695
        %v1028 = vpow.pop %v1027
        %v1029 = vadd.f32 %v1028, 1.0
        %v1030 = vrcp.pop %v1029
        %v1031 = vmul.f32 1.0, %v1030
        %v1032 = vxor.u32 %v1023, 2147483648
        %v1033 = vmul.f32 %v1032, 1.442695
        %v1034 = vpow.pop %v1033
        %v1035 = vadd.f32 %v1034, 1.0
        %v1036 = vrcp.pop %v1035
        %v1037 = vmul.f32 1.0, %v1036
        %v1038 = vtanh.pop %v1024
        %v1039 = vxor.u32 %v1025, 2147483648
        %v1040 = vmul.f32 %v1039, 1.442695
        %v1041 = vpow.pop %v1040
        %v1042 = vadd.f32 %v1041, 1.0
        %v1043 = vrcp.pop %v1042
        %v1044 = vmul.f32 1.0, %v1043
        %v1045 = vmul.f32 %v1037, 0.0
        %v1046 = vmul.f32 %v1031, %v1038
        %v1047 = vadd.f32 %v1045, %v1046
        %v1048 = vtanh.pop %v1047
        %v1049 = vmul.f32 %v1044, %v1048
        %1050 = vst [vmem:[#allocation2] sm:$0xff] %v1049
        %s1051 = scalar_lea.vmem [#allocation4], 32
        %v1052 = vld [vmem:[%s1051] sm:$0xff]
        %v1053 = vld [vmem:[%s1051 + $0x8] sm:$0xff]
        %v1054 = vld [vmem:[%s1051 + $0x10] sm:$0xff]
        %v1055 = vld [vmem:[%s1051 + $0x18] sm:$0xff]
        %v1056 = vld [vmem:[#allocation10] sm:$0xff]
        %v1057 = vld [vmem:[#allocation10 + $0x8] sm:$0xff]
        %v1058 = vld [vmem:[#allocation10 + $0x10] sm:$0xff]
        %v1059 = vld [vmem:[#allocation10 + $0x18] sm:$0xff]
        %v1060 = vld [vmem:[#allocation10 + $0x20] sm:$0xff]
        %v1061 = vld [vmem:[#allocation10 + $0x28] sm:$0xff]
        %v1062 = vld [vmem:[#allocation10 + $0x30] sm:$0xff]
        %v1063 = vld [vmem:[#allocation10 + $0x38] sm:$0xff]
        %v1064 = vld [vmem:[#allocation10 + $0x40] sm:$0xff]
        %v1065 = vld [vmem:[#allocation10 + $0x48] sm:$0xff]
        %v1066 = vld [vmem:[#allocation10 + $0x50] sm:$0xff]
        %v1067 = vld [vmem:[#allocation10 + $0x58] sm:$0xff]
        %v1068 = vld [vmem:[#allocation10 + $0x60] sm:$0xff]
        %v1069 = vld [vmem:[#allocation10 + $0x68] sm:$0xff]
        %v1070 = vld [vmem:[#allocation10 + $0x70] sm:$0xff]
        %v1071 = vld [vmem:[#allocation10 + $0x78] sm:$0xff]
        %v1072 = vld [vmem:[#allocation10 + $0x80] sm:$0xff]
        %v1073 = vld [vmem:[#allocation10 + $0x88] sm:$0xff]
        %v1074 = vld [vmem:[#allocation10 + $0x90] sm:$0xff]
        %v1075 = vld [vmem:[#allocation10 + $0x98] sm:$0xff]
        %v1076 = vld [vmem:[#allocation10 + $0xa0] sm:$0xff]
        %v1077 = vld [vmem:[#allocation10 + $0xa8] sm:$0xff]
        %v1078 = vld [vmem:[#allocation10 + $0xb0] sm:$0xff]
        %v1079 = vld [vmem:[#allocation10 + $0xb8] sm:$0xff]
        %v1080 = vld [vmem:[#allocation10 + $0xc0] sm:$0xff]
        %v1081 = vld [vmem:[#allocation10 + $0xc8] sm:$0xff]
        %v1082 = vld [vmem:[#allocation10 + $0xd0] sm:$0xff]
        %v1083 = vld [vmem:[#allocation10 + $0xd8] sm:$0xff]
        %v1084 = vld [vmem:[#allocation10 + $0xe0] sm:$0xff]
        %v1085 = vld [vmem:[#allocation10 + $0xe8] sm:$0xff]
        %v1086 = vld [vmem:[#allocation10 + $0xf0] sm:$0xff]
        %v1087 = vld [vmem:[#allocation10 + $0xf8] sm:$0xff]
        %v1088 = vld [vmem:[#allocation10 + $0x100] sm:$0xff]
        %v1089 = vld [vmem:[#allocation10 + $0x108] sm:$0xff]
        %v1090 = vld [vmem:[#allocation10 + $0x110] sm:$0xff]
        %v1091 = vld [vmem:[#allocation10 + $0x118] sm:$0xff]
        %v1092 = vld [vmem:[#allocation10 + $0x120] sm:$0xff]
        %v1093 = vld [vmem:[#allocation10 + $0x128] sm:$0xff]
        %v1094 = vld [vmem:[#allocation10 + $0x130] sm:$0xff]
        %v1095 = vld [vmem:[#allocation10 + $0x138] sm:$0xff]
        %v1096 = vld [vmem:[#allocation10 + $0x140] sm:$0xff]
        %v1097 = vld [vmem:[#allocation10 + $0x148] sm:$0xff]
        %v1098 = vld [vmem:[#allocation10 + $0x150] sm:$0xff]
        %v1099 = vld [vmem:[#allocation10 + $0x158] sm:$0xff]
        %v1100 = vld [vmem:[#allocation10 + $0x160] sm:$0xff]
        %v1101 = vld [vmem:[#allocation10 + $0x168] sm:$0xff]
        %v1102 = vld [vmem:[#allocation10 + $0x170] sm:$0xff]
        %v1103 = vld [vmem:[#allocation10 + $0x178] sm:$0xff]
        %v1104 = vld [vmem:[#allocation10 + $0x180] sm:$0xff]
        %v1105 = vld [vmem:[#allocation10 + $0x188] sm:$0xff]
        %v1106 = vld [vmem:[#allocation10 + $0x190] sm:$0xff]
        %v1107 = vld [vmem:[#allocation10 + $0x198] sm:$0xff]
        %v1108 = vld [vmem:[#allocation10 + $0x1a0] sm:$0xff]
        %v1109 = vld [vmem:[#allocation10 + $0x1a8] sm:$0xff]
        %v1110 = vld [vmem:[#allocation10 + $0x1b0] sm:$0xff]
        %v1111 = vld [vmem:[#allocation10 + $0x1b8] sm:$0xff]
        %v1112 = vld [vmem:[#allocation10 + $0x1c0] sm:$0xff]
        %v1113 = vld [vmem:[#allocation10 + $0x1c8] sm:$0xff]
        %v1114 = vld [vmem:[#allocation10 + $0x1d0] sm:$0xff]
        %v1115 = vld [vmem:[#allocation10 + $0x1d8] sm:$0xff]
        %v1116 = vld [vmem:[#allocation10 + $0x1e0] sm:$0xff]
        %v1117 = vld [vmem:[#allocation10 + $0x1e8] sm:$0xff]
        %v1118 = vld [vmem:[#allocation10 + $0x1f0] sm:$0xff]
        %v1119 = vld [vmem:[#allocation10 + $0x1f8] sm:$0xff]
        %1120 = vmatprep.subr.mxu0 %v1057
        %1121 = vmatpush1.msra.mxu0 %v1056
        %1122 = vmatprep.subr.mxu0 %v1061
        %1123 = vmatpush1.msra.mxu0 %v1060
        %1124 = vmatprep.subr.mxu0 %v1065
        %1125 = vmatpush1.msra.mxu0 %v1064
        %1126 = vmatprep.subr.mxu0 %v1069
        %1127 = vmatpush1.msra.mxu0 %v1068
        %1128 = vmatprep.subr.mxu0 %v1073
        %1129 = vmatpush1.msra.mxu0 %v1072
        %1130 = vmatprep.subr.mxu0 %v1077
        %1131 = vmatpush1.msra.mxu0 %v1076
        %1132 = vmatprep.subr.mxu0 %v1081
        %1133 = vmatpush1.msra.mxu0 %v1080
        %1134 = vmatprep.subr.mxu0 %v1085
        %1135 = vmatpush1.msra.mxu0 %v1084
        %1136 = vmatprep.subr.mxu0 %v1089
        %1137 = vmatpush1.msra.mxu0 %v1088
        %1138 = vmatprep.subr.mxu0 %v1093
        %1139 = vmatpush1.msra.mxu0 %v1092
        %1140 = vmatprep.subr.mxu0 %v1097
        %1141 = vmatpush1.msra.mxu0 %v1096
        %1142 = vmatprep.subr.mxu0 %v1101
        %1143 = vmatpush1.msra.mxu0 %v1100
        %1144 = vmatprep.subr.mxu0 %v1105
        %1145 = vmatpush1.msra.mxu0 %v1104
        %1146 = vmatprep.subr.mxu0 %v1109
        %1147 = vmatpush1.msra.mxu0 %v1108
        %1148 = vmatprep.subr.mxu0 %v1113
        %1149 = vmatpush1.msra.mxu0 %v1112
        %1150 = vmatprep.subr.mxu0 %v1117
        %1151 = vmatpush1.msra.mxu0 %v1116
        %1152 = vmatprep.subr.mxu0 0.0
        %1153 = vmatpush1.msra.mxu0 0.0
        %1154 = vmatprep.subr.mxu0 0.0
        %1155 = vmatpush1.msra.mxu0 0.0
        %1156 = vmatprep.subr.mxu0 0.0
        %1157 = vmatpush1.msra.mxu0 0.0
        %1158 = vmatprep.subr.mxu0 0.0
        %1159 = vmatpush1.msra.mxu0 0.0
        %1160 = vmatprep.subr.mxu0 0.0
        %1161 = vmatpush1.msra.mxu0 0.0
        %1162 = vmatprep.subr.mxu0 0.0
        %1163 = vmatpush1.msra.mxu0 0.0
        %1164 = vmatprep.subr.mxu0 0.0
        %1165 = vmatpush1.msra.mxu0 0.0
        %1166 = vmatprep.subr.mxu0 0.0
        %1167 = vmatpush1.msra.mxu0 0.0
        %1168 = vmatprep.subr.mxu0 0.0
        %1169 = vmatpush1.msra.mxu0 0.0
        %1170 = vmatprep.subr.mxu0 0.0
        %1171 = vmatpush1.msra.mxu0 0.0
        %1172 = vmatprep.subr.mxu0 0.0
        %1173 = vmatpush1.msra.mxu0 0.0
        %1174 = vmatprep.subr.mxu0 0.0
        %1175 = vmatpush1.msra.mxu0 0.0
        %1176 = vmatprep.subr.mxu0 0.0
        %1177 = vmatpush1.msra.mxu0 0.0
        %1178 = vmatprep.subr.mxu0 0.0
        %1179 = vmatpush1.msra.mxu0 0.0
        %1180 = vmatprep.subr.mxu0 0.0
        %1181 = vmatpush1.msra.mxu0 0.0
        %1182 = vmatprep.subr.mxu0 0.0
        %1183 = vmatpush1.msra.mxu0 0.0
        %1184 = vmatprep.mubr.f32.mxu0 0.0
        %1185 = vmatmul.mubr.f32.gmra.mrb[0].mxu0 %v1049
        %v1186 = vpop.f32.mrb[0].mxu0
        %v1187 = vadd.f32 0.0, %v1186
        %v1188 = vpop.f32.mrb[0].mxu0
        %v1189 = vadd.f32 0.0, %v1188
        %1190 = vdwg.mxu0
        %1191 = vmatprep.subr.mxu0 %v1059
        %1192 = vmatpush1.msra.mxu0 %v1058
        %1193 = vmatprep.subr.mxu0 %v1063
        %1194 = vmatpush1.msra.mxu0 %v1062
        %1195 = vmatprep.subr.mxu0 %v1067
        %1196 = vmatpush1.msra.mxu0 %v1066
        %1197 = vmatprep.subr.mxu0 %v1071
        %1198 = vmatpush1.msra.mxu0 %v1070
        %1199 = vmatprep.subr.mxu0 %v1075
        %1200 = vmatpush1.msra.mxu0 %v1074
        %1201 = vmatprep.subr.mxu0 %v1079
        %1202 = vmatpush1.msra.mxu0 %v1078
        %1203 = vmatprep.subr.mxu0 %v1083
        %1204 = vmatpush1.msra.mxu0 %v1082
        %1205 = vmatprep.subr.mxu0 %v1087
        %1206 = vmatpush1.msra.mxu0 %v1086
        %1207 = vmatprep.subr.mxu0 %v1091
        %1208 = vmatpush1.msra.mxu0 %v1090
        %1209 = vmatprep.subr.mxu0 %v1095
        %1210 = vmatpush1.msra.mxu0 %v1094
        %1211 = vmatprep.subr.mxu0 %v1099
        %1212 = vmatpush1.msra.mxu0 %v1098
        %1213 = vmatprep.subr.mxu0 %v1103
        %1214 = vmatpush1.msra.mxu0 %v1102
        %1215 = vmatprep.subr.mxu0 %v1107
        %1216 = vmatpush1.msra.mxu0 %v1106
        %1217 = vmatprep.subr.mxu0 %v1111
        %1218 = vmatpush1.msra.mxu0 %v1110
        %1219 = vmatprep.subr.mxu0 %v1115
        %1220 = vmatpush1.msra.mxu0 %v1114
        %1221 = vmatprep.subr.mxu0 %v1119
        %1222 = vmatpush1.msra.mxu0 %v1118
        %1223 = vmatprep.subr.mxu0 0.0
        %1224 = vmatpush1.msra.mxu0 0.0
        %1225 = vmatprep.subr.mxu0 0.0
        %1226 = vmatpush1.msra.mxu0 0.0
        %1227 = vmatprep.subr.mxu0 0.0
        %1228 = vmatpush1.msra.mxu0 0.0
        %1229 = vmatprep.subr.mxu0 0.0
        %1230 = vmatpush1.msra.mxu0 0.0
        %1231 = vmatprep.subr.mxu0 0.0
        %1232 = vmatpush1.msra.mxu0 0.0
        %1233 = vmatprep.subr.mxu0 0.0
        %1234 = vmatpush1.msra.mxu0 0.0
        %1235 = vmatprep.subr.mxu0 0.0
        %1236 = vmatpush1.msra.mxu0 0.0
        %1237 = vmatprep.subr.mxu0 0.0
        %1238 = vmatpush1.msra.mxu0 0.0
        %1239 = vmatprep.subr.mxu0 0.0
        %1240 = vmatpush1.msra.mxu0 0.0
        %1241 = vmatprep.subr.mxu0 0.0
        %1242 = vmatpush1.msra.mxu0 0.0
        %1243 = vmatprep.subr.mxu0 0.0
        %1244 = vmatpush1.msra.mxu0 0.0
        %1245 = vmatprep.subr.mxu0 0.0
        %1246 = vmatpush1.msra.mxu0 0.0
        %1247 = vmatprep.subr.mxu0 0.0
        %1248 = vmatpush1.msra.mxu0 0.0
        %1249 = vmatprep.subr.mxu0 0.0
        %1250 = vmatpush1.msra.mxu0 0.0
        %1251 = vmatprep.subr.mxu0 0.0
        %1252 = vmatpush1.msra.mxu0 0.0
        %1253 = vmatprep.subr.mxu0 0.0
        %1254 = vmatpush1.msra.mxu0 0.0
        %1255 = vmatprep.mubr.f32.mxu0 0.0
        %1256 = vmatmul.mubr.f32.gmra.mrb[0].mxu0 %v1049
        %v1257 = vpop.f32.mrb[0].mxu0
        %v1258 = vadd.f32 0.0, %v1257
        %v1259 = vpop.f32.mrb[0].mxu0
        %v1260 = vadd.f32 0.0, %v1259
        %1261 = vdwg.mxu0
        %v1262 = vadd.f32 %v1052, %v1187
        %v1263 = vadd.f32 %v1053, %v1189
        %v1264 = vadd.f32 %v1054, %v1258
        %v1265 = vadd.f32 %v1055, %v1260
        %v1266 = vxor.u32 %v1262, 2147483648
        %v1267 = vmul.f32 %v1266, 1.442695
        %v1268 = vpow.pop %v1267
        %v1269 = vadd.f32 %v1268, 1.0
        %v1270 = vrcp.pop %v1269
        %v1271 = vmul.f32 1.0, %v1270
        %v1272 = vxor.u32 %v1263, 2147483648
        %v1273 = vmul.f32 %v1272, 1.442695
        %v1274 = vpow.pop %v1273
        %v1275 = vadd.f32 %v1274, 1.0
        %v1276 = vrcp.pop %v1275
        %v1277 = vmul.f32 1.0, %v1276
        %v1278 = vtanh.pop %v1264
        %v1279 = vxor.u32 %v1265, 2147483648
        %v1280 = vmul.f32 %v1279, 1.442695
        %v1281 = vpow.pop %v1280
        %v1282 = vadd.f32 %v1281, 1.0
        %v1283 = vrcp.pop %v1282
        %v1284 = vmul.f32 1.0, %v1283
        %v1285 = vmul.f32 %v1277, %v1047
        %v1286 = vmul.f32 %v1271, %v1278
        %v1287 = vadd.f32 %v1285, %v1286
        %v1288 = vtanh.pop %v1287
        %v1289 = vmul.f32 %v1284, %v1288
        %s1290 = scalar_lea.vmem [#allocation2], 8
        %1291 = vst [vmem:[%s1290] sm:$0xff] %v1289
        %s1292 = scalar_lea.vmem [#allocation4], 64
        %v1293 = vld [vmem:[%s1292] sm:$0xff]
        %v1294 = vld [vmem:[%s1292 + $0x8] sm:$0xff]
        %v1295 = vld [vmem:[%s1292 + $0x10] sm:$0xff]
        %v1296 = vld [vmem:[%s1292 + $0x18] sm:$0xff]
        %v1297 = vld [vmem:[#allocation10] sm:$0xff]
        %v1298 = vld [vmem:[#allocation10 + $0x8] sm:$0xff]
        %v1299 = vld [vmem:[#allocation10 + $0x10] sm:$0xff]
        %v1300 = vld [vmem:[#allocation10 + $0x18] sm:$0xff]
        %v1301 = vld [vmem:[#allocation10 + $0x20] sm:$0xff]
        %v1302 = vld [vmem:[#allocation10 + $0x28] sm:$0xff]
        %v1303 = vld [vmem:[#allocation10 + $0x30] sm:$0xff]
        %v1304 = vld [vmem:[#allocation10 + $0x38] sm:$0xff]
        %v1305 = vld [vmem:[#allocation10 + $0x40] sm:$0xff]
        %v1306 = vld [vmem:[#allocation10 + $0x48] sm:$0xff]
        %v1307 = vld [vmem:[#allocation10 + $0x50] sm:$0xff]
        %v1308 = vld [vmem:[#allocation10 + $0x58] sm:$0xff]
        %v1309 = vld [vmem:[#allocation10 + $0x60] sm:$0xff]
        %v1310 = vld [vmem:[#allocation10 + $0x68] sm:$0xff]
        %v1311 = vld [vmem:[#allocation10 + $0x70] sm:$0xff]
        %v1312 = vld [vmem:[#allocation10 + $0x78] sm:$0xff]
        %v1313 = vld [vmem:[#allocation10 + $0x80] sm:$0xff]
        %v1314 = vld [vmem:[#allocation10 + $0x88] sm:$0xff]
        %v1315 = vld [vmem:[#allocation10 + $0x90] sm:$0xff]
        %v1316 = vld [vmem:[#allocation10 + $0x98] sm:$0xff]
        %v1317 = vld [vmem:[#allocation10 + $0xa0] sm:$0xff]
        %v1318 = vld [vmem:[#allocation10 + $0xa8] sm:$0xff]
        %v1319 = vld [vmem:[#allocation10 + $0xb0] sm:$0xff]
        %v1320 = vld [vmem:[#allocation10 + $0xb8] sm:$0xff]
        %v1321 = vld [vmem:[#allocation10 + $0xc0] sm:$0xff]
        %v1322 = vld [vmem:[#allocation10 + $0xc8] sm:$0xff]
        %v1323 = vld [vmem:[#allocation10 + $0xd0] sm:$0xff]
        %v1324 = vld [vmem:[#allocation10 + $0xd8] sm:$0xff]
        %v1325 = vld [vmem:[#allocation10 + $0xe0] sm:$0xff]
        %v1326 = vld [vmem:[#allocation10 + $0xe8] sm:$0xff]
        %v1327 = vld [vmem:[#allocation10 + $0xf0] sm:$0xff]
        %v1328 = vld [vmem:[#allocation10 + $0xf8] sm:$0xff]
        %v1329 = vld [vmem:[#allocation10 + $0x100] sm:$0xff]
        %v1330 = vld [vmem:[#allocation10 + $0x108] sm:$0xff]
        %v1331 = vld [vmem:[#allocation10 + $0x110] sm:$0xff]
        %v1332 = vld [vmem:[#allocation10 + $0x118] sm:$0xff]
        %v1333 = vld [vmem:[#allocation10 + $0x120] sm:$0xff]
        %v1334 = vld [vmem:[#allocation10 + $0x128] sm:$0xff]
        %v1335 = vld [vmem:[#allocation10 + $0x130] sm:$0xff]
        %v1336 = vld [vmem:[#allocation10 + $0x138] sm:$0xff]
        %v1337 = vld [vmem:[#allocation10 + $0x140] sm:$0xff]
        %v1338 = vld [vmem:[#allocation10 + $0x148] sm:$0xff]
        %v1339 = vld [vmem:[#allocation10 + $0x150] sm:$0xff]
        %v1340 = vld [vmem:[#allocation10 + $0x158] sm:$0xff]
        %v1341 = vld [vmem:[#allocation10 + $0x160] sm:$0xff]
        %v1342 = vld [vmem:[#allocation10 + $0x168] sm:$0xff]
        %v1343 = vld [vmem:[#allocation10 + $0x170] sm:$0xff]
        %v1344 = vld [vmem:[#allocation10 + $0x178] sm:$0xff]
        %v1345 = vld [vmem:[#allocation10 + $0x180] sm:$0xff]
        %v1346 = vld [vmem:[#allocation10 + $0x188] sm:$0xff]
        %v1347 = vld [vmem:[#allocation10 + $0x190] sm:$0xff]
        %v1348 = vld [vmem:[#allocation10 + $0x198] sm:$0xff]
        %v1349 = vld [vmem:[#allocation10 + $0x1a0] sm:$0xff]
        %v1350 = vld [vmem:[#allocation10 + $0x1a8] sm:$0xff]
        %v1351 = vld [vmem:[#allocation10 + $0x1b0] sm:$0xff]
        %v1352 = vld [vmem:[#allocation10 + $0x1b8] sm:$0xff]
        %v1353 = vld [vmem:[#allocation10 + $0x1c0] sm:$0xff]
        %v1354 = vld [vmem:[#allocation10 + $0x1c8] sm:$0xff]
        %v1355 = vld [vmem:[#allocation10 + $0x1d0] sm:$0xff]
        %v1356 = vld [vmem:[#allocation10 + $0x1d8] sm:$0xff]
        %v1357 = vld [vmem:[#allocation10 + $0x1e0] sm:$0xff]
        %v1358 = vld [vmem:[#allocation10 + $0x1e8] sm:$0xff]
        %v1359 = vld [vmem:[#allocation10 + $0x1f0] sm:$0xff]
        %v1360 = vld [vmem:[#allocation10 + $0x1f8] sm:$0xff]
        %1361 = vmatprep.subr.mxu0 %v1298
        %1362 = vmatpush1.msra.mxu0 %v1297
        %1363 = vmatprep.subr.mxu0 %v1302
        %1364 = vmatpush1.msra.mxu0 %v1301
        %1365 = vmatprep.subr.mxu0 %v1306
        %1366 = vmatpush1.msra.mxu0 %v1305
        %1367 = vmatprep.subr.mxu0 %v1310
        %1368 = vmatpush1.msra.mxu0 %v1309
        %1369 = vmatprep.subr.mxu0 %v1314
        %1370 = vmatpush1.msra.mxu0 %v1313
        %1371 = vmatprep.subr.mxu0 %v1318
        %1372 = vmatpush1.msra.mxu0 %v1317
        %1373 = vmatprep.subr.mxu0 %v1322
        %1374 = vmatpush1.msra.mxu0 %v1321
        %1375 = vmatprep.subr.mxu0 %v1326
        %1376 = vmatpush1.msra.mxu0 %v1325
        %1377 = vmatprep.subr.mxu0 %v1330
        %1378 = vmatpush1.msra.mxu0 %v1329
        %1379 = vmatprep.subr.mxu0 %v1334
        %1380 = vmatpush1.msra.mxu0 %v1333
        %1381 = vmatprep.subr.mxu0 %v1338
        %1382 = vmatpush1.msra.mxu0 %v1337
        %1383 = vmatprep.subr.mxu0 %v1342
        %1384 = vmatpush1.msra.mxu0 %v1341
        %1385 = vmatprep.subr.mxu0 %v1346
        %1386 = vmatpush1.msra.mxu0 %v1345
        %1387 = vmatprep.subr.mxu0 %v1350
        %1388 = vmatpush1.msra.mxu0 %v1349
        %1389 = vmatprep.subr.mxu0 %v1354
        %1390 = vmatpush1.msra.mxu0 %v1353
        %1391 = vmatprep.subr.mxu0 %v1358
        %1392 = vmatpush1.msra.mxu0 %v1357
        %1393 = vmatprep.subr.mxu0 0.0
        %1394 = vmatpush1.msra.mxu0 0.0
        %1395 = vmatprep.subr.mxu0 0.0
        %1396 = vmatpush1.msra.mxu0 0.0
        %1397 = vmatprep.subr.mxu0 0.0
        %1398 = vmatpush1.msra.mxu0 0.0
        %1399 = vmatprep.subr.mxu0 0.0
        %1400 = vmatpush1.msra.mxu0 0.0
        %1401 = vmatprep.subr.mxu0 0.0
        %1402 = vmatpush1.msra.mxu0 0.0
        %1403 = vmatprep.subr.mxu0 0.0
        %1404 = vmatpush1.msra.mxu0 0.0
        %1405 = vmatprep.subr.mxu0 0.0
        %1406 = vmatpush1.msra.mxu0 0.0
        %1407 = vmatprep.subr.mxu0 0.0
        %1408 = vmatpush1.msra.mxu0 0.0
        %1409 = vmatprep.subr.mxu0 0.0
        %1410 = vmatpush1.msra.mxu0 0.0
        %1411 = vmatprep.subr.mxu0 0.0
        %1412 = vmatpush1.msra.mxu0 0.0
        %1413 = vmatprep.subr.mxu0 0.0
        %1414 = vmatpush1.msra.mxu0 0.0
        %1415 = vmatprep.subr.mxu0 0.0
        %1416 = vmatpush1.msra.mxu0 0.0
        %1417 = vmatprep.subr.mxu0 0.0
        %1418 = vmatpush1.msra.mxu0 0.0
        %1419 = vmatprep.subr.mxu0 0.0
        %1420 = vmatpush1.msra.mxu0 0.0
        %1421 = vmatprep.subr.mxu0 0.0
        %1422 = vmatpush1.msra.mxu0 0.0
        %1423 = vmatprep.subr.mxu0 0.0
        %1424 = vmatpush1.msra.mxu0 0.0
        %1425 = vmatprep.mubr.f32.mxu0 0.0
        %1426 = vmatmul.mubr.f32.gmra.mrb[0].mxu0 %v1289
        %v1427 = vpop.f32.mrb[0].mxu0
        %v1428 = vadd.f32 0.0, %v1427
        %v1429 = vpop.f32.mrb[0].mxu0
        %v1430 = vadd.f32 0.0, %v1429
        %1431 = vdwg.mxu0
        %1432 = vmatprep.subr.mxu0 %v1300
        %1433 = vmatpush1.msra.mxu0 %v1299
        %1434 = vmatprep.subr.mxu0 %v1304
        %1435 = vmatpush1.msra.mxu0 %v1303
        %1436 = vmatprep.subr.mxu0 %v1308
        %1437 = vmatpush1.msra.mxu0 %v1307
        %1438 = vmatprep.subr.mxu0 %v1312
        %1439 = vmatpush1.msra.mxu0 %v1311
        %1440 = vmatprep.subr.mxu0 %v1316
        %1441 = vmatpush1.msra.mxu0 %v1315
        %1442 = vmatprep.subr.mxu0 %v1320
        %1443 = vmatpush1.msra.mxu0 %v1319
        %1444 = vmatprep.subr.mxu0 %v1324
        %1445 = vmatpush1.msra.mxu0 %v1323
        %1446 = vmatprep.subr.mxu0 %v1328
        %1447 = vmatpush1.msra.mxu0 %v1327
        %1448 = vmatprep.subr.mxu0 %v1332
        %1449 = vmatpush1.msra.mxu0 %v1331
        %1450 = vmatprep.subr.mxu0 %v1336
        %1451 = vmatpush1.msra.mxu0 %v1335
        %1452 = vmatprep.subr.mxu0 %v1340
        %1453 = vmatpush1.msra.mxu0 %v1339
        %1454 = vmatprep.subr.mxu0 %v1344
        %1455 = vmatpush1.msra.mxu0 %v1343
        %1456 = vmatprep.subr.mxu0 %v1348
        %1457 = vmatpush1.msra.mxu0 %v1347
        %1458 = vmatprep.subr.mxu0 %v1352
        %1459 = vmatpush1.msra.mxu0 %v1351
        %1460 = vmatprep.subr.mxu0 %v1356
        %1461 = vmatpush1.msra.mxu0 %v1355
        %1462 = vmatprep.subr.mxu0 %v1360
        %1463 = vmatpush1.msra.mxu0 %v1359
        %1464 = vmatprep.subr.mxu0 0.0
        %1465 = vmatpush1.msra.mxu0 0.0
        %1466 = vmatprep.subr.mxu0 0.0
        %1467 = vmatpush1.msra.mxu0 0.0
        %1468 = vmatprep.subr.mxu0 0.0
        %1469 = vmatpush1.msra.mxu0 0.0
        %1470 = vmatprep.subr.mxu0 0.0
        %1471 = vmatpush1.msra.mxu0 0.0
        %1472 = vmatprep.subr.mxu0 0.0
        %1473 = vmatpush1.msra.mxu0 0.0
        %1474 = vmatprep.subr.mxu0 0.0
        %1475 = vmatpush1.msra.mxu0 0.0
        %1476 = vmatprep.subr.mxu0 0.0
        %1477 = vmatpush1.msra.mxu0 0.0
        %1478 = vmatprep.subr.mxu0 0.0
        %1479 = vmatpush1.msra.mxu0 0.0
        %1480 = vmatprep.subr.mxu0 0.0
        %1481 = vmatpush1.msra.mxu0 0.0
        %1482 = vmatprep.subr.mxu0 0.0
        %1483 = vmatpush1.msra.mxu0 0.0
        %1484 = vmatprep.subr.mxu0 0.0
        %1485 = vmatpush1.msra.mxu0 0.0
        %1486 = vmatprep.subr.mxu0 0.0
        %1487 = vmatpush1.msra.mxu0 0.0
        %1488 = vmatprep.subr.mxu0 0.0
        %1489 = vmatpush1.msra.mxu0 0.0
        %1490 = vmatprep.subr.mxu0 0.0
        %1491 = vmatpush1.msra.mxu0 0.0
        %1492 = vmatprep.subr.mxu0 0.0
        %1493 = vmatpush1.msra.mxu0 0.0
        %1494 = vmatprep.subr.mxu0 0.0
        %1495 = vmatpush1.msra.mxu0 0.0
        %1496 = vmatprep.mubr.f32.mxu0 0.0
        %1497 = vmatmul.mubr.f32.gmra.mrb[0].mxu0 %v1289
        %v1498 = vpop.f32.mrb[0].mxu0
        %v1499 = vadd.f32 0.0, %v1498
        %v1500 = vpop.f32.mrb[0].mxu0
        %v1501 = vadd.f32 0.0, %v1500
        %1502 = vdwg.mxu0
        %v1503 = vadd.f32 %v1293, %v1428
        %v1504 = vadd.f32 %v1294, %v1430
        %v1505 = vadd.f32 %v1295, %v1499
        %v1506 = vadd.f32 %v1296, %v1501
        %v1507 = vxor.u32 %v1503, 2147483648
        %v1508 = vmul.f32 %v1507, 1.442695
        %v1509 = vpow.pop %v1508
        %v1510 = vadd.f32 %v1509, 1.0
        %v1511 = vrcp.pop %v1510
        %v1512 = vmul.f32 1.0, %v1511
        %v1513 = vxor.u32 %v1504, 2147483648
        %v1514 = vmul.f32 %v1513, 1.442695
        %v1515 = vpow.pop %v1514
        %v1516 = vadd.f32 %v1515, 1.0
        %v1517 = vrcp.pop %v1516
        %v1518 = vmul.f32 1.0, %v1517
        %v1519 = vtanh.pop %v1505
        %v1520 = vxor.u32 %v1506, 2147483648
        %v1521 = vmul.f32 %v1520, 1.442695
        %v1522 = vpow.pop %v1521
        %v1523 = vadd.f32 %v1522, 1.0
        %v1524 = vrcp.pop %v1523
        %v1525 = vmul.f32 1.0, %v1524
        %v1526 = vmul.f32 %v1518, %v1287
        %v1527 = vmul.f32 %v1512, %v1519
        %v1528 = vadd.f32 %v1526, %v1527
        %v1529 = vtanh.pop %v1528
        %v1530 = vmul.f32 %v1525, %v1529
        %s1531 = scalar_lea.vmem [#allocation2], 16
        %1532 = vst [vmem:[%s1531] sm:$0xff] %v1530
        %s1533 = scalar_lea.vmem [#allocation4], 96
        %v1534 = vld [vmem:[%s1533] sm:$0xff]
        %v1535 = vld [vmem:[%s1533 + $0x8] sm:$0xff]
        %v1536 = vld [vmem:[%s1533 + $0x10] sm:$0xff]
        %v1537 = vld [vmem:[%s1533 + $0x18] sm:$0xff]
        %v1538 = vld [vmem:[#allocation10] sm:$0xff]
        %v1539 = vld [vmem:[#allocation10 + $0x8] sm:$0xff]
        %v1540 = vld [vmem:[#allocation10 + $0x10] sm:$0xff]
        %v1541 = vld [vmem:[#allocation10 + $0x18] sm:$0xff]
        %v1542 = vld [vmem:[#allocation10 + $0x20] sm:$0xff]
        %v1543 = vld [vmem:[#allocation10 + $0x28] sm:$0xff]
        %v1544 = vld [vmem:[#allocation10 + $0x30] sm:$0xff]
        %v1545 = vld [vmem:[#allocation10 + $0x38] sm:$0xff]
        %v1546 = vld [vmem:[#allocation10 + $0x40] sm:$0xff]
        %v1547 = vld [vmem:[#allocation10 + $0x48] sm:$0xff]
        %v1548 = vld [vmem:[#allocation10 + $0x50] sm:$0xff]
        %v1549 = vld [vmem:[#allocation10 + $0x58] sm:$0xff]
        %v1550 = vld [vmem:[#allocation10 + $0x60] sm:$0xff]
        %v1551 = vld [vmem:[#allocation10 + $0x68] sm:$0xff]
        %v1552 = vld [vmem:[#allocation10 + $0x70] sm:$0xff]
        %v1553 = vld [vmem:[#allocation10 + $0x78] sm:$0xff]
        %v1554 = vld [vmem:[#allocation10 + $0x80] sm:$0xff]
        %v1555 = vld [vmem:[#allocation10 + $0x88] sm:$0xff]
        %v1556 = vld [vmem:[#allocation10 + $0x90] sm:$0xff]
        %v1557 = vld [vmem:[#allocation10 + $0x98] sm:$0xff]
        %v1558 = vld [vmem:[#allocation10 + $0xa0] sm:$0xff]
        %v1559 = vld [vmem:[#allocation10 + $0xa8] sm:$0xff]
        %v1560 = vld [vmem:[#allocation10 + $0xb0] sm:$0xff]
        %v1561 = vld [vmem:[#allocation10 + $0xb8] sm:$0xff]
        %v1562 = vld [vmem:[#allocation10 + $0xc0] sm:$0xff]
        %v1563 = vld [vmem:[#allocation10 + $0xc8] sm:$0xff]
        %v1564 = vld [vmem:[#allocation10 + $0xd0] sm:$0xff]
        %v1565 = vld [vmem:[#allocation10 + $0xd8] sm:$0xff]
        %v1566 = vld [vmem:[#allocation10 + $0xe0] sm:$0xff]
        %v1567 = vld [vmem:[#allocation10 + $0xe8] sm:$0xff]
        %v1568 = vld [vmem:[#allocation10 + $0xf0] sm:$0xff]
        %v1569 = vld [vmem:[#allocation10 + $0xf8] sm:$0xff]
        %v1570 = vld [vmem:[#allocation10 + $0x100] sm:$0xff]
        %v1571 = vld [vmem:[#allocation10 + $0x108] sm:$0xff]
        %v1572 = vld [vmem:[#allocation10 + $0x110] sm:$0xff]
        %v1573 = vld [vmem:[#allocation10 + $0x118] sm:$0xff]
        %v1574 = vld [vmem:[#allocation10 + $0x120] sm:$0xff]
        %v1575 = vld [vmem:[#allocation10 + $0x128] sm:$0xff]
        %v1576 = vld [vmem:[#allocation10 + $0x130] sm:$0xff]
        %v1577 = vld [vmem:[#allocation10 + $0x138] sm:$0xff]
        %v1578 = vld [vmem:[#allocation10 + $0x140] sm:$0xff]
        %v1579 = vld [vmem:[#allocation10 + $0x148] sm:$0xff]
        %v1580 = vld [vmem:[#allocation10 + $0x150] sm:$0xff]
        %v1581 = vld [vmem:[#allocation10 + $0x158] sm:$0xff]
        %v1582 = vld [vmem:[#allocation10 + $0x160] sm:$0xff]
        %v1583 = vld [vmem:[#allocation10 + $0x168] sm:$0xff]
        %v1584 = vld [vmem:[#allocation10 + $0x170] sm:$0xff]
        %v1585 = vld [vmem:[#allocation10 + $0x178] sm:$0xff]
        %v1586 = vld [vmem:[#allocation10 + $0x180] sm:$0xff]
        %v1587 = vld [vmem:[#allocation10 + $0x188] sm:$0xff]
        %v1588 = vld [vmem:[#allocation10 + $0x190] sm:$0xff]
        %v1589 = vld [vmem:[#allocation10 + $0x198] sm:$0xff]
        %v1590 = vld [vmem:[#allocation10 + $0x1a0] sm:$0xff]
        %v1591 = vld [vmem:[#allocation10 + $0x1a8] sm:$0xff]
        %v1592 = vld [vmem:[#allocation10 + $0x1b0] sm:$0xff]
        %v1593 = vld [vmem:[#allocation10 + $0x1b8] sm:$0xff]
        %v1594 = vld [vmem:[#allocation10 + $0x1c0] sm:$0xff]
        %v1595 = vld [vmem:[#allocation10 + $0x1c8] sm:$0xff]
        %v1596 = vld [vmem:[#allocation10 + $0x1d0] sm:$0xff]
        %v1597 = vld [vmem:[#allocation10 + $0x1d8] sm:$0xff]
        %v1598 = vld [vmem:[#allocation10 + $0x1e0] sm:$0xff]
        %v1599 = vld [vmem:[#allocation10 + $0x1e8] sm:$0xff]
        %v1600 = vld [vmem:[#allocation10 + $0x1f0] sm:$0xff]
        %v1601 = vld [vmem:[#allocation10 + $0x1f8] sm:$0xff]
        %1602 = vmatprep.subr.mxu0 %v1539
        %1603 = vmatpush1.msra.mxu0 %v1538
        %1604 = vmatprep.subr.mxu0 %v1543
        %1605 = vmatpush1.msra.mxu0 %v1542
        %1606 = vmatprep.subr.mxu0 %v1547
        %1607 = vmatpush1.msra.mxu0 %v1546
        %1608 = vmatprep.subr.mxu0 %v1551
        %1609 = vmatpush1.msra.mxu0 %v1550
        %1610 = vmatprep.subr.mxu0 %v1555
        %1611 = vmatpush1.msra.mxu0 %v1554
        %1612 = vmatprep.subr.mxu0 %v1559
        %1613 = vmatpush1.msra.mxu0 %v1558
        %1614 = vmatprep.subr.mxu0 %v1563
        %1615 = vmatpush1.msra.mxu0 %v1562
        %1616 = vmatprep.subr.mxu0 %v1567
        %1617 = vmatpush1.msra.mxu0 %v1566
        %1618 = vmatprep.subr.mxu0 %v1571
        %1619 = vmatpush1.msra.mxu0 %v1570
        %1620 = vmatprep.subr.mxu0 %v1575
        %1621 = vmatpush1.msra.mxu0 %v1574
        %1622 = vmatprep.subr.mxu0 %v1579
        %1623 = vmatpush1.msra.mxu0 %v1578
        %1624 = vmatprep.subr.mxu0 %v1583
        %1625 = vmatpush1.msra.mxu0 %v1582
        %1626 = vmatprep.subr.mxu0 %v1587
        %1627 = vmatpush1.msra.mxu0 %v1586
        %1628 = vmatprep.subr.mxu0 %v1591
        %1629 = vmatpush1.msra.mxu0 %v1590
        %1630 = vmatprep.subr.mxu0 %v1595
        %1631 = vmatpush1.msra.mxu0 %v1594
        %1632 = vmatprep.subr.mxu0 %v1599
        %1633 = vmatpush1.msra.mxu0 %v1598
        %1634 = vmatprep.subr.mxu0 0.0
        %1635 = vmatpush1.msra.mxu0 0.0
        %1636 = vmatprep.subr.mxu0 0.0
        %1637 = vmatpush1.msra.mxu0 0.0
        %1638 = vmatprep.subr.mxu0 0.0
        %1639 = vmatpush1.msra.mxu0 0.0
        %1640 = vmatprep.subr.mxu0 0.0
        %1641 = vmatpush1.msra.mxu0 0.0
        %1642 = vmatprep.subr.mxu0 0.0
        %1643 = vmatpush1.msra.mxu0 0.0
        %1644 = vmatprep.subr.mxu0 0.0
        %1645 = vmatpush1.msra.mxu0 0.0
        %1646 = vmatprep.subr.mxu0 0.0
        %1647 = vmatpush1.msra.mxu0 0.0
        %1648 = vmatprep.subr.mxu0 0.0
        %1649 = vmatpush1.msra.mxu0 0.0
        %1650 = vmatprep.subr.mxu0 0.0
        %1651 = vmatpush1.msra.mxu0 0.0
        %1652 = vmatprep.subr.mxu0 0.0
        %1653 = vmatpush1.msra.mxu0 0.0
        %1654 = vmatprep.subr.mxu0 0.0
        %1655 = vmatpush1.msra.mxu0 0.0
        %1656 = vmatprep.subr.mxu0 0.0
        %1657 = vmatpush1.msra.mxu0 0.0
        %1658 = vmatprep.subr.mxu0 0.0
        %1659 = vmatpush1.msra.mxu0 0.0
        %1660 = vmatprep.subr.mxu0 0.0
        %1661 = vmatpush1.msra.mxu0 0.0
        %1662 = vmatprep.subr.mxu0 0.0
        %1663 = vmatpush1.msra.mxu0 0.0
        %1664 = vmatprep.subr.mxu0 0.0
        %1665 = vmatpush1.msra.mxu0 0.0
        %1666 = vmatprep.mubr.f32.mxu0 0.0
        %1667 = vmatmul.mubr.f32.gmra.mrb[0].mxu0 %v1530
        %v1668 = vpop.f32.mrb[0].mxu0
        %v1669 = vadd.f32 0.0, %v1668
        %v1670 = vpop.f32.mrb[0].mxu0
        %v1671 = vadd.f32 0.0, %v1670
        %1672 = vdwg.mxu0
        %1673 = vmatprep.subr.mxu0 %v1541
        %1674 = vmatpush1.msra.mxu0 %v1540
        %1675 = vmatprep.subr.mxu0 %v1545
        %1676 = vmatpush1.msra.mxu0 %v1544
        %1677 = vmatprep.subr.mxu0 %v1549
        %1678 = vmatpush1.msra.mxu0 %v1548
        %1679 = vmatprep.subr.mxu0 %v1553
        %1680 = vmatpush1.msra.mxu0 %v1552
        %1681 = vmatprep.subr.mxu0 %v1557
        %1682 = vmatpush1.msra.mxu0 %v1556
        %1683 = vmatprep.subr.mxu0 %v1561
        %1684 = vmatpush1.msra.mxu0 %v1560
        %1685 = vmatprep.subr.mxu0 %v1565
        %1686 = vmatpush1.msra.mxu0 %v1564
        %1687 = vmatprep.subr.mxu0 %v1569
        %1688 = vmatpush1.msra.mxu0 %v1568
        %1689 = vmatprep.subr.mxu0 %v1573
        %1690 = vmatpush1.msra.mxu0 %v1572
        %1691 = vmatprep.subr.mxu0 %v1577
        %1692 = vmatpush1.msra.mxu0 %v1576
        %1693 = vmatprep.subr.mxu0 %v1581
        %1694 = vmatpush1.msra.mxu0 %v1580
        %1695 = vmatprep.subr.mxu0 %v1585
        %1696 = vmatpush1.msra.mxu0 %v1584
        %1697 = vmatprep.subr.mxu0 %v1589
        %1698 = vmatpush1.msra.mxu0 %v1588
        %1699 = vmatprep.subr.mxu0 %v1593
        %1700 = vmatpush1.msra.mxu0 %v1592
        %1701 = vmatprep.subr.mxu0 %v1597
        %1702 = vmatpush1.msra.mxu0 %v1596
        %1703 = vmatprep.subr.mxu0 %v1601
        %1704 = vmatpush1.msra.mxu0 %v1600
        %1705 = vmatprep.subr.mxu0 0.0
        %1706 = vmatpush1.msra.mxu0 0.0
        %1707 = vmatprep.subr.mxu0 0.0
        %1708 = vmatpush1.msra.mxu0 0.0
        %1709 = vmatprep.subr.mxu0 0.0
        %1710 = vmatpush1.msra.mxu0 0.0
        %1711 = vmatprep.subr.mxu0 0.0
        %1712 = vmatpush1.msra.mxu0 0.0
        %1713 = vmatprep.subr.mxu0 0.0
        %1714 = vmatpush1.msra.mxu0 0.0
        %1715 = vmatprep.subr.mxu0 0.0
        %1716 = vmatpush1.msra.mxu0 0.0
        %1717 = vmatprep.subr.mxu0 0.0
        %1718 = vmatpush1.msra.mxu0 0.0
        %1719 = vmatprep.subr.mxu0 0.0
        %1720 = vmatpush1.msra.mxu0 0.0
        %1721 = vmatprep.subr.mxu0 0.0
        %1722 = vmatpush1.msra.mxu0 0.0
        %1723 = vmatprep.subr.mxu0 0.0
        %1724 = vmatpush1.msra.mxu0 0.0
        %1725 = vmatprep.subr.mxu0 0.0
        %1726 = vmatpush1.msra.mxu0 0.0
        %1727 = vmatprep.subr.mxu0 0.0
        %1728 = vmatpush1.msra.mxu0 0.0
        %1729 = vmatprep.subr.mxu0 0.0
        %1730 = vmatpush1.msra.mxu0 0.0
        %1731 = vmatprep.subr.mxu0 0.0
        %1732 = vmatpush1.msra.mxu0 0.0
        %1733 = vmatprep.subr.mxu0 0.0
        %1734 = vmatpush1.msra.mxu0 0.0
        %1735 = vmatprep.subr.mxu0 0.0
        %1736 = vmatpush1.msra.mxu0 0.0
        %1737 = vmatprep.mubr.f32.mxu0 0.0
        %1738 = vmatmul.mubr.f32.gmra.mrb[0].mxu0 %v1530
        %v1739 = vpop.f32.mrb[0].mxu0
        %v1740 = vadd.f32 0.0, %v1739
        %v1741 = vpop.f32.mrb[0].mxu0
        %v1742 = vadd.f32 0.0, %v1741
        %1743 = vdwg.mxu0
        %v1744 = vadd.f32 %v1534, %v1669
        %v1745 = vadd.f32 %v1535, %v1671
        %v1746 = vadd.f32 %v1536, %v1740
        %v1747 = vadd.f32 %v1537, %v1742
        %v1748 = vxor.u32 %v1744, 2147483648
        %v1749 = vmul.f32 %v1748, 1.442695
        %v1750 = vpow.pop %v1749
        %v1751 = vadd.f32 %v1750, 1.0
        %v1752 = vrcp.pop %v1751
        %v1753 = vmul.f32 1.0, %v1752
        %v1754 = vxor.u32 %v1745, 2147483648
        %v1755 = vmul.f32 %v1754, 1.442695
        %v1756 = vpow.pop %v1755
        %v1757 = vadd.f32 %v1756, 1.0
        %v1758 = vrcp.pop %v1757
        %v1759 = vmul.f32 1.0, %v1758
        %v1760 = vtanh.pop %v1746
        %v1761 = vxor.u32 %v1747, 2147483648
        %v1762 = vmul.f32 %v1761, 1.442695
        %v1763 = vpow.pop %v1762
        %v1764 = vadd.f32 %v1763, 1.0
        %v1765 = vrcp.pop %v1764
        %v1766 = vmul.f32 1.0, %v1765
        %v1767 = vmul.f32 %v1759, %v1528
        %v1768 = vmul.f32 %v1753, %v1760
        %v1769 = vadd.f32 %v1767, %v1768
        %v1770 = vtanh.pop %v1769
        %v1771 = vmul.f32 %v1766, %v1770
        %s1772 = scalar_lea.vmem [#allocation2], 24
        %1773 = vst [vmem:[%s1772] sm:$0xff] %v1771
        %s1774 = scalar_lea.vmem [#allocation4], 128
        %v1775 = vld [vmem:[%s1774] sm:$0xff]
        %v1776 = vld [vmem:[%s1774 + $0x8] sm:$0xff]
        %v1777 = vld [vmem:[%s1774 + $0x10] sm:$0xff]
        %v1778 = vld [vmem:[%s1774 + $0x18] sm:$0xff]
        %v1779 = vld [vmem:[#allocation10] sm:$0xff]
        %v1780 = vld [vmem:[#allocation10 + $0x8] sm:$0xff]
        %v1781 = vld [vmem:[#allocation10 + $0x10] sm:$0xff]
        %v1782 = vld [vmem:[#allocation10 + $0x18] sm:$0xff]
        %v1783 = vld [vmem:[#allocation10 + $0x20] sm:$0xff]
        %v1784 = vld [vmem:[#allocation10 + $0x28] sm:$0xff]
        %v1785 = vld [vmem:[#allocation10 + $0x30] sm:$0xff]
        %v1786 = vld [vmem:[#allocation10 + $0x38] sm:$0xff]
        %v1787 = vld [vmem:[#allocation10 + $0x40] sm:$0xff]
        %v1788 = vld [vmem:[#allocation10 + $0x48] sm:$0xff]
        %v1789 = vld [vmem:[#allocation10 + $0x50] sm:$0xff]
        %v1790 = vld [vmem:[#allocation10 + $0x58] sm:$0xff]
        %v1791 = vld [vmem:[#allocation10 + $0x60] sm:$0xff]
        %v1792 = vld [vmem:[#allocation10 + $0x68] sm:$0xff]
        %v1793 = vld [vmem:[#allocation10 + $0x70] sm:$0xff]
        %v1794 = vld [vmem:[#allocation10 + $0x78] sm:$0xff]
        %v1795 = vld [vmem:[#allocation10 + $0x80] sm:$0xff]
        %v1796 = vld [vmem:[#allocation10 + $0x88] sm:$0xff]
        %v1797 = vld [vmem:[#allocation10 + $0x90] sm:$0xff]
        %v1798 = vld [vmem:[#allocation10 + $0x98] sm:$0xff]
        %v1799 = vld [vmem:[#allocation10 + $0xa0] sm:$0xff]
        %v1800 = vld [vmem:[#allocation10 + $0xa8] sm:$0xff]
        %v1801 = vld [vmem:[#allocation10 + $0xb0] sm:$0xff]
        %v1802 = vld [vmem:[#allocation10 + $0xb8] sm:$0xff]
        %v1803 = vld [vmem:[#allocation10 + $0xc0] sm:$0xff]
        %v1804 = vld [vmem:[#allocation10 + $0xc8] sm:$0xff]
        %v1805 = vld [vmem:[#allocation10 + $0xd0] sm:$0xff]
        %v1806 = vld [vmem:[#allocation10 + $0xd8] sm:$0xff]
        %v1807 = vld [vmem:[#allocation10 + $0xe0] sm:$0xff]
        %v1808 = vld [vmem:[#allocation10 + $0xe8] sm:$0xff]
        %v1809 = vld [vmem:[#allocation10 + $0xf0] sm:$0xff]
        %v1810 = vld [vmem:[#allocation10 + $0xf8] sm:$0xff]
        %v1811 = vld [vmem:[#allocation10 + $0x100] sm:$0xff]
        %v1812 = vld [vmem:[#allocation10 + $0x108] sm:$0xff]
        %v1813 = vld [vmem:[#allocation10 + $0x110] sm:$0xff]
        %v1814 = vld [vmem:[#allocation10 + $0x118] sm:$0xff]
        %v1815 = vld [vmem:[#allocation10 + $0x120] sm:$0xff]
        %v1816 = vld [vmem:[#allocation10 + $0x128] sm:$0xff]
        %v1817 = vld [vmem:[#allocation10 + $0x130] sm:$0xff]
        %v1818 = vld [vmem:[#allocation10 + $0x138] sm:$0xff]
        %v1819 = vld [vmem:[#allocation10 + $0x140] sm:$0xff]
        %v1820 = vld [vmem:[#allocation10 + $0x148] sm:$0xff]
        %v1821 = vld [vmem:[#allocation10 + $0x150] sm:$0xff]
        %v1822 = vld [vmem:[#allocation10 + $0x158] sm:$0xff]
        %v1823 = vld [vmem:[#allocation10 + $0x160] sm:$0xff]
        %v1824 = vld [vmem:[#allocation10 + $0x168] sm:$0xff]
        %v1825 = vld [vmem:[#allocation10 + $0x170] sm:$0xff]
        %v1826 = vld [vmem:[#allocation10 + $0x178] sm:$0xff]
        %v1827 = vld [vmem:[#allocation10 + $0x180] sm:$0xff]
        %v1828 = vld [vmem:[#allocation10 + $0x188] sm:$0xff]
        %v1829 = vld [vmem:[#allocation10 + $0x190] sm:$0xff]
        %v1830 = vld [vmem:[#allocation10 + $0x198] sm:$0xff]
        %v1831 = vld [vmem:[#allocation10 + $0x1a0] sm:$0xff]
        %v1832 = vld [vmem:[#allocation10 + $0x1a8] sm:$0xff]
        %v1833 = vld [vmem:[#allocation10 + $0x1b0] sm:$0xff]
        %v1834 = vld [vmem:[#allocation10 + $0x1b8] sm:$0xff]
        %v1835 = vld [vmem:[#allocation10 + $0x1c0] sm:$0xff]
        %v1836 = vld [vmem:[#allocation10 + $0x1c8] sm:$0xff]
        %v1837 = vld [vmem:[#allocation10 + $0x1d0] sm:$0xff]
        %v1838 = vld [vmem:[#allocation10 + $0x1d8] sm:$0xff]
        %v1839 = vld [vmem:[#allocation10 + $0x1e0] sm:$0xff]
        %v1840 = vld [vmem:[#allocation10 + $0x1e8] sm:$0xff]
        %v1841 = vld [vmem:[#allocation10 + $0x1f0] sm:$0xff]
        %v1842 = vld [vmem:[#allocation10 + $0x1f8] sm:$0xff]
        %1843 = vmatprep.subr.mxu0 %v1780
        %1844 = vmatpush1.msra.mxu0 %v1779
        %1845 = vmatprep.subr.mxu0 %v1784
        %1846 = vmatpush1.msra.mxu0 %v1783
        %1847 = vmatprep.subr.mxu0 %v1788
        %1848 = vmatpush1.msra.mxu0 %v1787
        %1849 = vmatprep.subr.mxu0 %v1792
        %1850 = vmatpush1.msra.mxu0 %v1791
        %1851 = vmatprep.subr.mxu0 %v1796
        %1852 = vmatpush1.msra.mxu0 %v1795
        %1853 = vmatprep.subr.mxu0 %v1800
        %1854 = vmatpush1.msra.mxu0 %v1799
        %1855 = vmatprep.subr.mxu0 %v1804
        %1856 = vmatpush1.msra.mxu0 %v1803
        %1857 = vmatprep.subr.mxu0 %v1808
        %1858 = vmatpush1.msra.mxu0 %v1807
        %1859 = vmatprep.subr.mxu0 %v1812
        %1860 = vmatpush1.msra.mxu0 %v1811
        %1861 = vmatprep.subr.mxu0 %v1816
        %1862 = vmatpush1.msra.mxu0 %v1815
        %1863 = vmatprep.subr.mxu0 %v1820
        %1864 = vmatpush1.msra.mxu0 %v1819
        %1865 = vmatprep.subr.mxu0 %v1824
        %1866 = vmatpush1.msra.mxu0 %v1823
        %1867 = vmatprep.subr.mxu0 %v1828
        %1868 = vmatpush1.msra.mxu0 %v1827
        %1869 = vmatprep.subr.mxu0 %v1832
        %1870 = vmatpush1.msra.mxu0 %v1831
        %1871 = vmatprep.subr.mxu0 %v1836
        %1872 = vmatpush1.msra.mxu0 %v1835
        %1873 = vmatprep.subr.mxu0 %v1840
        %1874 = vmatpush1.msra.mxu0 %v1839
        %1875 = vmatprep.subr.mxu0 0.0
        %1876 = vmatpush1.msra.mxu0 0.0
        %1877 = vmatprep.subr.mxu0 0.0
        %1878 = vmatpush1.msra.mxu0 0.0
        %1879 = vmatprep.subr.mxu0 0.0
        %1880 = vmatpush1.msra.mxu0 0.0
        %1881 = vmatprep.subr.mxu0 0.0
        %1882 = vmatpush1.msra.mxu0 0.0
        %1883 = vmatprep.subr.mxu0 0.0
        %1884 = vmatpush1.msra.mxu0 0.0
        %1885 = vmatprep.subr.mxu0 0.0
        %1886 = vmatpush1.msra.mxu0 0.0
        %1887 = vmatprep.subr.mxu0 0.0
        %1888 = vmatpush1.msra.mxu0 0.0
        %1889 = vmatprep.subr.mxu0 0.0
        %1890 = vmatpush1.msra.mxu0 0.0
        %1891 = vmatprep.subr.mxu0 0.0
        %1892 = vmatpush1.msra.mxu0 0.0
        %1893 = vmatprep.subr.mxu0 0.0
        %1894 = vmatpush1.msra.mxu0 0.0
        %1895 = vmatprep.subr.mxu0 0.0
        %1896 = vmatpush1.msra.mxu0 0.0
        %1897 = vmatprep.subr.mxu0 0.0
        %1898 = vmatpush1.msra.mxu0 0.0
        %1899 = vmatprep.subr.mxu0 0.0
        %1900 = vmatpush1.msra.mxu0 0.0
        %1901 = vmatprep.subr.mxu0 0.0
        %1902 = vmatpush1.msra.mxu0 0.0
        %1903 = vmatprep.subr.mxu0 0.0
        %1904 = vmatpush1.msra.mxu0 0.0
        %1905 = vmatprep.subr.mxu0 0.0
        %1906 = vmatpush1.msra.mxu0 0.0
        %1907 = vmatprep.mubr.f32.mxu0 0.0
        %1908 = vmatmul.mubr.f32.gmra.mrb[0].mxu0 %v1771
        %v1909 = vpop.f32.mrb[0].mxu0
        %v1910 = vadd.f32 0.0, %v1909
        %v1911 = vpop.f32.mrb[0].mxu0
        %v1912 = vadd.f32 0.0, %v1911
        %1913 = vdwg.mxu0
        %1914 = vmatprep.subr.mxu0 %v1782
        %1915 = vmatpush1.msra.mxu0 %v1781
        %1916 = vmatprep.subr.mxu0 %v1786
        %1917 = vmatpush1.msra.mxu0 %v1785
        %1918 = vmatprep.subr.mxu0 %v1790
        %1919 = vmatpush1.msra.mxu0 %v1789
        %1920 = vmatprep.subr.mxu0 %v1794
        %1921 = vmatpush1.msra.mxu0 %v1793
        %1922 = vmatprep.subr.mxu0 %v1798
        %1923 = vmatpush1.msra.mxu0 %v1797
        %1924 = vmatprep.subr.mxu0 %v1802
        %1925 = vmatpush1.msra.mxu0 %v1801
        %1926 = vmatprep.subr.mxu0 %v1806
        %1927 = vmatpush1.msra.mxu0 %v1805
        %1928 = vmatprep.subr.mxu0 %v1810
        %1929 = vmatpush1.msra.mxu0 %v1809
        %1930 = vmatprep.subr.mxu0 %v1814
        %1931 = vmatpush1.msra.mxu0 %v1813
        %1932 = vmatprep.subr.mxu0 %v1818
        %1933 = vmatpush1.msra.mxu0 %v1817
        %1934 = vmatprep.subr.mxu0 %v1822
        %1935 = vmatpush1.msra.mxu0 %v1821
        %1936 = vmatprep.subr.mxu0 %v1826
        %1937 = vmatpush1.msra.mxu0 %v1825
        %1938 = vmatprep.subr.mxu0 %v1830
        %1939 = vmatpush1.msra.mxu0 %v1829
        %1940 = vmatprep.subr.mxu0 %v1834
        %1941 = vmatpush1.msra.mxu0 %v1833
        %1942 = vmatprep.subr.mxu0 %v1838
        %1943 = vmatpush1.msra.mxu0 %v1837
        %1944 = vmatprep.subr.mxu0 %v1842
        %1945 = vmatpush1.msra.mxu0 %v1841
        %1946 = vmatprep.subr.mxu0 0.0
        %1947 = vmatpush1.msra.mxu0 0.0
        %1948 = vmatprep.subr.mxu0 0.0
        %1949 = vmatpush1.msra.mxu0 0.0
        %1950 = vmatprep.subr.mxu0 0.0
        %1951 = vmatpush1.msra.mxu0 0.0
        %1952 = vmatprep.subr.mxu0 0.0
        %1953 = vmatpush1.msra.mxu0 0.0
        %1954 = vmatprep.subr.mxu0 0.0
        %1955 = vmatpush1.msra.mxu0 0.0
        %1956 = vmatprep.subr.mxu0 0.0
        %1957 = vmatpush1.msra.mxu0 0.0
        %1958 = vmatprep.subr.mxu0 0.0
        %1959 = vmatpush1.msra.mxu0 0.0
        %1960 = vmatprep.subr.mxu0 0.0
        %1961 = vmatpush1.msra.mxu0 0.0
        %1962 = vmatprep.subr.mxu0 0.0
        %1963 = vmatpush1.msra.mxu0 0.0
        %1964 = vmatprep.subr.mxu0 0.0
        %1965 = vmatpush1.msra.mxu0 0.0
        %1966 = vmatprep.subr.mxu0 0.0
        %1967 = vmatpush1.msra.mxu0 0.0
        %1968 = vmatprep.subr.mxu0 0.0
        %1969 = vmatpush1.msra.mxu0 0.0
        %1970 = vmatprep.subr.mxu0 0.0
        %1971 = vmatpush1.msra.mxu0 0.0
        %1972 = vmatprep.subr.mxu0 0.0
        %1973 = vmatpush1.msra.mxu0 0.0
        %1974 = vmatprep.subr.mxu0 0.0
        %1975 = vmatpush1.msra.mxu0 0.0
        %1976 = vmatprep.subr.mxu0 0.0
        %1977 = vmatpush1.msra.mxu0 0.0
        %1978 = vmatprep.mubr.f32.mxu0 0.0
        %1979 = vmatmul.mubr.f32.gmra.mrb[0].mxu0 %v1771
        %v1980 = vpop.f32.mrb[0].mxu0
        %v1981 = vadd.f32 0.0, %v1980
        %v1982 = vpop.f32.mrb[0].mxu0
        %v1983 = vadd.f32 0.0, %v1982
        %1984 = vdwg.mxu0
        %v1985 = vadd.f32 %v1775, %v1910
        %v1986 = vadd.f32 %v1776, %v1912
        %v1987 = vadd.f32 %v1777, %v1981
        %v1988 = vadd.f32 %v1778, %v1983
        %v1989 = vxor.u32 %v1985, 2147483648
        %v1990 = vmul.f32 %v1989, 1.442695
        %v1991 = vpow.pop %v1990
        %v1992 = vadd.f32 %v1991, 1.0
        %v1993 = vrcp.pop %v1992
        %v1994 = vmul.f32 1.0, %v1993
        %v1995 = vxor.u32 %v1986, 2147483648
        %v1996 = vmul.f32 %v1995, 1.442695
        %v1997 = vpow.pop %v1996
        %v1998 = vadd.f32 %v1997, 1.0
        %v1999 = vrcp.pop %v1998
        %v2000 = vmul.f32 1.0, %v1999
        %v2001 = vtanh.pop %v1987
        %v2002 = vxor.u32 %v1988, 2147483648
        %v2003 = vmul.f32 %v2002, 1.442695
        %v2004 = vpow.pop %v2003
        %v2005 = vadd.f32 %v2004, 1.0
        %v2006 = vrcp.pop %v2005
        %v2007 = vmul.f32 1.0, %v2006
        %v2008 = vmul.f32 %v2000, %v1769
        %v2009 = vmul.f32 %v1994, %v2001
        %v2010 = vadd.f32 %v2008, %v2009
        %v2011 = vtanh.pop %v2010
        %v2012 = vmul.f32 %v2007, %v2011
        %s2013 = scalar_lea.vmem [#allocation2], 32
        %2014 = vst [vmem:[%s2013] sm:$0xff] %v2012
        %s2015 = scalar_lea.vmem [#allocation4], 160
        %v2016 = vld [vmem:[%s2015] sm:$0xff]
        %v2017 = vld [vmem:[%s2015 + $0x8] sm:$0xff]
        %v2018 = vld [vmem:[%s2015 + $0x10] sm:$0xff]
        %v2019 = vld [vmem:[%s2015 + $0x18] sm:$0xff]
        %v2020 = vld [vmem:[#allocation10] sm:$0xff]
        %v2021 = vld [vmem:[#allocation10 + $0x8] sm:$0xff]
        %v2022 = vld [vmem:[#allocation10 + $0x10] sm:$0xff]
        %v2023 = vld [vmem:[#allocation10 + $0x18] sm:$0xff]
        %v2024 = vld [vmem:[#allocation10 + $0x20] sm:$0xff]
        %v2025 = vld [vmem:[#allocation10 + $0x28] sm:$0xff]
        %v2026 = vld [vmem:[#allocation10 + $0x30] sm:$0xff]
        %v2027 = vld [vmem:[#allocation10 + $0x38] sm:$0xff]
        %v2028 = vld [vmem:[#allocation10 + $0x40] sm:$0xff]
        %v2029 = vld [vmem:[#allocation10 + $0x48] sm:$0xff]
        %v2030 = vld [vmem:[#allocation10 + $0x50] sm:$0xff]
        %v2031 = vld [vmem:[#allocation10 + $0x58] sm:$0xff]
        %v2032 = vld [vmem:[#allocation10 + $0x60] sm:$0xff]
        %v2033 = vld [vmem:[#allocation10 + $0x68] sm:$0xff]
        %v2034 = vld [vmem:[#allocation10 + $0x70] sm:$0xff]
        %v2035 = vld [vmem:[#allocation10 + $0x78] sm:$0xff]
        %v2036 = vld [vmem:[#allocation10 + $0x80] sm:$0xff]
        %v2037 = vld [vmem:[#allocation10 + $0x88] sm:$0xff]
        %v2038 = vld [vmem:[#allocation10 + $0x90] sm:$0xff]
        %v2039 = vld [vmem:[#allocation10 + $0x98] sm:$0xff]
        %v2040 = vld [vmem:[#allocation10 + $0xa0] sm:$0xff]
        %v2041 = vld [vmem:[#allocation10 + $0xa8] sm:$0xff]
        %v2042 = vld [vmem:[#allocation10 + $0xb0] sm:$0xff]
        %v2043 = vld [vmem:[#allocation10 + $0xb8] sm:$0xff]
        %v2044 = vld [vmem:[#allocation10 + $0xc0] sm:$0xff]
        %v2045 = vld [vmem:[#allocation10 + $0xc8] sm:$0xff]
        %v2046 = vld [vmem:[#allocation10 + $0xd0] sm:$0xff]
        %v2047 = vld [vmem:[#allocation10 + $0xd8] sm:$0xff]
        %v2048 = vld [vmem:[#allocation10 + $0xe0] sm:$0xff]
        %v2049 = vld [vmem:[#allocation10 + $0xe8] sm:$0xff]
        %v2050 = vld [vmem:[#allocation10 + $0xf0] sm:$0xff]
        %v2051 = vld [vmem:[#allocation10 + $0xf8] sm:$0xff]
        %v2052 = vld [vmem:[#allocation10 + $0x100] sm:$0xff]
        %v2053 = vld [vmem:[#allocation10 + $0x108] sm:$0xff]
        %v2054 = vld [vmem:[#allocation10 + $0x110] sm:$0xff]
        %v2055 = vld [vmem:[#allocation10 + $0x118] sm:$0xff]
        %v2056 = vld [vmem:[#allocation10 + $0x120] sm:$0xff]
        %v2057 = vld [vmem:[#allocation10 + $0x128] sm:$0xff]
        %v2058 = vld [vmem:[#allocation10 + $0x130] sm:$0xff]
        %v2059 = vld [vmem:[#allocation10 + $0x138] sm:$0xff]
        %v2060 = vld [vmem:[#allocation10 + $0x140] sm:$0xff]
        %v2061 = vld [vmem:[#allocation10 + $0x148] sm:$0xff]
        %v2062 = vld [vmem:[#allocation10 + $0x150] sm:$0xff]
        %v2063 = vld [vmem:[#allocation10 + $0x158] sm:$0xff]
        %v2064 = vld [vmem:[#allocation10 + $0x160] sm:$0xff]
        %v2065 = vld [vmem:[#allocation10 + $0x168] sm:$0xff]
        %v2066 = vld [vmem:[#allocation10 + $0x170] sm:$0xff]
        %v2067 = vld [vmem:[#allocation10 + $0x178] sm:$0xff]
        %v2068 = vld [vmem:[#allocation10 + $0x180] sm:$0xff]
        %v2069 = vld [vmem:[#allocation10 + $0x188] sm:$0xff]
        %v2070 = vld [vmem:[#allocation10 + $0x190] sm:$0xff]
        %v2071 = vld [vmem:[#allocation10 + $0x198] sm:$0xff]
        %v2072 = vld [vmem:[#allocation10 + $0x1a0] sm:$0xff]
        %v2073 = vld [vmem:[#allocation10 + $0x1a8] sm:$0xff]
        %v2074 = vld [vmem:[#allocation10 + $0x1b0] sm:$0xff]
        %v2075 = vld [vmem:[#allocation10 + $0x1b8] sm:$0xff]
        %v2076 = vld [vmem:[#allocation10 + $0x1c0] sm:$0xff]
        %v2077 = vld [vmem:[#allocation10 + $0x1c8] sm:$0xff]
        %v2078 = vld [vmem:[#allocation10 + $0x1d0] sm:$0xff]
        %v2079 = vld [vmem:[#allocation10 + $0x1d8] sm:$0xff]
        %v2080 = vld [vmem:[#allocation10 + $0x1e0] sm:$0xff]
        %v2081 = vld [vmem:[#allocation10 + $0x1e8] sm:$0xff]
        %v2082 = vld [vmem:[#allocation10 + $0x1f0] sm:$0xff]
        %v2083 = vld [vmem:[#allocation10 + $0x1f8] sm:$0xff]
        %2084 = vmatprep.subr.mxu0 %v2021
        %2085 = vmatpush1.msra.mxu0 %v2020
        %2086 = vmatprep.subr.mxu0 %v2025
        %2087 = vmatpush1.msra.mxu0 %v2024
        %2088 = vmatprep.subr.mxu0 %v2029
        %2089 = vmatpush1.msra.mxu0 %v2028
        %2090 = vmatprep.subr.mxu0 %v2033
        %2091 = vmatpush1.msra.mxu0 %v2032
        %2092 = vmatprep.subr.mxu0 %v2037
        %2093 = vmatpush1.msra.mxu0 %v2036
        %2094 = vmatprep.subr.mxu0 %v2041
        %2095 = vmatpush1.msra.mxu0 %v2040
        %2096 = vmatprep.subr.mxu0 %v2045
        %2097 = vmatpush1.msra.mxu0 %v2044
        %2098 = vmatprep.subr.mxu0 %v2049
        %2099 = vmatpush1.msra.mxu0 %v2048
        %2100 = vmatprep.subr.mxu0 %v2053
        %2101 = vmatpush1.msra.mxu0 %v2052
        %2102 = vmatprep.subr.mxu0 %v2057
        %2103 = vmatpush1.msra.mxu0 %v2056
        %2104 = vmatprep.subr.mxu0 %v2061
        %2105 = vmatpush1.msra.mxu0 %v2060
        %2106 = vmatprep.subr.mxu0 %v2065
        %2107 = vmatpush1.msra.mxu0 %v2064
        %2108 = vmatprep.subr.mxu0 %v2069
        %2109 = vmatpush1.msra.mxu0 %v2068
        %2110 = vmatprep.subr.mxu0 %v2073
        %2111 = vmatpush1.msra.mxu0 %v2072
        %2112 = vmatprep.subr.mxu0 %v2077
        %2113 = vmatpush1.msra.mxu0 %v2076
        %2114 = vmatprep.subr.mxu0 %v2081
        %2115 = vmatpush1.msra.mxu0 %v2080
        %2116 = vmatprep.subr.mxu0 0.0
        %2117 = vmatpush1.msra.mxu0 0.0
        %2118 = vmatprep.subr.mxu0 0.0
        %2119 = vmatpush1.msra.mxu0 0.0
        %2120 = vmatprep.subr.mxu0 0.0
        %2121 = vmatpush1.msra.mxu0 0.0
        %2122 = vmatprep.subr.mxu0 0.0
        %2123 = vmatpush1.msra.mxu0 0.0
        %2124 = vmatprep.subr.mxu0 0.0
        %2125 = vmatpush1.msra.mxu0 0.0
        %2126 = vmatprep.subr.mxu0 0.0
        %2127 = vmatpush1.msra.mxu0 0.0
        %2128 = vmatprep.subr.mxu0 0.0
        %2129 = vmatpush1.msra.mxu0 0.0
        %2130 = vmatprep.subr.mxu0 0.0
        %2131 = vmatpush1.msra.mxu0 0.0
        %2132 = vmatprep.subr.mxu0 0.0
        %2133 = vmatpush1.msra.mxu0 0.0
        %2134 = vmatprep.subr.mxu0 0.0
        %2135 = vmatpush1.msra.mxu0 0.0
        %2136 = vmatprep.subr.mxu0 0.0
        %2137 = vmatpush1.msra.mxu0 0.0
        %2138 = vmatprep.subr.mxu0 0.0
        %2139 = vmatpush1.msra.mxu0 0.0
        %2140 = vmatprep.subr.mxu0 0.0
        %2141 = vmatpush1.msra.mxu0 0.0
        %2142 = vmatprep.subr.mxu0 0.0
        %2143 = vmatpush1.msra.mxu0 0.0
        %2144 = vmatprep.subr.mxu0 0.0
        %2145 = vmatpush1.msra.mxu0 0.0
        %2146 = vmatprep.subr.mxu0 0.0
        %2147 = vmatpush1.msra.mxu0 0.0
        %2148 = vmatprep.mubr.f32.mxu0 0.0
        %2149 = vmatmul.mubr.f32.gmra.mrb[0].mxu0 %v2012
        %v2150 = vpop.f32.mrb[0].mxu0
        %v2151 = vadd.f32 0.0, %v2150
        %v2152 = vpop.f32.mrb[0].mxu0
        %v2153 = vadd.f32 0.0, %v2152
        %2154 = vdwg.mxu0
        %2155 = vmatprep.subr.mxu0 %v2023
        %2156 = vmatpush1.msra.mxu0 %v2022
        %2157 = vmatprep.subr.mxu0 %v2027
        %2158 = vmatpush1.msra.mxu0 %v2026
        %2159 = vmatprep.subr.mxu0 %v2031
        %2160 = vmatpush1.msra.mxu0 %v2030
        %2161 = vmatprep.subr.mxu0 %v2035
        %2162 = vmatpush1.msra.mxu0 %v2034
        %2163 = vmatprep.subr.mxu0 %v2039
        %2164 = vmatpush1.msra.mxu0 %v2038
        %2165 = vmatprep.subr.mxu0 %v2043
        %2166 = vmatpush1.msra.mxu0 %v2042
        %2167 = vmatprep.subr.mxu0 %v2047
        %2168 = vmatpush1.msra.mxu0 %v2046
        %2169 = vmatprep.subr.mxu0 %v2051
        %2170 = vmatpush1.msra.mxu0 %v2050
        %2171 = vmatprep.subr.mxu0 %v2055
        %2172 = vmatpush1.msra.mxu0 %v2054
        %2173 = vmatprep.subr.mxu0 %v2059
        %2174 = vmatpush1.msra.mxu0 %v2058
        %2175 = vmatprep.subr.mxu0 %v2063
        %2176 = vmatpush1.msra.mxu0 %v2062
        %2177 = vmatprep.subr.mxu0 %v2067
        %2178 = vmatpush1.msra.mxu0 %v2066
        %2179 = vmatprep.subr.mxu0 %v2071
        %2180 = vmatpush1.msra.mxu0 %v2070
        %2181 = vmatprep.subr.mxu0 %v2075
        %2182 = vmatpush1.msra.mxu0 %v2074
        %2183 = vmatprep.subr.mxu0 %v2079
        %2184 = vmatpush1.msra.mxu0 %v2078
        %2185 = vmatprep.subr.mxu0 %v2083
        %2186 = vmatpush1.msra.mxu0 %v2082
        %2187 = vmatprep.subr.mxu0 0.0
        %2188 = vmatpush1.msra.mxu0 0.0
        %2189 = vmatprep.subr.mxu0 0.0
        %2190 = vmatpush1.msra.mxu0 0.0
        %2191 = vmatprep.subr.mxu0 0.0
        %2192 = vmatpush1.msra.mxu0 0.0
        %2193 = vmatprep.subr.mxu0 0.0
        %2194 = vmatpush1.msra.mxu0 0.0
        %2195 = vmatprep.subr.mxu0 0.0
        %2196 = vmatpush1.msra.mxu0 0.0
        %2197 = vmatprep.subr.mxu0 0.0
        %2198 = vmatpush1.msra.mxu0 0.0
        %2199 = vmatprep.subr.mxu0 0.0
        %2200 = vmatpush1.msra.mxu0 0.0
        %2201 = vmatprep.subr.mxu0 0.0
        %2202 = vmatpush1.msra.mxu0 0.0
        %2203 = vmatprep.subr.mxu0 0.0
        %2204 = vmatpush1.msra.mxu0 0.0
        %2205 = vmatprep.subr.mxu0 0.0
        %2206 = vmatpush1.msra.mxu0 0.0
        %2207 = vmatprep.subr.mxu0 0.0
        %2208 = vmatpush1.msra.mxu0 0.0
        %2209 = vmatprep.subr.mxu0 0.0
        %2210 = vmatpush1.msra.mxu0 0.0
        %2211 = vmatprep.subr.mxu0 0.0
        %2212 = vmatpush1.msra.mxu0 0.0
        %2213 = vmatprep.subr.mxu0 0.0
        %2214 = vmatpush1.msra.mxu0 0.0
        %2215 = vmatprep.subr.mxu0 0.0
        %2216 = vmatpush1.msra.mxu0 0.0
        %2217 = vmatprep.subr.mxu0 0.0
        %2218 = vmatpush1.msra.mxu0 0.0
        %2219 = vmatprep.mubr.f32.mxu0 0.0
        %2220 = vmatmul.mubr.f32.gmra.mrb[0].mxu0 %v2012
        %v2221 = vpop.f32.mrb[0].mxu0
        %v2222 = vadd.f32 0.0, %v2221
        %v2223 = vpop.f32.mrb[0].mxu0
        %v2224 = vadd.f32 0.0, %v2223
        %2225 = vdwg.mxu0
        %v2226 = vadd.f32 %v2016, %v2151
        %v2227 = vadd.f32 %v2017, %v2153
        %v2228 = vadd.f32 %v2018, %v2222
        %v2229 = vadd.f32 %v2019, %v2224
        %v2230 = vxor.u32 %v2226, 2147483648
        %v2231 = vmul.f32 %v2230, 1.442695
        %v2232 = vpow.pop %v2231
        %v2233 = vadd.f32 %v2232, 1.0
        %v2234 = vrcp.pop %v2233
        %v2235 = vmul.f32 1.0, %v2234
        %v2236 = vxor.u32 %v2227, 2147483648
        %v2237 = vmul.f32 %v2236, 1.442695
        %v2238 = vpow.pop %v2237
        %v2239 = vadd.f32 %v2238, 1.0
        %v2240 = vrcp.pop %v2239
        %v2241 = vmul.f32 1.0, %v2240
        %v2242 = vtanh.pop %v2228
        %v2243 = vxor.u32 %v2229, 2147483648
        %v2244 = vmul.f32 %v2243, 1.442695
        %v2245 = vpow.pop %v2244
        %v2246 = vadd.f32 %v2245, 1.0
        %v2247 = vrcp.pop %v2246
        %v2248 = vmul.f32 1.0, %v2247
        %v2249 = vmul.f32 %v2241, %v2010
        %v2250 = vmul.f32 %v2235, %v2242
        %v2251 = vadd.f32 %v2249, %v2250
        %v2252 = vtanh.pop %v2251
        %v2253 = vmul.f32 %v2248, %v2252
        %s2254 = scalar_lea.vmem [#allocation2], 40
        %2255 = vst [vmem:[%s2254] sm:$0xff] %v2253
        %s2256 = scalar_lea.vmem [#allocation4], 192
        %v2257 = vld [vmem:[%s2256] sm:$0xff]
        %v2258 = vld [vmem:[%s2256 + $0x8] sm:$0xff]
        %v2259 = vld [vmem:[%s2256 + $0x10] sm:$0xff]
        %v2260 = vld [vmem:[%s2256 + $0x18] sm:$0xff]
        %v2261 = vld [vmem:[#allocation10] sm:$0xff]
        %v2262 = vld [vmem:[#allocation10 + $0x8] sm:$0xff]
        %v2263 = vld [vmem:[#allocation10 + $0x10] sm:$0xff]
        %v2264 = vld [vmem:[#allocation10 + $0x18] sm:$0xff]
        %v2265 = vld [vmem:[#allocation10 + $0x20] sm:$0xff]
        %v2266 = vld [vmem:[#allocation10 + $0x28] sm:$0xff]
        %v2267 = vld [vmem:[#allocation10 + $0x30] sm:$0xff]
        %v2268 = vld [vmem:[#allocation10 + $0x38] sm:$0xff]
        %v2269 = vld [vmem:[#allocation10 + $0x40] sm:$0xff]
        %v2270 = vld [vmem:[#allocation10 + $0x48] sm:$0xff]
        %v2271 = vld [vmem:[#allocation10 + $0x50] sm:$0xff]
        %v2272 = vld [vmem:[#allocation10 + $0x58] sm:$0xff]
        %v2273 = vld [vmem:[#allocation10 + $0x60] sm:$0xff]
        %v2274 = vld [vmem:[#allocation10 + $0x68] sm:$0xff]
        %v2275 = vld [vmem:[#allocation10 + $0x70] sm:$0xff]
        %v2276 = vld [vmem:[#allocation10 + $0x78] sm:$0xff]
        %v2277 = vld [vmem:[#allocation10 + $0x80] sm:$0xff]
        %v2278 = vld [vmem:[#allocation10 + $0x88] sm:$0xff]
        %v2279 = vld [vmem:[#allocation10 + $0x90] sm:$0xff]
        %v2280 = vld [vmem:[#allocation10 + $0x98] sm:$0xff]
        %v2281 = vld [vmem:[#allocation10 + $0xa0] sm:$0xff]
        %v2282 = vld [vmem:[#allocation10 + $0xa8] sm:$0xff]
        %v2283 = vld [vmem:[#allocation10 + $0xb0] sm:$0xff]
        %v2284 = vld [vmem:[#allocation10 + $0xb8] sm:$0xff]
        %v2285 = vld [vmem:[#allocation10 + $0xc0] sm:$0xff]
        %v2286 = vld [vmem:[#allocation10 + $0xc8] sm:$0xff]
        %v2287 = vld [vmem:[#allocation10 + $0xd0] sm:$0xff]
        %v2288 = vld [vmem:[#allocation10 + $0xd8] sm:$0xff]
        %v2289 = vld [vmem:[#allocation10 + $0xe0] sm:$0xff]
        %v2290 = vld [vmem:[#allocation10 + $0xe8] sm:$0xff]
        %v2291 = vld [vmem:[#allocation10 + $0xf0] sm:$0xff]
        %v2292 = vld [vmem:[#allocation10 + $0xf8] sm:$0xff]
        %v2293 = vld [vmem:[#allocation10 + $0x100] sm:$0xff]
        %v2294 = vld [vmem:[#allocation10 + $0x108] sm:$0xff]
        %v2295 = vld [vmem:[#allocation10 + $0x110] sm:$0xff]
        %v2296 = vld [vmem:[#allocation10 + $0x118] sm:$0xff]
        %v2297 = vld [vmem:[#allocation10 + $0x120] sm:$0xff]
        %v2298 = vld [vmem:[#allocation10 + $0x128] sm:$0xff]
        %v2299 = vld [vmem:[#allocation10 + $0x130] sm:$0xff]
        %v2300 = vld [vmem:[#allocation10 + $0x138] sm:$0xff]
        %v2301 = vld [vmem:[#allocation10 + $0x140] sm:$0xff]
        %v2302 = vld [vmem:[#allocation10 + $0x148] sm:$0xff]
        %v2303 = vld [vmem:[#allocation10 + $0x150] sm:$0xff]
        %v2304 = vld [vmem:[#allocation10 + $0x158] sm:$0xff]
        %v2305 = vld [vmem:[#allocation10 + $0x160] sm:$0xff]
        %v2306 = vld [vmem:[#allocation10 + $0x168] sm:$0xff]
        %v2307 = vld [vmem:[#allocation10 + $0x170] sm:$0xff]
        %v2308 = vld [vmem:[#allocation10 + $0x178] sm:$0xff]
        %v2309 = vld [vmem:[#allocation10 + $0x180] sm:$0xff]
        %v2310 = vld [vmem:[#allocation10 + $0x188] sm:$0xff]
        %v2311 = vld [vmem:[#allocation10 + $0x190] sm:$0xff]
        %v2312 = vld [vmem:[#allocation10 + $0x198] sm:$0xff]
        %v2313 = vld [vmem:[#allocation10 + $0x1a0] sm:$0xff]
        %v2314 = vld [vmem:[#allocation10 + $0x1a8] sm:$0xff]
        %v2315 = vld [vmem:[#allocation10 + $0x1b0] sm:$0xff]
        %v2316 = vld [vmem:[#allocation10 + $0x1b8] sm:$0xff]
        %v2317 = vld [vmem:[#allocation10 + $0x1c0] sm:$0xff]
        %v2318 = vld [vmem:[#allocation10 + $0x1c8] sm:$0xff]
        %v2319 = vld [vmem:[#allocation10 + $0x1d0] sm:$0xff]
        %v2320 = vld [vmem:[#allocation10 + $0x1d8] sm:$0xff]
        %v2321 = vld [vmem:[#allocation10 + $0x1e0] sm:$0xff]
        %v2322 = vld [vmem:[#allocation10 + $0x1e8] sm:$0xff]
        %v2323 = vld [vmem:[#allocation10 + $0x1f0] sm:$0xff]
        %v2324 = vld [vmem:[#allocation10 + $0x1f8] sm:$0xff]
        %2325 = vmatprep.subr.mxu0 %v2262
        %2326 = vmatpush1.msra.mxu0 %v2261
        %2327 = vmatprep.subr.mxu0 %v2266
        %2328 = vmatpush1.msra.mxu0 %v2265
        %2329 = vmatprep.subr.mxu0 %v2270
        %2330 = vmatpush1.msra.mxu0 %v2269
        %2331 = vmatprep.subr.mxu0 %v2274
        %2332 = vmatpush1.msra.mxu0 %v2273
        %2333 = vmatprep.subr.mxu0 %v2278
        %2334 = vmatpush1.msra.mxu0 %v2277
        %2335 = vmatprep.subr.mxu0 %v2282
        %2336 = vmatpush1.msra.mxu0 %v2281
        %2337 = vmatprep.subr.mxu0 %v2286
        %2338 = vmatpush1.msra.mxu0 %v2285
        %2339 = vmatprep.subr.mxu0 %v2290
        %2340 = vmatpush1.msra.mxu0 %v2289
        %2341 = vmatprep.subr.mxu0 %v2294
        %2342 = vmatpush1.msra.mxu0 %v2293
        %2343 = vmatprep.subr.mxu0 %v2298
        %2344 = vmatpush1.msra.mxu0 %v2297
        %2345 = vmatprep.subr.mxu0 %v2302
        %2346 = vmatpush1.msra.mxu0 %v2301
        %2347 = vmatprep.subr.mxu0 %v2306
        %2348 = vmatpush1.msra.mxu0 %v2305
        %2349 = vmatprep.subr.mxu0 %v2310
        %2350 = vmatpush1.msra.mxu0 %v2309
        %2351 = vmatprep.subr.mxu0 %v2314
        %2352 = vmatpush1.msra.mxu0 %v2313
        %2353 = vmatprep.subr.mxu0 %v2318
        %2354 = vmatpush1.msra.mxu0 %v2317
        %2355 = vmatprep.subr.mxu0 %v2322
        %2356 = vmatpush1.msra.mxu0 %v2321
        %2357 = vmatprep.subr.mxu0 0.0
        %2358 = vmatpush1.msra.mxu0 0.0
        %2359 = vmatprep.subr.mxu0 0.0
        %2360 = vmatpush1.msra.mxu0 0.0
        %2361 = vmatprep.subr.mxu0 0.0
        %2362 = vmatpush1.msra.mxu0 0.0
        %2363 = vmatprep.subr.mxu0 0.0
        %2364 = vmatpush1.msra.mxu0 0.0
        %2365 = vmatprep.subr.mxu0 0.0
        %2366 = vmatpush1.msra.mxu0 0.0
        %2367 = vmatprep.subr.mxu0 0.0
        %2368 = vmatpush1.msra.mxu0 0.0
        %2369 = vmatprep.subr.mxu0 0.0
        %2370 = vmatpush1.msra.mxu0 0.0
        %2371 = vmatprep.subr.mxu0 0.0
        %2372 = vmatpush1.msra.mxu0 0.0
        %2373 = vmatprep.subr.mxu0 0.0
        %2374 = vmatpush1.msra.mxu0 0.0
        %2375 = vmatprep.subr.mxu0 0.0
        %2376 = vmatpush1.msra.mxu0 0.0
        %2377 = vmatprep.subr.mxu0 0.0
        %2378 = vmatpush1.msra.mxu0 0.0
        %2379 = vmatprep.subr.mxu0 0.0
        %2380 = vmatpush1.msra.mxu0 0.0
        %2381 = vmatprep.subr.mxu0 0.0
        %2382 = vmatpush1.msra.mxu0 0.0
        %2383 = vmatprep.subr.mxu0 0.0
        %2384 = vmatpush1.msra.mxu0 0.0
        %2385 = vmatprep.subr.mxu0 0.0
        %2386 = vmatpush1.msra.mxu0 0.0
        %2387 = vmatprep.subr.mxu0 0.0
        %2388 = vmatpush1.msra.mxu0 0.0
        %2389 = vmatprep.mubr.f32.mxu0 0.0
        %2390 = vmatmul.mubr.f32.gmra.mrb[0].mxu0 %v2253
        %v2391 = vpop.f32.mrb[0].mxu0
        %v2392 = vadd.f32 0.0, %v2391
        %v2393 = vpop.f32.mrb[0].mxu0
        %v2394 = vadd.f32 0.0, %v2393
        %2395 = vdwg.mxu0
        %2396 = vmatprep.subr.mxu0 %v2264
        %2397 = vmatpush1.msra.mxu0 %v2263
        %2398 = vmatprep.subr.mxu0 %v2268
        %2399 = vmatpush1.msra.mxu0 %v2267
        %2400 = vmatprep.subr.mxu0 %v2272
        %2401 = vmatpush1.msra.mxu0 %v2271
        %2402 = vmatprep.subr.mxu0 %v2276
        %2403 = vmatpush1.msra.mxu0 %v2275
        %2404 = vmatprep.subr.mxu0 %v2280
        %2405 = vmatpush1.msra.mxu0 %v2279
        %2406 = vmatprep.subr.mxu0 %v2284
        %2407 = vmatpush1.msra.mxu0 %v2283
        %2408 = vmatprep.subr.mxu0 %v2288
        %2409 = vmatpush1.msra.mxu0 %v2287
        %2410 = vmatprep.subr.mxu0 %v2292
        %2411 = vmatpush1.msra.mxu0 %v2291
        %2412 = vmatprep.subr.mxu0 %v2296
        %2413 = vmatpush1.msra.mxu0 %v2295
        %2414 = vmatprep.subr.mxu0 %v2300
        %2415 = vmatpush1.msra.mxu0 %v2299
        %2416 = vmatprep.subr.mxu0 %v2304
        %2417 = vmatpush1.msra.mxu0 %v2303
        %2418 = vmatprep.subr.mxu0 %v2308
        %2419 = vmatpush1.msra.mxu0 %v2307
        %2420 = vmatprep.subr.mxu0 %v2312
        %2421 = vmatpush1.msra.mxu0 %v2311
        %2422 = vmatprep.subr.mxu0 %v2316
        %2423 = vmatpush1.msra.mxu0 %v2315
        %2424 = vmatprep.subr.mxu0 %v2320
        %2425 = vmatpush1.msra.mxu0 %v2319
        %2426 = vmatprep.subr.mxu0 %v2324
        %2427 = vmatpush1.msra.mxu0 %v2323
        %2428 = vmatprep.subr.mxu0 0.0
        %2429 = vmatpush1.msra.mxu0 0.0
        %2430 = vmatprep.subr.mxu0 0.0
        %2431 = vmatpush1.msra.mxu0 0.0
        %2432 = vmatprep.subr.mxu0 0.0
        %2433 = vmatpush1.msra.mxu0 0.0
        %2434 = vmatprep.subr.mxu0 0.0
        %2435 = vmatpush1.msra.mxu0 0.0
        %2436 = vmatprep.subr.mxu0 0.0
        %2437 = vmatpush1.msra.mxu0 0.0
        %2438 = vmatprep.subr.mxu0 0.0
        %2439 = vmatpush1.msra.mxu0 0.0
        %2440 = vmatprep.subr.mxu0 0.0
        %2441 = vmatpush1.msra.mxu0 0.0
        %2442 = vmatprep.subr.mxu0 0.0
        %2443 = vmatpush1.msra.mxu0 0.0
        %2444 = vmatprep.subr.mxu0 0.0
        %2445 = vmatpush1.msra.mxu0 0.0
        %2446 = vmatprep.subr.mxu0 0.0
        %2447 = vmatpush1.msra.mxu0 0.0
        %2448 = vmatprep.subr.mxu0 0.0
        %2449 = vmatpush1.msra.mxu0 0.0
        %2450 = vmatprep.subr.mxu0 0.0
        %2451 = vmatpush1.msra.mxu0 0.0
        %2452 = vmatprep.subr.mxu0 0.0
        %2453 = vmatpush1.msra.mxu0 0.0
        %2454 = vmatprep.subr.mxu0 0.0
        %2455 = vmatpush1.msra.mxu0 0.0
        %2456 = vmatprep.subr.mxu0 0.0
        %2457 = vmatpush1.msra.mxu0 0.0
        %2458 = vmatprep.subr.mxu0 0.0
        %2459 = vmatpush1.msra.mxu0 0.0
        %2460 = vmatprep.mubr.f32.mxu0 0.0
        %2461 = vmatmul.mubr.f32.gmra.mrb[0].mxu0 %v2253
        %v2462 = vpop.f32.mrb[0].mxu0
        %v2463 = vadd.f32 0.0, %v2462
        %v2464 = vpop.f32.mrb[0].mxu0
        %v2465 = vadd.f32 0.0, %v2464
        %2466 = vdwg.mxu0
        %v2467 = vadd.f32 %v2257, %v2392
        %v2468 = vadd.f32 %v2258, %v2394
        %v2469 = vadd.f32 %v2259, %v2463
        %v2470 = vadd.f32 %v2260, %v2465
        %v2471 = vxor.u32 %v2467, 2147483648
        %v2472 = vmul.f32 %v2471, 1.442695
        %v2473 = vpow.pop %v2472
        %v2474 = vadd.f32 %v2473, 1.0
        %v2475 = vrcp.pop %v2474
        %v2476 = vmul.f32 1.0, %v2475
        %v2477 = vxor.u32 %v2468, 2147483648
        %v2478 = vmul.f32 %v2477, 1.442695
        %v2479 = vpow.pop %v2478
        %v2480 = vadd.f32 %v2479, 1.0
        %v2481 = vrcp.pop %v2480
        %v2482 = vmul.f32 1.0, %v2481
        %v2483 = vtanh.pop %v2469
        %v2484 = vxor.u32 %v2470, 2147483648
        %v2485 = vmul.f32 %v2484, 1.442695
        %v2486 = vpow.pop %v2485
        %v2487 = vadd.f32 %v2486, 1.0
        %v2488 = vrcp.pop %v2487
        %v2489 = vmul.f32 1.0, %v2488
        %v2490 = vmul.f32 %v2482, %v2251
        %v2491 = vmul.f32 %v2476, %v2483
        %v2492 = vadd.f32 %v2490, %v2491
        %v2493 = vtanh.pop %v2492
        %v2494 = vmul.f32 %v2489, %v2493
        %s2495 = scalar_lea.vmem [#allocation2], 48
        %2496 = vst [vmem:[%s2495] sm:$0xff] %v2494
        %s2497 = scalar_lea.vmem [#allocation4], 224
        %v2498 = vld [vmem:[%s2497] sm:$0xff]
        %v2499 = vld [vmem:[%s2497 + $0x8] sm:$0xff]
        %v2500 = vld [vmem:[%s2497 + $0x10] sm:$0xff]
        %v2501 = vld [vmem:[%s2497 + $0x18] sm:$0xff]
        %v2502 = vld [vmem:[#allocation10] sm:$0xff]
        %v2503 = vld [vmem:[#allocation10 + $0x8] sm:$0xff]
        %v2504 = vld [vmem:[#allocation10 + $0x10] sm:$0xff]
        %v2505 = vld [vmem:[#allocation10 + $0x18] sm:$0xff]
        %v2506 = vld [vmem:[#allocation10 + $0x20] sm:$0xff]
        %v2507 = vld [vmem:[#allocation10 + $0x28] sm:$0xff]
        %v2508 = vld [vmem:[#allocation10 + $0x30] sm:$0xff]
        %v2509 = vld [vmem:[#allocation10 + $0x38] sm:$0xff]
        %v2510 = vld [vmem:[#allocation10 + $0x40] sm:$0xff]
        %v2511 = vld [vmem:[#allocation10 + $0x48] sm:$0xff]
        %v2512 = vld [vmem:[#allocation10 + $0x50] sm:$0xff]
        %v2513 = vld [vmem:[#allocation10 + $0x58] sm:$0xff]
        %v2514 = vld [vmem:[#allocation10 + $0x60] sm:$0xff]
        %v2515 = vld [vmem:[#allocation10 + $0x68] sm:$0xff]
        %v2516 = vld [vmem:[#allocation10 + $0x70] sm:$0xff]
        %v2517 = vld [vmem:[#allocation10 + $0x78] sm:$0xff]
        %v2518 = vld [vmem:[#allocation10 + $0x80] sm:$0xff]
        %v2519 = vld [vmem:[#allocation10 + $0x88] sm:$0xff]
        %v2520 = vld [vmem:[#allocation10 + $0x90] sm:$0xff]
        %v2521 = vld [vmem:[#allocation10 + $0x98] sm:$0xff]
        %v2522 = vld [vmem:[#allocation10 + $0xa0] sm:$0xff]
        %v2523 = vld [vmem:[#allocation10 + $0xa8] sm:$0xff]
        %v2524 = vld [vmem:[#allocation10 + $0xb0] sm:$0xff]
        %v2525 = vld [vmem:[#allocation10 + $0xb8] sm:$0xff]
        %v2526 = vld [vmem:[#allocation10 + $0xc0] sm:$0xff]
        %v2527 = vld [vmem:[#allocation10 + $0xc8] sm:$0xff]
        %v2528 = vld [vmem:[#allocation10 + $0xd0] sm:$0xff]
        %v2529 = vld [vmem:[#allocation10 + $0xd8] sm:$0xff]
        %v2530 = vld [vmem:[#allocation10 + $0xe0] sm:$0xff]
        %v2531 = vld [vmem:[#allocation10 + $0xe8] sm:$0xff]
        %v2532 = vld [vmem:[#allocation10 + $0xf0] sm:$0xff]
        %v2533 = vld [vmem:[#allocation10 + $0xf8] sm:$0xff]
        %v2534 = vld [vmem:[#allocation10 + $0x100] sm:$0xff]
        %v2535 = vld [vmem:[#allocation10 + $0x108] sm:$0xff]
        %v2536 = vld [vmem:[#allocation10 + $0x110] sm:$0xff]
        %v2537 = vld [vmem:[#allocation10 + $0x118] sm:$0xff]
        %v2538 = vld [vmem:[#allocation10 + $0x120] sm:$0xff]
        %v2539 = vld [vmem:[#allocation10 + $0x128] sm:$0xff]
        %v2540 = vld [vmem:[#allocation10 + $0x130] sm:$0xff]
        %v2541 = vld [vmem:[#allocation10 + $0x138] sm:$0xff]
        %v2542 = vld [vmem:[#allocation10 + $0x140] sm:$0xff]
        %v2543 = vld [vmem:[#allocation10 + $0x148] sm:$0xff]
        %v2544 = vld [vmem:[#allocation10 + $0x150] sm:$0xff]
        %v2545 = vld [vmem:[#allocation10 + $0x158] sm:$0xff]
        %v2546 = vld [vmem:[#allocation10 + $0x160] sm:$0xff]
        %v2547 = vld [vmem:[#allocation10 + $0x168] sm:$0xff]
        %v2548 = vld [vmem:[#allocation10 + $0x170] sm:$0xff]
        %v2549 = vld [vmem:[#allocation10 + $0x178] sm:$0xff]
        %v2550 = vld [vmem:[#allocation10 + $0x180] sm:$0xff]
        %v2551 = vld [vmem:[#allocation10 + $0x188] sm:$0xff]
        %v2552 = vld [vmem:[#allocation10 + $0x190] sm:$0xff]
        %v2553 = vld [vmem:[#allocation10 + $0x198] sm:$0xff]
        %v2554 = vld [vmem:[#allocation10 + $0x1a0] sm:$0xff]
        %v2555 = vld [vmem:[#allocation10 + $0x1a8] sm:$0xff]
        %v2556 = vld [vmem:[#allocation10 + $0x1b0] sm:$0xff]
        %v2557 = vld [vmem:[#allocation10 + $0x1b8] sm:$0xff]
        %v2558 = vld [vmem:[#allocation10 + $0x1c0] sm:$0xff]
        %v2559 = vld [vmem:[#allocation10 + $0x1c8] sm:$0xff]
        %v2560 = vld [vmem:[#allocation10 + $0x1d0] sm:$0xff]
        %v2561 = vld [vmem:[#allocation10 + $0x1d8] sm:$0xff]
        %v2562 = vld [vmem:[#allocation10 + $0x1e0] sm:$0xff]
        %v2563 = vld [vmem:[#allocation10 + $0x1e8] sm:$0xff]
        %v2564 = vld [vmem:[#allocation10 + $0x1f0] sm:$0xff]
        %v2565 = vld [vmem:[#allocation10 + $0x1f8] sm:$0xff]
        %2566 = vmatprep.subr.mxu0 %v2503
        %2567 = vmatpush1.msra.mxu0 %v2502
        %2568 = vmatprep.subr.mxu0 %v2507
        %2569 = vmatpush1.msra.mxu0 %v2506
        %2570 = vmatprep.subr.mxu0 %v2511
        %2571 = vmatpush1.msra.mxu0 %v2510
        %2572 = vmatprep.subr.mxu0 %v2515
        %2573 = vmatpush1.msra.mxu0 %v2514
        %2574 = vmatprep.subr.mxu0 %v2519
        %2575 = vmatpush1.msra.mxu0 %v2518
        %2576 = vmatprep.subr.mxu0 %v2523
        %2577 = vmatpush1.msra.mxu0 %v2522
        %2578 = vmatprep.subr.mxu0 %v2527
        %2579 = vmatpush1.msra.mxu0 %v2526
        %2580 = vmatprep.subr.mxu0 %v2531
        %2581 = vmatpush1.msra.mxu0 %v2530
        %2582 = vmatprep.subr.mxu0 %v2535
        %2583 = vmatpush1.msra.mxu0 %v2534
        %2584 = vmatprep.subr.mxu0 %v2539
        %2585 = vmatpush1.msra.mxu0 %v2538
        %2586 = vmatprep.subr.mxu0 %v2543
        %2587 = vmatpush1.msra.mxu0 %v2542
        %2588 = vmatprep.subr.mxu0 %v2547
        %2589 = vmatpush1.msra.mxu0 %v2546
        %2590 = vmatprep.subr.mxu0 %v2551
        %2591 = vmatpush1.msra.mxu0 %v2550
        %2592 = vmatprep.subr.mxu0 %v2555
        %2593 = vmatpush1.msra.mxu0 %v2554
        %2594 = vmatprep.subr.mxu0 %v2559
        %2595 = vmatpush1.msra.mxu0 %v2558
        %2596 = vmatprep.subr.mxu0 %v2563
        %2597 = vmatpush1.msra.mxu0 %v2562
        %2598 = vmatprep.subr.mxu0 0.0
        %2599 = vmatpush1.msra.mxu0 0.0
        %2600 = vmatprep.subr.mxu0 0.0
        %2601 = vmatpush1.msra.mxu0 0.0
        %2602 = vmatprep.subr.mxu0 0.0
        %2603 = vmatpush1.msra.mxu0 0.0
        %2604 = vmatprep.subr.mxu0 0.0
        %2605 = vmatpush1.msra.mxu0 0.0
        %2606 = vmatprep.subr.mxu0 0.0
        %2607 = vmatpush1.msra.mxu0 0.0
        %2608 = vmatprep.subr.mxu0 0.0
        %2609 = vmatpush1.msra.mxu0 0.0
        %2610 = vmatprep.subr.mxu0 0.0
        %2611 = vmatpush1.msra.mxu0 0.0
        %2612 = vmatprep.subr.mxu0 0.0
        %2613 = vmatpush1.msra.mxu0 0.0
        %2614 = vmatprep.subr.mxu0 0.0
        %2615 = vmatpush1.msra.mxu0 0.0
        %2616 = vmatprep.subr.mxu0 0.0
        %2617 = vmatpush1.msra.mxu0 0.0
        %2618 = vmatprep.subr.mxu0 0.0
        %2619 = vmatpush1.msra.mxu0 0.0
        %2620 = vmatprep.subr.mxu0 0.0
        %2621 = vmatpush1.msra.mxu0 0.0
        %2622 = vmatprep.subr.mxu0 0.0
        %2623 = vmatpush1.msra.mxu0 0.0
        %2624 = vmatprep.subr.mxu0 0.0
        %2625 = vmatpush1.msra.mxu0 0.0
        %2626 = vmatprep.subr.mxu0 0.0
        %2627 = vmatpush1.msra.mxu0 0.0
        %2628 = vmatprep.subr.mxu0 0.0
        %2629 = vmatpush1.msra.mxu0 0.0
        %2630 = vmatprep.mubr.f32.mxu0 0.0
        %2631 = vmatmul.mubr.f32.gmra.mrb[0].mxu0 %v2494
        %v2632 = vpop.f32.mrb[0].mxu0
        %v2633 = vadd.f32 0.0, %v2632
        %v2634 = vpop.f32.mrb[0].mxu0
        %v2635 = vadd.f32 0.0, %v2634
        %2636 = vdwg.mxu0
        %2637 = vmatprep.subr.mxu0 %v2505
        %2638 = vmatpush1.msra.mxu0 %v2504
        %2639 = vmatprep.subr.mxu0 %v2509
        %2640 = vmatpush1.msra.mxu0 %v2508
        %2641 = vmatprep.subr.mxu0 %v2513
        %2642 = vmatpush1.msra.mxu0 %v2512
        %2643 = vmatprep.subr.mxu0 %v2517
        %2644 = vmatpush1.msra.mxu0 %v2516
        %2645 = vmatprep.subr.mxu0 %v2521
        %2646 = vmatpush1.msra.mxu0 %v2520
        %2647 = vmatprep.subr.mxu0 %v2525
        %2648 = vmatpush1.msra.mxu0 %v2524
        %2649 = vmatprep.subr.mxu0 %v2529
        %2650 = vmatpush1.msra.mxu0 %v2528
        %2651 = vmatprep.subr.mxu0 %v2533
        %2652 = vmatpush1.msra.mxu0 %v2532
        %2653 = vmatprep.subr.mxu0 %v2537
        %2654 = vmatpush1.msra.mxu0 %v2536
        %2655 = vmatprep.subr.mxu0 %v2541
        %2656 = vmatpush1.msra.mxu0 %v2540
        %2657 = vmatprep.subr.mxu0 %v2545
        %2658 = vmatpush1.msra.mxu0 %v2544
        %2659 = vmatprep.subr.mxu0 %v2549
        %2660 = vmatpush1.msra.mxu0 %v2548
        %2661 = vmatprep.subr.mxu0 %v2553
        %2662 = vmatpush1.msra.mxu0 %v2552
        %2663 = vmatprep.subr.mxu0 %v2557
        %2664 = vmatpush1.msra.mxu0 %v2556
        %2665 = vmatprep.subr.mxu0 %v2561
        %2666 = vmatpush1.msra.mxu0 %v2560
        %2667 = vmatprep.subr.mxu0 %v2565
        %2668 = vmatpush1.msra.mxu0 %v2564
        %2669 = vmatprep.subr.mxu0 0.0
        %2670 = vmatpush1.msra.mxu0 0.0
        %2671 = vmatprep.subr.mxu0 0.0
        %2672 = vmatpush1.msra.mxu0 0.0
        %2673 = vmatprep.subr.mxu0 0.0
        %2674 = vmatpush1.msra.mxu0 0.0
        %2675 = vmatprep.subr.mxu0 0.0
        %2676 = vmatpush1.msra.mxu0 0.0
        %2677 = vmatprep.subr.mxu0 0.0
        %2678 = vmatpush1.msra.mxu0 0.0
        %2679 = vmatprep.subr.mxu0 0.0
        %2680 = vmatpush1.msra.mxu0 0.0
        %2681 = vmatprep.subr.mxu0 0.0
        %2682 = vmatpush1.msra.mxu0 0.0
        %2683 = vmatprep.subr.mxu0 0.0
        %2684 = vmatpush1.msra.mxu0 0.0
        %2685 = vmatprep.subr.mxu0 0.0
        %2686 = vmatpush1.msra.mxu0 0.0
        %2687 = vmatprep.subr.mxu0 0.0
        %2688 = vmatpush1.msra.mxu0 0.0
        %2689 = vmatprep.subr.mxu0 0.0
        %2690 = vmatpush1.msra.mxu0 0.0
        %2691 = vmatprep.subr.mxu0 0.0
        %2692 = vmatpush1.msra.mxu0 0.0
        %2693 = vmatprep.subr.mxu0 0.0
        %2694 = vmatpush1.msra.mxu0 0.0
        %2695 = vmatprep.subr.mxu0 0.0
        %2696 = vmatpush1.msra.mxu0 0.0
        %2697 = vmatprep.subr.mxu0 0.0
        %2698 = vmatpush1.msra.mxu0 0.0
        %2699 = vmatprep.subr.mxu0 0.0
        %2700 = vmatpush1.msra.mxu0 0.0
        %2701 = vmatprep.mubr.f32.mxu0 0.0
        %2702 = vmatmul.mubr.f32.gmra.mrb[0].mxu0 %v2494
        %v2703 = vpop.f32.mrb[0].mxu0
        %v2704 = vadd.f32 0.0, %v2703
        %v2705 = vpop.f32.mrb[0].mxu0
        %v2706 = vadd.f32 0.0, %v2705
        %2707 = vdwg.mxu0
        %v2708 = vadd.f32 %v2498, %v2633
        %v2709 = vadd.f32 %v2499, %v2635
        %v2710 = vadd.f32 %v2500, %v2704
        %v2711 = vadd.f32 %v2501, %v2706
        %v2712 = vxor.u32 %v2708, 2147483648
        %v2713 = vmul.f32 %v2712, 1.442695
        %v2714 = vpow.pop %v2713
        %v2715 = vadd.f32 %v2714, 1.0
        %v2716 = vrcp.pop %v2715
        %v2717 = vmul.f32 1.0, %v2716
        %v2718 = vxor.u32 %v2709, 2147483648
        %v2719 = vmul.f32 %v2718, 1.442695
        %v2720 = vpow.pop %v2719
        %v2721 = vadd.f32 %v2720, 1.0
        %v2722 = vrcp.pop %v2721
        %v2723 = vmul.f32 1.0, %v2722
        %v2724 = vtanh.pop %v2710
        %v2725 = vxor.u32 %v2711, 2147483648
        %v2726 = vmul.f32 %v2725, 1.442695
        %v2727 = vpow.pop %v2726
        %v2728 = vadd.f32 %v2727, 1.0
        %v2729 = vrcp.pop %v2728
        %v2730 = vmul.f32 1.0, %v2729
        %v2731 = vmul.f32 %v2723, %v2492
        %v2732 = vmul.f32 %v2717, %v2724
        %v2733 = vadd.f32 %v2731, %v2732
        %v2734 = vtanh.pop %v2733
        %v2735 = vmul.f32 %v2730, %v2734
        %s2736 = scalar_lea.vmem [#allocation2], 56
        %2737 = vst [vmem:[%s2736] sm:$0xff] %v2735
        %v2738 = vld [vmem:[#allocation2] sm:$0xff]
        %v2739 = vld [vmem:[#allocation2 + $0x8] sm:$0xff]
        %v2740 = vld [vmem:[#allocation2 + $0x10] sm:$0xff]
        %v2741 = vld [vmem:[#allocation2 + $0x18] sm:$0xff]
        %v2742 = vld [vmem:[#allocation2 + $0x20] sm:$0xff]
        %v2743 = vld [vmem:[#allocation2 + $0x28] sm:$0xff]
        %v2744 = vld [vmem:[#allocation2 + $0x30] sm:$0xff]
        %v2745 = vld [vmem:[#allocation2 + $0x38] sm:$0xff]
        %v2746 = vld [vmem:[#allocation13] sm:$0xff]
        %v2747 = vld [vmem:[#allocation13 + $0x8] sm:$0xff]
        %v2748 = vld [vmem:[#allocation13 + $0x10] sm:$0xff]
        %v2749 = vld [vmem:[#allocation13 + $0x18] sm:$0xff]
        %v2750 = vld [vmem:[#allocation13 + $0x20] sm:$0xff]
        %v2751 = vld [vmem:[#allocation13 + $0x28] sm:$0xff]
        %v2752 = vld [vmem:[#allocation13 + $0x30] sm:$0xff]
        %v2753 = vld [vmem:[#allocation13 + $0x38] sm:$0xff]
        %v2754 = vld [vmem:[#allocation13 + $0x40] sm:$0xff]
        %v2755 = vld [vmem:[#allocation13 + $0x48] sm:$0xff]
        %v2756 = vld [vmem:[#allocation13 + $0x50] sm:$0xff]
        %v2757 = vld [vmem:[#allocation13 + $0x58] sm:$0xff]
        %v2758 = vld [vmem:[#allocation13 + $0x60] sm:$0xff]
        %v2759 = vld [vmem:[#allocation13 + $0x68] sm:$0xff]
        %v2760 = vld [vmem:[#allocation13 + $0x70] sm:$0xff]
        %v2761 = vld [vmem:[#allocation13 + $0x78] sm:$0xff]
        %v2762 = vld [vmem:[#allocation13 + $0x80] sm:$0xff]
        %v2763 = vld [vmem:[#allocation13 + $0x88] sm:$0xff]
        %v2764 = vld [vmem:[#allocation13 + $0x90] sm:$0xff]
        %v2765 = vld [vmem:[#allocation13 + $0x98] sm:$0xff]
        %v2766 = vld [vmem:[#allocation13 + $0xa0] sm:$0xff]
        %v2767 = vld [vmem:[#allocation13 + $0xa8] sm:$0xff]
        %v2768 = vld [vmem:[#allocation13 + $0xb0] sm:$0xff]
        %v2769 = vld [vmem:[#allocation13 + $0xb8] sm:$0xff]
        %v2770 = vld [vmem:[#allocation13 + $0xc0] sm:$0xff]
        %v2771 = vld [vmem:[#allocation13 + $0xc8] sm:$0xff]
        %v2772 = vld [vmem:[#allocation13 + $0xd0] sm:$0xff]
        %v2773 = vld [vmem:[#allocation13 + $0xd8] sm:$0xff]
        %v2774 = vld [vmem:[#allocation13 + $0xe0] sm:$0xff]
        %v2775 = vld [vmem:[#allocation13 + $0xe8] sm:$0xff]
        %v2776 = vld [vmem:[#allocation13 + $0xf0] sm:$0xff]
        %v2777 = vld [vmem:[#allocation13 + $0xf8] sm:$0xff]
        %v2778 = vld [vmem:[#allocation13 + $0x100] sm:$0xff]
        %v2779 = vld [vmem:[#allocation13 + $0x108] sm:$0xff]
        %v2780 = vld [vmem:[#allocation13 + $0x110] sm:$0xff]
        %v2781 = vld [vmem:[#allocation13 + $0x118] sm:$0xff]
        %v2782 = vld [vmem:[#allocation13 + $0x120] sm:$0xff]
        %v2783 = vld [vmem:[#allocation13 + $0x128] sm:$0xff]
        %v2784 = vld [vmem:[#allocation13 + $0x130] sm:$0xff]
        %v2785 = vld [vmem:[#allocation13 + $0x138] sm:$0xff]
        %v2786 = vld [vmem:[#allocation13 + $0x140] sm:$0xff]
        %v2787 = vld [vmem:[#allocation13 + $0x148] sm:$0xff]
        %v2788 = vld [vmem:[#allocation13 + $0x150] sm:$0xff]
        %v2789 = vld [vmem:[#allocation13 + $0x158] sm:$0xff]
        %v2790 = vld [vmem:[#allocation13 + $0x160] sm:$0xff]
        %v2791 = vld [vmem:[#allocation13 + $0x168] sm:$0xff]
        %v2792 = vld [vmem:[#allocation13 + $0x170] sm:$0xff]
        %v2793 = vld [vmem:[#allocation13 + $0x178] sm:$0xff]
        %v2794 = vld [vmem:[#allocation13 + $0x180] sm:$0xff]
        %v2795 = vld [vmem:[#allocation13 + $0x188] sm:$0xff]
        %v2796 = vld [vmem:[#allocation13 + $0x190] sm:$0xff]
        %v2797 = vld [vmem:[#allocation13 + $0x198] sm:$0xff]
        %v2798 = vld [vmem:[#allocation13 + $0x1a0] sm:$0xff]
        %v2799 = vld [vmem:[#allocation13 + $0x1a8] sm:$0xff]
        %v2800 = vld [vmem:[#allocation13 + $0x1b0] sm:$0xff]
        %v2801 = vld [vmem:[#allocation13 + $0x1b8] sm:$0xff]
        %v2802 = vld [vmem:[#allocation13 + $0x1c0] sm:$0xff]
        %v2803 = vld [vmem:[#allocation13 + $0x1c8] sm:$0xff]
        %v2804 = vld [vmem:[#allocation13 + $0x1d0] sm:$0xff]
        %v2805 = vld [vmem:[#allocation13 + $0x1d8] sm:$0xff]
        %v2806 = vld [vmem:[#allocation13 + $0x1e0] sm:$0xff]
        %v2807 = vld [vmem:[#allocation13 + $0x1e8] sm:$0xff]
        %v2808 = vld [vmem:[#allocation13 + $0x1f0] sm:$0xff]
        %v2809 = vld [vmem:[#allocation13 + $0x1f8] sm:$0xff]
        %v2810 = vld [vmem:[#allocation16] sm:$0xf]
        %v2812 = vlaneseq
        %v2813 = vshrl.u32 %v2812, 7
        %v2814 = vsub.s32 0, %v2813
        %v2815 = vrot.slane %v2810, %v2814
        %v2816 = vlaneseq
        %v2817 = vshrl.u32 %v2816, 7
        %v2818 = vsub.s32 1, %v2817
        %v2819 = vrot.slane %v2810, %v2818
        %v2820 = vlaneseq
        %v2821 = vshrl.u32 %v2820, 7
        %v2822 = vsub.s32 2, %v2821
        %v2823 = vrot.slane %v2810, %v2822
        %v2824 = vlaneseq
        %v2825 = vshrl.u32 %v2824, 7
        %v2826 = vsub.s32 3, %v2825
        %v2827 = vrot.slane %v2810, %v2826
        %2832 = vmatprep.subr.mxu0 %v2747
        %2833 = vmatpush1.msra.mxu0 %v2746
        %2834 = vmatprep.subr.mxu0 %v2751
        %2835 = vmatpush1.msra.mxu0 %v2750
        %2836 = vmatprep.subr.mxu0 %v2755
        %2837 = vmatpush1.msra.mxu0 %v2754
        %2838 = vmatprep.subr.mxu0 %v2759
        %2839 = vmatpush1.msra.mxu0 %v2758
        %2840 = vmatprep.subr.mxu0 %v2763
        %2841 = vmatpush1.msra.mxu0 %v2762
        %2842 = vmatprep.subr.mxu0 %v2767
        %2843 = vmatpush1.msra.mxu0 %v2766
        %2844 = vmatprep.subr.mxu0 %v2771
        %2845 = vmatpush1.msra.mxu0 %v2770
        %2846 = vmatprep.subr.mxu0 %v2775
        %2847 = vmatpush1.msra.mxu0 %v2774
        %2848 = vmatprep.subr.mxu0 %v2779
        %2849 = vmatpush1.msra.mxu0 %v2778
        %2850 = vmatprep.subr.mxu0 %v2783
        %2851 = vmatpush1.msra.mxu0 %v2782
        %2852 = vmatprep.subr.mxu0 %v2787
        %2853 = vmatpush1.msra.mxu0 %v2786
        %2854 = vmatprep.subr.mxu0 %v2791
        %2855 = vmatpush1.msra.mxu0 %v2790
        %2856 = vmatprep.subr.mxu0 %v2795
        %2857 = vmatpush1.msra.mxu0 %v2794
        %2858 = vmatprep.subr.mxu0 %v2799
        %2859 = vmatpush1.msra.mxu0 %v2798
        %2860 = vmatprep.subr.mxu0 %v2803
        %2861 = vmatpush1.msra.mxu0 %v2802
        %2862 = vmatprep.subr.mxu0 %v2807
        %2863 = vmatpush1.msra.mxu0 %v2806
        %2864 = vmatprep.subr.mxu0 0.0
        %2865 = vmatpush1.msra.mxu0 0.0
        %2866 = vmatprep.subr.mxu0 0.0
        %2867 = vmatpush1.msra.mxu0 0.0
        %2868 = vmatprep.subr.mxu0 0.0
        %2869 = vmatpush1.msra.mxu0 0.0
        %2870 = vmatprep.subr.mxu0 0.0
        %2871 = vmatpush1.msra.mxu0 0.0
        %2872 = vmatprep.subr.mxu0 0.0
        %2873 = vmatpush1.msra.mxu0 0.0
        %2874 = vmatprep.subr.mxu0 0.0
        %2875 = vmatpush1.msra.mxu0 0.0
        %2876 = vmatprep.subr.mxu0 0.0
        %2877 = vmatpush1.msra.mxu0 0.0
        %2878 = vmatprep.subr.mxu0 0.0
        %2879 = vmatpush1.msra.mxu0 0.0
        %2880 = vmatprep.subr.mxu0 0.0
        %2881 = vmatpush1.msra.mxu0 0.0
        %2882 = vmatprep.subr.mxu0 0.0
        %2883 = vmatpush1.msra.mxu0 0.0
        %2884 = vmatprep.subr.mxu0 0.0
        %2885 = vmatpush1.msra.mxu0 0.0
        %2886 = vmatprep.subr.mxu0 0.0
        %2887 = vmatpush1.msra.mxu0 0.0
        %2888 = vmatprep.subr.mxu0 0.0
        %2889 = vmatpush1.msra.mxu0 0.0
        %2890 = vmatprep.subr.mxu0 0.0
        %2891 = vmatpush1.msra.mxu0 0.0
        %2892 = vmatprep.subr.mxu0 0.0
        %2893 = vmatpush1.msra.mxu0 0.0
        %2894 = vmatprep.subr.mxu0 0.0
        %2895 = vmatpush1.msra.mxu0 0.0
        %2896 = vmatprep.mubr.f32.mxu0 0.0
        %2897 = vmatmul.mubr.f32.gmra.mrb[0].mxu0 %v2738
        %v2898 = vpop.f32.mrb[0].mxu0
        %v2899 = vadd.f32 %v2815, %v2898
        %v2900 = vpop.f32.mrb[0].mxu0
        %v2901 = vadd.f32 %v2819, %v2900
        %2902 = vmatprep.mubr.f32.mxu0 0.0
        %2903 = vmatmul.mubr.f32.gmra.mrb[0].mxu0 %v2739
        %v2904 = vpop.f32.mrb[0].mxu0
        %v2905 = vadd.f32 %v2815, %v2904
        %v2906 = vpop.f32.mrb[0].mxu0
        %v2907 = vadd.f32 %v2819, %v2906
        %2908 = vmatprep.mubr.f32.mxu0 0.0
        %2909 = vmatmul.mubr.f32.gmra.mrb[0].mxu0 %v2740
        %v2910 = vpop.f32.mrb[0].mxu0
        %v2911 = vadd.f32 %v2815, %v2910
        %v2912 = vpop.f32.mrb[0].mxu0
        %v2913 = vadd.f32 %v2819, %v2912
        %2914 = vmatprep.mubr.f32.mxu0 0.0
        %2915 = vmatmul.mubr.f32.gmra.mrb[0].mxu0 %v2741
        %v2916 = vpop.f32.mrb[0].mxu0
        %v2917 = vadd.f32 %v2815, %v2916
        %v2918 = vpop.f32.mrb[0].mxu0
        %v2919 = vadd.f32 %v2819, %v2918
        %2920 = vmatprep.mubr.f32.mxu0 0.0
        %2921 = vmatmul.mubr.f32.gmra.mrb[0].mxu0 %v2742
        %v2922 = vpop.f32.mrb[0].mxu0
        %v2923 = vadd.f32 %v2815, %v2922
        %v2924 = vpop.f32.mrb[0].mxu0
        %v2925 = vadd.f32 %v2819, %v2924
        %2926 = vmatprep.mubr.f32.mxu0 0.0
        %2927 = vmatmul.mubr.f32.gmra.mrb[0].mxu0 %v2743
        %v2928 = vpop.f32.mrb[0].mxu0
        %v2929 = vadd.f32 %v2815, %v2928
        %v2930 = vpop.f32.mrb[0].mxu0
        %v2931 = vadd.f32 %v2819, %v2930
        %2932 = vmatprep.mubr.f32.mxu0 0.0
        %2933 = vmatmul.mubr.f32.gmra.mrb[0].mxu0 %v2744
        %v2934 = vpop.f32.mrb[0].mxu0
        %v2935 = vadd.f32 %v2815, %v2934
        %v2936 = vpop.f32.mrb[0].mxu0
        %v2937 = vadd.f32 %v2819, %v2936
        %2938 = vmatprep.mubr.f32.mxu0 0.0
        %2939 = vmatmul.mubr.f32.gmra.mrb[0].mxu0 %v2745
        %v2940 = vpop.f32.mrb[0].mxu0
        %v2941 = vadd.f32 %v2815, %v2940
        %v2942 = vpop.f32.mrb[0].mxu0
        %v2943 = vadd.f32 %v2819, %v2942
        %2944 = vdwg.mxu0
        %2945 = vmatprep.subr.mxu0 %v2749
        %2946 = vmatpush1.msra.mxu0 %v2748
        %2947 = vmatprep.subr.mxu0 %v2753
        %2948 = vmatpush1.msra.mxu0 %v2752
        %2949 = vmatprep.subr.mxu0 %v2757
        %2950 = vmatpush1.msra.mxu0 %v2756
        %2951 = vmatprep.subr.mxu0 %v2761
        %2952 = vmatpush1.msra.mxu0 %v2760
        %2953 = vmatprep.subr.mxu0 %v2765
        %2954 = vmatpush1.msra.mxu0 %v2764
        %2955 = vmatprep.subr.mxu0 %v2769
        %2956 = vmatpush1.msra.mxu0 %v2768
        %2957 = vmatprep.subr.mxu0 %v2773
        %2958 = vmatpush1.msra.mxu0 %v2772
        %2959 = vmatprep.subr.mxu0 %v2777
        %2960 = vmatpush1.msra.mxu0 %v2776
        %2961 = vmatprep.subr.mxu0 %v2781
        %2962 = vmatpush1.msra.mxu0 %v2780
        %2963 = vmatprep.subr.mxu0 %v2785
        %2964 = vmatpush1.msra.mxu0 %v2784
        %2965 = vmatprep.subr.mxu0 %v2789
        %2966 = vmatpush1.msra.mxu0 %v2788
        %2967 = vmatprep.subr.mxu0 %v2793
        %2968 = vmatpush1.msra.mxu0 %v2792
        %2969 = vmatprep.subr.mxu0 %v2797
        %2970 = vmatpush1.msra.mxu0 %v2796
        %2971 = vmatprep.subr.mxu0 %v2801
        %2972 = vmatpush1.msra.mxu0 %v2800
        %2973 = vmatprep.subr.mxu0 %v2805
        %2974 = vmatpush1.msra.mxu0 %v2804
        %2975 = vmatprep.subr.mxu0 %v2809
        %2976 = vmatpush1.msra.mxu0 %v2808
        %2977 = vmatprep.subr.mxu0 0.0
        %2978 = vmatpush1.msra.mxu0 0.0
        %2979 = vmatprep.subr.mxu0 0.0
        %2980 = vmatpush1.msra.mxu0 0.0
        %2981 = vmatprep.subr.mxu0 0.0
        %2982 = vmatpush1.msra.mxu0 0.0
        %2983 = vmatprep.subr.mxu0 0.0
        %2984 = vmatpush1.msra.mxu0 0.0
        %2985 = vmatprep.subr.mxu0 0.0
        %2986 = vmatpush1.msra.mxu0 0.0
        %2987 = vmatprep.subr.mxu0 0.0
        %2988 = vmatpush1.msra.mxu0 0.0
        %2989 = vmatprep.subr.mxu0 0.0
        %2990 = vmatpush1.msra.mxu0 0.0
        %2991 = vmatprep.subr.mxu0 0.0
        %2992 = vmatpush1.msra.mxu0 0.0
        %2993 = vmatprep.subr.mxu0 0.0
        %2994 = vmatpush1.msra.mxu0 0.0
        %2995 = vmatprep.subr.mxu0 0.0
        %2996 = vmatpush1.msra.mxu0 0.0
        %2997 = vmatprep.subr.mxu0 0.0
        %2998 = vmatpush1.msra.mxu0 0.0
        %2999 = vmatprep.subr.mxu0 0.0
        %3000 = vmatpush1.msra.mxu0 0.0
        %3001 = vmatprep.subr.mxu0 0.0
        %3002 = vmatpush1.msra.mxu0 0.0
        %3003 = vmatprep.subr.mxu0 0.0
        %3004 = vmatpush1.msra.mxu0 0.0
        %3005 = vmatprep.subr.mxu0 0.0
        %3006 = vmatpush1.msra.mxu0 0.0
        %3007 = vmatprep.subr.mxu0 0.0
        %3008 = vmatpush1.msra.mxu0 0.0
        %3009 = vmatprep.mubr.f32.mxu0 0.0
        %3010 = vmatmul.mubr.f32.gmra.mrb[0].mxu0 %v2738
        %v3011 = vpop.f32.mrb[0].mxu0
        %v3012 = vadd.f32 %v2823, %v3011
        %v3013 = vpop.f32.mrb[0].mxu0
        %v3014 = vadd.f32 %v2827, %v3013
        %3015 = vmatprep.mubr.f32.mxu0 0.0
        %3016 = vmatmul.mubr.f32.gmra.mrb[0].mxu0 %v2739
        %v3017 = vpop.f32.mrb[0].mxu0
        %v3018 = vadd.f32 %v2823, %v3017
        %v3019 = vpop.f32.mrb[0].mxu0
        %v3020 = vadd.f32 %v2827, %v3019
        %3021 = vmatprep.mubr.f32.mxu0 0.0
        %3022 = vmatmul.mubr.f32.gmra.mrb[0].mxu0 %v2740
        %v3023 = vpop.f32.mrb[0].mxu0
        %v3024 = vadd.f32 %v2823, %v3023
        %v3025 = vpop.f32.mrb[0].mxu0
        %v3026 = vadd.f32 %v2827, %v3025
        %3027 = vmatprep.mubr.f32.mxu0 0.0
        %3028 = vmatmul.mubr.f32.gmra.mrb[0].mxu0 %v2741
        %v3029 = vpop.f32.mrb[0].mxu0
        %v3030 = vadd.f32 %v2823, %v3029
        %v3031 = vpop.f32.mrb[0].mxu0
        %v3032 = vadd.f32 %v2827, %v3031
        %3033 = vmatprep.mubr.f32.mxu0 0.0
        %3034 = vmatmul.mubr.f32.gmra.mrb[0].mxu0 %v2742
        %v3035 = vpop.f32.mrb[0].mxu0
        %v3036 = vadd.f32 %v2823, %v3035
        %v3037 = vpop.f32.mrb[0].mxu0
        %v3038 = vadd.f32 %v2827, %v3037
        %3039 = vmatprep.mubr.f32.mxu0 0.0
        %3040 = vmatmul.mubr.f32.gmra.mrb[0].mxu0 %v2743
        %v3041 = vpop.f32.mrb[0].mxu0
        %v3042 = vadd.f32 %v2823, %v3041
        %v3043 = vpop.f32.mrb[0].mxu0
        %v3044 = vadd.f32 %v2827, %v3043
        %3045 = vmatprep.mubr.f32.mxu0 0.0
        %3046 = vmatmul.mubr.f32.gmra.mrb[0].mxu0 %v2744
        %v3047 = vpop.f32.mrb[0].mxu0
        %v3048 = vadd.f32 %v2823, %v3047
        %v3049 = vpop.f32.mrb[0].mxu0
        %v3050 = vadd.f32 %v2827, %v3049
        %3051 = vmatprep.mubr.f32.mxu0 0.0
        %3052 = vmatmul.mubr.f32.gmra.mrb[0].mxu0 %v2745
        %v3053 = vpop.f32.mrb[0].mxu0
        %v3054 = vadd.f32 %v2823, %v3053
        %v3055 = vpop.f32.mrb[0].mxu0
        %v3056 = vadd.f32 %v2827, %v3055
        %3057 = vdwg.mxu0
        %3058 = vst [vmem:[#allocation4] sm:$0xff] %v2899
        %3059 = vst [vmem:[#allocation4 + $0x8] sm:$0xff] %v2901
        %3060 = vst [vmem:[#allocation4 + $0x10] sm:$0xff] %v3012
        %3061 = vst [vmem:[#allocation4 + $0x18] sm:$0xff] %v3014
        %3062 = vst [vmem:[#allocation4 + $0x20] sm:$0xff] %v2905
        %3063 = vst [vmem:[#allocation4 + $0x28] sm:$0xff] %v2907
        %3064 = vst [vmem:[#allocation4 + $0x30] sm:$0xff] %v3018
        %3065 = vst [vmem:[#allocation4 + $0x38] sm:$0xff] %v3020
        %3066 = vst [vmem:[#allocation4 + $0x40] sm:$0xff] %v2911
        %3067 = vst [vmem:[#allocation4 + $0x48] sm:$0xff] %v2913
        %3068 = vst [vmem:[#allocation4 + $0x50] sm:$0xff] %v3024
        %3069 = vst [vmem:[#allocation4 + $0x58] sm:$0xff] %v3026
        %3070 = vst [vmem:[#allocation4 + $0x60] sm:$0xff] %v2917
        %3071 = vst [vmem:[#allocation4 + $0x68] sm:$0xff] %v2919
        %3072 = vst [vmem:[#allocation4 + $0x70] sm:$0xff] %v3030
        %3073 = vst [vmem:[#allocation4 + $0x78] sm:$0xff] %v3032
        %3074 = vst [vmem:[#allocation4 + $0x80] sm:$0xff] %v2923
        %3075 = vst [vmem:[#allocation4 + $0x88] sm:$0xff] %v2925
        %3076 = vst [vmem:[#allocation4 + $0x90] sm:$0xff] %v3036
        %3077 = vst [vmem:[#allocation4 + $0x98] sm:$0xff] %v3038
        %3078 = vst [vmem:[#allocation4 + $0xa0] sm:$0xff] %v2929
        %3079 = vst [vmem:[#allocation4 + $0xa8] sm:$0xff] %v2931
        %3080 = vst [vmem:[#allocation4 + $0xb0] sm:$0xff] %v3042
        %3081 = vst [vmem:[#allocation4 + $0xb8] sm:$0xff] %v3044
        %3082 = vst [vmem:[#allocation4 + $0xc0] sm:$0xff] %v2935
        %3083 = vst [vmem:[#allocation4 + $0xc8] sm:$0xff] %v2937
        %3084 = vst [vmem:[#allocation4 + $0xd0] sm:$0xff] %v3048
        %3085 = vst [vmem:[#allocation4 + $0xd8] sm:$0xff] %v3050
        %3086 = vst [vmem:[#allocation4 + $0xe0] sm:$0xff] %v2941
        %3087 = vst [vmem:[#allocation4 + $0xe8] sm:$0xff] %v2943
        %3088 = vst [vmem:[#allocation4 + $0xf0] sm:$0xff] %v3054
        %3089 = vst [vmem:[#allocation4 + $0xf8] sm:$0xff] %v3056
        %v3090 = vld [vmem:[#allocation4] sm:$0xff]
        %v3091 = vld [vmem:[#allocation4 + $0x8] sm:$0xff]
        %v3092 = vld [vmem:[#allocation4 + $0x10] sm:$0xff]
        %v3093 = vld [vmem:[#allocation4 + $0x18] sm:$0xff]
        %v3094 = vld [vmem:[#allocation14] sm:$0xff]
        %v3095 = vld [vmem:[#allocation14 + $0x8] sm:$0xff]
        %v3096 = vld [vmem:[#allocation14 + $0x10] sm:$0xff]
        %v3097 = vld [vmem:[#allocation14 + $0x18] sm:$0xff]
        %v3098 = vld [vmem:[#allocation14 + $0x20] sm:$0xff]
        %v3099 = vld [vmem:[#allocation14 + $0x28] sm:$0xff]
        %v3100 = vld [vmem:[#allocation14 + $0x30] sm:$0xff]
        %v3101 = vld [vmem:[#allocation14 + $0x38] sm:$0xff]
        %v3102 = vld [vmem:[#allocation14 + $0x40] sm:$0xff]
        %v3103 = vld [vmem:[#allocation14 + $0x48] sm:$0xff]
        %v3104 = vld [vmem:[#allocation14 + $0x50] sm:$0xff]
        %v3105 = vld [vmem:[#allocation14 + $0x58] sm:$0xff]
        %v3106 = vld [vmem:[#allocation14 + $0x60] sm:$0xff]
        %v3107 = vld [vmem:[#allocation14 + $0x68] sm:$0xff]
        %v3108 = vld [vmem:[#allocation14 + $0x70] sm:$0xff]
        %v3109 = vld [vmem:[#allocation14 + $0x78] sm:$0xff]
        %v3110 = vld [vmem:[#allocation14 + $0x80] sm:$0xff]
        %v3111 = vld [vmem:[#allocation14 + $0x88] sm:$0xff]
        %v3112 = vld [vmem:[#allocation14 + $0x90] sm:$0xff]
        %v3113 = vld [vmem:[#allocation14 + $0x98] sm:$0xff]
        %v3114 = vld [vmem:[#allocation14 + $0xa0] sm:$0xff]
        %v3115 = vld [vmem:[#allocation14 + $0xa8] sm:$0xff]
        %v3116 = vld [vmem:[#allocation14 + $0xb0] sm:$0xff]
        %v3117 = vld [vmem:[#allocation14 + $0xb8] sm:$0xff]
        %v3118 = vld [vmem:[#allocation14 + $0xc0] sm:$0xff]
        %v3119 = vld [vmem:[#allocation14 + $0xc8] sm:$0xff]
        %v3120 = vld [vmem:[#allocation14 + $0xd0] sm:$0xff]
        %v3121 = vld [vmem:[#allocation14 + $0xd8] sm:$0xff]
        %v3122 = vld [vmem:[#allocation14 + $0xe0] sm:$0xff]
        %v3123 = vld [vmem:[#allocation14 + $0xe8] sm:$0xff]
        %v3124 = vld [vmem:[#allocation14 + $0xf0] sm:$0xff]
        %v3125 = vld [vmem:[#allocation14 + $0xf8] sm:$0xff]
        %v3126 = vld [vmem:[#allocation14 + $0x100] sm:$0xff]
        %v3127 = vld [vmem:[#allocation14 + $0x108] sm:$0xff]
        %v3128 = vld [vmem:[#allocation14 + $0x110] sm:$0xff]
        %v3129 = vld [vmem:[#allocation14 + $0x118] sm:$0xff]
        %v3130 = vld [vmem:[#allocation14 + $0x120] sm:$0xff]
        %v3131 = vld [vmem:[#allocation14 + $0x128] sm:$0xff]
        %v3132 = vld [vmem:[#allocation14 + $0x130] sm:$0xff]
        %v3133 = vld [vmem:[#allocation14 + $0x138] sm:$0xff]
        %v3134 = vld [vmem:[#allocation14 + $0x140] sm:$0xff]
        %v3135 = vld [vmem:[#allocation14 + $0x148] sm:$0xff]
        %v3136 = vld [vmem:[#allocation14 + $0x150] sm:$0xff]
        %v3137 = vld [vmem:[#allocation14 + $0x158] sm:$0xff]
        %v3138 = vld [vmem:[#allocation14 + $0x160] sm:$0xff]
        %v3139 = vld [vmem:[#allocation14 + $0x168] sm:$0xff]
        %v3140 = vld [vmem:[#allocation14 + $0x170] sm:$0xff]
        %v3141 = vld [vmem:[#allocation14 + $0x178] sm:$0xff]
        %v3142 = vld [vmem:[#allocation14 + $0x180] sm:$0xff]
        %v3143 = vld [vmem:[#allocation14 + $0x188] sm:$0xff]
        %v3144 = vld [vmem:[#allocation14 + $0x190] sm:$0xff]
        %v3145 = vld [vmem:[#allocation14 + $0x198] sm:$0xff]
        %v3146 = vld [vmem:[#allocation14 + $0x1a0] sm:$0xff]
        %v3147 = vld [vmem:[#allocation14 + $0x1a8] sm:$0xff]
        %v3148 = vld [vmem:[#allocation14 + $0x1b0] sm:$0xff]
        %v3149 = vld [vmem:[#allocation14 + $0x1b8] sm:$0xff]
        %v3150 = vld [vmem:[#allocation14 + $0x1c0] sm:$0xff]
        %v3151 = vld [vmem:[#allocation14 + $0x1c8] sm:$0xff]
        %v3152 = vld [vmem:[#allocation14 + $0x1d0] sm:$0xff]
        %v3153 = vld [vmem:[#allocation14 + $0x1d8] sm:$0xff]
        %v3154 = vld [vmem:[#allocation14 + $0x1e0] sm:$0xff]
        %v3155 = vld [vmem:[#allocation14 + $0x1e8] sm:$0xff]
        %v3156 = vld [vmem:[#allocation14 + $0x1f0] sm:$0xff]
        %v3157 = vld [vmem:[#allocation14 + $0x1f8] sm:$0xff]
        %3158 = vmatprep.subr.mxu0 %v3095
        %3159 = vmatpush1.msra.mxu0 %v3094
        %3160 = vmatprep.subr.mxu0 %v3099
        %3161 = vmatpush1.msra.mxu0 %v3098
        %3162 = vmatprep.subr.mxu0 %v3103
        %3163 = vmatpush1.msra.mxu0 %v3102
        %3164 = vmatprep.subr.mxu0 %v3107
        %3165 = vmatpush1.msra.mxu0 %v3106
        %3166 = vmatprep.subr.mxu0 %v3111
        %3167 = vmatpush1.msra.mxu0 %v3110
        %3168 = vmatprep.subr.mxu0 %v3115
        %3169 = vmatpush1.msra.mxu0 %v3114
        %3170 = vmatprep.subr.mxu0 %v3119
        %3171 = vmatpush1.msra.mxu0 %v3118
        %3172 = vmatprep.subr.mxu0 %v3123
        %3173 = vmatpush1.msra.mxu0 %v3122
        %3174 = vmatprep.subr.mxu0 %v3127
        %3175 = vmatpush1.msra.mxu0 %v3126
        %3176 = vmatprep.subr.mxu0 %v3131
        %3177 = vmatpush1.msra.mxu0 %v3130
        %3178 = vmatprep.subr.mxu0 %v3135
        %3179 = vmatpush1.msra.mxu0 %v3134
        %3180 = vmatprep.subr.mxu0 %v3139
        %3181 = vmatpush1.msra.mxu0 %v3138
        %3182 = vmatprep.subr.mxu0 %v3143
        %3183 = vmatpush1.msra.mxu0 %v3142
        %3184 = vmatprep.subr.mxu0 %v3147
        %3185 = vmatpush1.msra.mxu0 %v3146
        %3186 = vmatprep.subr.mxu0 %v3151
        %3187 = vmatpush1.msra.mxu0 %v3150
        %3188 = vmatprep.subr.mxu0 %v3155
        %3189 = vmatpush1.msra.mxu0 %v3154
        %3190 = vmatprep.subr.mxu0 0.0
        %3191 = vmatpush1.msra.mxu0 0.0
        %3192 = vmatprep.subr.mxu0 0.0
        %3193 = vmatpush1.msra.mxu0 0.0
        %3194 = vmatprep.subr.mxu0 0.0
        %3195 = vmatpush1.msra.mxu0 0.0
        %3196 = vmatprep.subr.mxu0 0.0
        %3197 = vmatpush1.msra.mxu0 0.0
        %3198 = vmatprep.subr.mxu0 0.0
        %3199 = vmatpush1.msra.mxu0 0.0
        %3200 = vmatprep.subr.mxu0 0.0
        %3201 = vmatpush1.msra.mxu0 0.0
        %3202 = vmatprep.subr.mxu0 0.0
        %3203 = vmatpush1.msra.mxu0 0.0
        %3204 = vmatprep.subr.mxu0 0.0
        %3205 = vmatpush1.msra.mxu0 0.0
        %3206 = vmatprep.subr.mxu0 0.0
        %3207 = vmatpush1.msra.mxu0 0.0
        %3208 = vmatprep.subr.mxu0 0.0
        %3209 = vmatpush1.msra.mxu0 0.0
        %3210 = vmatprep.subr.mxu0 0.0
        %3211 = vmatpush1.msra.mxu0 0.0
        %3212 = vmatprep.subr.mxu0 0.0
        %3213 = vmatpush1.msra.mxu0 0.0
        %3214 = vmatprep.subr.mxu0 0.0
        %3215 = vmatpush1.msra.mxu0 0.0
        %3216 = vmatprep.subr.mxu0 0.0
        %3217 = vmatpush1.msra.mxu0 0.0
        %3218 = vmatprep.subr.mxu0 0.0
        %3219 = vmatpush1.msra.mxu0 0.0
        %3220 = vmatprep.subr.mxu0 0.0
        %3221 = vmatpush1.msra.mxu0 0.0
        %3222 = vmatprep.mubr.f32.mxu0 0.0
        %3223 = vmatmul.mubr.f32.gmra.mrb[0].mxu0 0.0
        %v3224 = vpop.f32.mrb[0].mxu0
        %v3225 = vadd.f32 0.0, %v3224
        %v3226 = vpop.f32.mrb[0].mxu0
        %v3227 = vadd.f32 0.0, %v3226
        %3228 = vdwg.mxu0
        %3229 = vmatprep.subr.mxu0 %v3097
        %3230 = vmatpush1.msra.mxu0 %v3096
        %3231 = vmatprep.subr.mxu0 %v3101
        %3232 = vmatpush1.msra.mxu0 %v3100
        %3233 = vmatprep.subr.mxu0 %v3105
        %3234 = vmatpush1.msra.mxu0 %v3104
        %3235 = vmatprep.subr.mxu0 %v3109
        %3236 = vmatpush1.msra.mxu0 %v3108
        %3237 = vmatprep.subr.mxu0 %v3113
        %3238 = vmatpush1.msra.mxu0 %v3112
        %3239 = vmatprep.subr.mxu0 %v3117
        %3240 = vmatpush1.msra.mxu0 %v3116
        %3241 = vmatprep.subr.mxu0 %v3121
        %3242 = vmatpush1.msra.mxu0 %v3120
        %3243 = vmatprep.subr.mxu0 %v3125
        %3244 = vmatpush1.msra.mxu0 %v3124
        %3245 = vmatprep.subr.mxu0 %v3129
        %3246 = vmatpush1.msra.mxu0 %v3128
        %3247 = vmatprep.subr.mxu0 %v3133
        %3248 = vmatpush1.msra.mxu0 %v3132
        %3249 = vmatprep.subr.mxu0 %v3137
        %3250 = vmatpush1.msra.mxu0 %v3136
        %3251 = vmatprep.subr.mxu0 %v3141
        %3252 = vmatpush1.msra.mxu0 %v3140
        %3253 = vmatprep.subr.mxu0 %v3145
        %3254 = vmatpush1.msra.mxu0 %v3144
        %3255 = vmatprep.subr.mxu0 %v3149
        %3256 = vmatpush1.msra.mxu0 %v3148
        %3257 = vmatprep.subr.mxu0 %v3153
        %3258 = vmatpush1.msra.mxu0 %v3152
        %3259 = vmatprep.subr.mxu0 %v3157
        %3260 = vmatpush1.msra.mxu0 %v3156
        %3261 = vmatprep.subr.mxu0 0.0
        %3262 = vmatpush1.msra.mxu0 0.0
        %3263 = vmatprep.subr.mxu0 0.0
        %3264 = vmatpush1.msra.mxu0 0.0
        %3265 = vmatprep.subr.mxu0 0.0
        %3266 = vmatpush1.msra.mxu0 0.0
        %3267 = vmatprep.subr.mxu0 0.0
        %3268 = vmatpush1.msra.mxu0 0.0
        %3269 = vmatprep.subr.mxu0 0.0
        %3270 = vmatpush1.msra.mxu0 0.0
        %3271 = vmatprep.subr.mxu0 0.0
        %3272 = vmatpush1.msra.mxu0 0.0
        %3273 = vmatprep.subr.mxu0 0.0
        %3274 = vmatpush1.msra.mxu0 0.0
        %3275 = vmatprep.subr.mxu0 0.0
        %3276 = vmatpush1.msra.mxu0 0.0
        %3277 = vmatprep.subr.mxu0 0.0
        %3278 = vmatpush1.msra.mxu0 0.0
        %3279 = vmatprep.subr.mxu0 0.0
        %3280 = vmatpush1.msra.mxu0 0.0
        %3281 = vmatprep.subr.mxu0 0.0
        %3282 = vmatpush1.msra.mxu0 0.0
        %3283 = vmatprep.subr.mxu0 0.0
        %3284 = vmatpush1.msra.mxu0 0.0
        %3285 = vmatprep.subr.mxu0 0.0
        %3286 = vmatpush1.msra.mxu0 0.0
        %3287 = vmatprep.subr.mxu0 0.0
        %3288 = vmatpush1.msra.mxu0 0.0
        %3289 = vmatprep.subr.mxu0 0.0
        %3290 = vmatpush1.msra.mxu0 0.0
        %3291 = vmatprep.subr.mxu0 0.0
        %3292 = vmatpush1.msra.mxu0 0.0
        %3293 = vmatprep.mubr.f32.mxu0 0.0
        %3294 = vmatmul.mubr.f32.gmra.mrb[0].mxu0 0.0
        %v3295 = vpop.f32.mrb[0].mxu0
        %v3296 = vadd.f32 0.0, %v3295
        %v3297 = vpop.f32.mrb[0].mxu0
        %v3298 = vadd.f32 0.0, %v3297
        %3299 = vdwg.mxu0
        %v3300 = vadd.f32 %v3090, %v3225
        %v3301 = vadd.f32 %v3091, %v3227
        %v3302 = vadd.f32 %v3092, %v3296
        %v3303 = vadd.f32 %v3093, %v3298
        %v3304 = vxor.u32 %v3300, 2147483648
        %v3305 = vmul.f32 %v3304, 1.442695
        %v3306 = vpow.pop %v3305
        %v3307 = vadd.f32 %v3306, 1.0
        %v3308 = vrcp.pop %v3307
        %v3309 = vmul.f32 1.0, %v3308
        %v3310 = vxor.u32 %v3301, 2147483648
        %v3311 = vmul.f32 %v3310, 1.442695
        %v3312 = vpow.pop %v3311
        %v3313 = vadd.f32 %v3312, 1.0
        %v3314 = vrcp.pop %v3313
        %v3315 = vmul.f32 1.0, %v3314
        %v3316 = vtanh.pop %v3302
        %v3317 = vxor.u32 %v3303, 2147483648
        %v3318 = vmul.f32 %v3317, 1.442695
        %v3319 = vpow.pop %v3318
        %v3320 = vadd.f32 %v3319, 1.0
        %v3321 = vrcp.pop %v3320
        %v3322 = vmul.f32 1.0, %v3321
        %v3323 = vmul.f32 %v3315, 0.0
        %v3324 = vmul.f32 %v3309, %v3316
        %v3325 = vadd.f32 %v3323, %v3324
        %v3326 = vtanh.pop %v3325
        %v3327 = vmul.f32 %v3322, %v3326
        %v3328 = vld [vmem:[%s1051] sm:$0xff]
        %v3329 = vld [vmem:[%s1051 + $0x8] sm:$0xff]
        %v3330 = vld [vmem:[%s1051 + $0x10] sm:$0xff]
        %v3331 = vld [vmem:[%s1051 + $0x18] sm:$0xff]
        %3332 = vmatprep.subr.mxu0 %v3095
        %3333 = vmatpush1.msra.mxu0 %v3094
        %3334 = vmatprep.subr.mxu0 %v3099
        %3335 = vmatpush1.msra.mxu0 %v3098
        %3336 = vmatprep.subr.mxu0 %v3103
        %3337 = vmatpush1.msra.mxu0 %v3102
        %3338 = vmatprep.subr.mxu0 %v3107
        %3339 = vmatpush1.msra.mxu0 %v3106
        %3340 = vmatprep.subr.mxu0 %v3111
        %3341 = vmatpush1.msra.mxu0 %v3110
        %3342 = vmatprep.subr.mxu0 %v3115
        %3343 = vmatpush1.msra.mxu0 %v3114
        %3344 = vmatprep.subr.mxu0 %v3119
        %3345 = vmatpush1.msra.mxu0 %v3118
        %3346 = vmatprep.subr.mxu0 %v3123
        %3347 = vmatpush1.msra.mxu0 %v3122
        %3348 = vmatprep.subr.mxu0 %v3127
        %3349 = vmatpush1.msra.mxu0 %v3126
        %3350 = vmatprep.subr.mxu0 %v3131
        %3351 = vmatpush1.msra.mxu0 %v3130
        %3352 = vmatprep.subr.mxu0 %v3135
        %3353 = vmatpush1.msra.mxu0 %v3134
        %3354 = vmatprep.subr.mxu0 %v3139
        %3355 = vmatpush1.msra.mxu0 %v3138
        %3356 = vmatprep.subr.mxu0 %v3143
        %3357 = vmatpush1.msra.mxu0 %v3142
        %3358 = vmatprep.subr.mxu0 %v3147
        %3359 = vmatpush1.msra.mxu0 %v3146
        %3360 = vmatprep.subr.mxu0 %v3151
        %3361 = vmatpush1.msra.mxu0 %v3150
        %3362 = vmatprep.subr.mxu0 %v3155
        %3363 = vmatpush1.msra.mxu0 %v3154
        %3364 = vmatprep.subr.mxu0 0.0
        %3365 = vmatpush1.msra.mxu0 0.0
        %3366 = vmatprep.subr.mxu0 0.0
        %3367 = vmatpush1.msra.mxu0 0.0
        %3368 = vmatprep.subr.mxu0 0.0
        %3369 = vmatpush1.msra.mxu0 0.0
        %3370 = vmatprep.subr.mxu0 0.0
        %3371 = vmatpush1.msra.mxu0 0.0
        %3372 = vmatprep.subr.mxu0 0.0
        %3373 = vmatpush1.msra.mxu0 0.0
        %3374 = vmatprep.subr.mxu0 0.0
        %3375 = vmatpush1.msra.mxu0 0.0
        %3376 = vmatprep.subr.mxu0 0.0
        %3377 = vmatpush1.msra.mxu0 0.0
        %3378 = vmatprep.subr.mxu0 0.0
        %3379 = vmatpush1.msra.mxu0 0.0
        %3380 = vmatprep.subr.mxu0 0.0
        %3381 = vmatpush1.msra.mxu0 0.0
        %3382 = vmatprep.subr.mxu0 0.0
        %3383 = vmatpush1.msra.mxu0 0.0
        %3384 = vmatprep.subr.mxu0 0.0
        %3385 = vmatpush1.msra.mxu0 0.0
        %3386 = vmatprep.subr.mxu0 0.0
        %3387 = vmatpush1.msra.mxu0 0.0
        %3388 = vmatprep.subr.mxu0 0.0
        %3389 = vmatpush1.msra.mxu0 0.0
        %3390 = vmatprep.subr.mxu0 0.0
        %3391 = vmatpush1.msra.mxu0 0.0
        %3392 = vmatprep.subr.mxu0 0.0
        %3393 = vmatpush1.msra.mxu0 0.0
        %3394 = vmatprep.subr.mxu0 0.0
        %3395 = vmatpush1.msra.mxu0 0.0
        %3396 = vmatprep.mubr.f32.mxu0 0.0
        %3397 = vmatmul.mubr.f32.gmra.mrb[0].mxu0 %v3327
        %v3398 = vpop.f32.mrb[0].mxu0
        %v3399 = vadd.f32 0.0, %v3398
        %v3400 = vpop.f32.mrb[0].mxu0
        %v3401 = vadd.f32 0.0, %v3400
        %3402 = vdwg.mxu0
        %3403 = vmatprep.subr.mxu0 %v3097
        %3404 = vmatpush1.msra.mxu0 %v3096
        %3405 = vmatprep.subr.mxu0 %v3101
        %3406 = vmatpush1.msra.mxu0 %v3100
        %3407 = vmatprep.subr.mxu0 %v3105
        %3408 = vmatpush1.msra.mxu0 %v3104
        %3409 = vmatprep.subr.mxu0 %v3109
        %3410 = vmatpush1.msra.mxu0 %v3108
        %3411 = vmatprep.subr.mxu0 %v3113
        %3412 = vmatpush1.msra.mxu0 %v3112
        %3413 = vmatprep.subr.mxu0 %v3117
        %3414 = vmatpush1.msra.mxu0 %v3116
        %3415 = vmatprep.subr.mxu0 %v3121
        %3416 = vmatpush1.msra.mxu0 %v3120
        %3417 = vmatprep.subr.mxu0 %v3125
        %3418 = vmatpush1.msra.mxu0 %v3124
        %3419 = vmatprep.subr.mxu0 %v3129
        %3420 = vmatpush1.msra.mxu0 %v3128
        %3421 = vmatprep.subr.mxu0 %v3133
        %3422 = vmatpush1.msra.mxu0 %v3132
        %3423 = vmatprep.subr.mxu0 %v3137
        %3424 = vmatpush1.msra.mxu0 %v3136
        %3425 = vmatprep.subr.mxu0 %v3141
        %3426 = vmatpush1.msra.mxu0 %v3140
        %3427 = vmatprep.subr.mxu0 %v3145
        %3428 = vmatpush1.msra.mxu0 %v3144
        %3429 = vmatprep.subr.mxu0 %v3149
        %3430 = vmatpush1.msra.mxu0 %v3148
        %3431 = vmatprep.subr.mxu0 %v3153
        %3432 = vmatpush1.msra.mxu0 %v3152
        %3433 = vmatprep.subr.mxu0 %v3157
        %3434 = vmatpush1.msra.mxu0 %v3156
        %3435 = vmatprep.subr.mxu0 0.0
        %3436 = vmatpush1.msra.mxu0 0.0
        %3437 = vmatprep.subr.mxu0 0.0
        %3438 = vmatpush1.msra.mxu0 0.0
        %3439 = vmatprep.subr.mxu0 0.0
        %3440 = vmatpush1.msra.mxu0 0.0
        %3441 = vmatprep.subr.mxu0 0.0
        %3442 = vmatpush1.msra.mxu0 0.0
        %3443 = vmatprep.subr.mxu0 0.0
        %3444 = vmatpush1.msra.mxu0 0.0
        %3445 = vmatprep.subr.mxu0 0.0
        %3446 = vmatpush1.msra.mxu0 0.0
        %3447 = vmatprep.subr.mxu0 0.0
        %3448 = vmatpush1.msra.mxu0 0.0
        %3449 = vmatprep.subr.mxu0 0.0
        %3450 = vmatpush1.msra.mxu0 0.0
        %3451 = vmatprep.subr.mxu0 0.0
        %3452 = vmatpush1.msra.mxu0 0.0
        %3453 = vmatprep.subr.mxu0 0.0
        %3454 = vmatpush1.msra.mxu0 0.0
        %3455 = vmatprep.subr.mxu0 0.0
        %3456 = vmatpush1.msra.mxu0 0.0
        %3457 = vmatprep.subr.mxu0 0.0
        %3458 = vmatpush1.msra.mxu0 0.0
        %3459 = vmatprep.subr.mxu0 0.0
        %3460 = vmatpush1.msra.mxu0 0.0
        %3461 = vmatprep.subr.mxu0 0.0
        %3462 = vmatpush1.msra.mxu0 0.0
        %3463 = vmatprep.subr.mxu0 0.0
        %3464 = vmatpush1.msra.mxu0 0.0
        %3465 = vmatprep.subr.mxu0 0.0
        %3466 = vmatpush1.msra.mxu0 0.0
        %3467 = vmatprep.mubr.f32.mxu0 0.0
        %3468 = vmatmul.mubr.f32.gmra.mrb[0].mxu0 %v3327
        %v3469 = vpop.f32.mrb[0].mxu0
        %v3470 = vadd.f32 0.0, %v3469
        %v3471 = vpop.f32.mrb[0].mxu0
        %v3472 = vadd.f32 0.0, %v3471
        %3473 = vdwg.mxu0
        %v3474 = vadd.f32 %v3328, %v3399
        %v3475 = vadd.f32 %v3329, %v3401
        %v3476 = vadd.f32 %v3330, %v3470
        %v3477 = vadd.f32 %v3331, %v3472
        %v3478 = vxor.u32 %v3474, 2147483648
        %v3479 = vmul.f32 %v3478, 1.442695
        %v3480 = vpow.pop %v3479
        %v3481 = vadd.f32 %v3480, 1.0
        %v3482 = vrcp.pop %v3481
        %v3483 = vmul.f32 1.0, %v3482
        %v3484 = vxor.u32 %v3475, 2147483648
        %v3485 = vmul.f32 %v3484, 1.442695
        %v3486 = vpow.pop %v3485
        %v3487 = vadd.f32 %v3486, 1.0
        %v3488 = vrcp.pop %v3487
        %v3489 = vmul.f32 1.0, %v3488
        %v3490 = vtanh.pop %v3476
        %v3491 = vxor.u32 %v3477, 2147483648
        %v3492 = vmul.f32 %v3491, 1.442695
        %v3493 = vpow.pop %v3492
        %v3494 = vadd.f32 %v3493, 1.0
        %v3495 = vrcp.pop %v3494
        %v3496 = vmul.f32 1.0, %v3495
        %v3497 = vmul.f32 %v3489, %v3325
        %v3498 = vmul.f32 %v3483, %v3490
        %v3499 = vadd.f32 %v3497, %v3498
        %v3500 = vtanh.pop %v3499
        %v3501 = vmul.f32 %v3496, %v3500
        %v3502 = vld [vmem:[%s1292] sm:$0xff]
        %v3503 = vld [vmem:[%s1292 + $0x8] sm:$0xff]
        %v3504 = vld [vmem:[%s1292 + $0x10] sm:$0xff]
        %v3505 = vld [vmem:[%s1292 + $0x18] sm:$0xff]
        %3506 = vmatprep.subr.mxu0 %v3095
        %3507 = vmatpush1.msra.mxu0 %v3094
        %3508 = vmatprep.subr.mxu0 %v3099
        %3509 = vmatpush1.msra.mxu0 %v3098
        %3510 = vmatprep.subr.mxu0 %v3103
        %3511 = vmatpush1.msra.mxu0 %v3102
        %3512 = vmatprep.subr.mxu0 %v3107
        %3513 = vmatpush1.msra.mxu0 %v3106
        %3514 = vmatprep.subr.mxu0 %v3111
        %3515 = vmatpush1.msra.mxu0 %v3110
        %3516 = vmatprep.subr.mxu0 %v3115
        %3517 = vmatpush1.msra.mxu0 %v3114
        %3518 = vmatprep.subr.mxu0 %v3119
        %3519 = vmatpush1.msra.mxu0 %v3118
        %3520 = vmatprep.subr.mxu0 %v3123
        %3521 = vmatpush1.msra.mxu0 %v3122
        %3522 = vmatprep.subr.mxu0 %v3127
        %3523 = vmatpush1.msra.mxu0 %v3126
        %3524 = vmatprep.subr.mxu0 %v3131
        %3525 = vmatpush1.msra.mxu0 %v3130
        %3526 = vmatprep.subr.mxu0 %v3135
        %3527 = vmatpush1.msra.mxu0 %v3134
        %3528 = vmatprep.subr.mxu0 %v3139
        %3529 = vmatpush1.msra.mxu0 %v3138
        %3530 = vmatprep.subr.mxu0 %v3143
        %3531 = vmatpush1.msra.mxu0 %v3142
        %3532 = vmatprep.subr.mxu0 %v3147
        %3533 = vmatpush1.msra.mxu0 %v3146
        %3534 = vmatprep.subr.mxu0 %v3151
        %3535 = vmatpush1.msra.mxu0 %v3150
        %3536 = vmatprep.subr.mxu0 %v3155
        %3537 = vmatpush1.msra.mxu0 %v3154
        %3538 = vmatprep.subr.mxu0 0.0
        %3539 = vmatpush1.msra.mxu0 0.0
        %3540 = vmatprep.subr.mxu0 0.0
        %3541 = vmatpush1.msra.mxu0 0.0
        %3542 = vmatprep.subr.mxu0 0.0
        %3543 = vmatpush1.msra.mxu0 0.0
        %3544 = vmatprep.subr.mxu0 0.0
        %3545 = vmatpush1.msra.mxu0 0.0
        %3546 = vmatprep.subr.mxu0 0.0
        %3547 = vmatpush1.msra.mxu0 0.0
        %3548 = vmatprep.subr.mxu0 0.0
        %3549 = vmatpush1.msra.mxu0 0.0
        %3550 = vmatprep.subr.mxu0 0.0
        %3551 = vmatpush1.msra.mxu0 0.0
        %3552 = vmatprep.subr.mxu0 0.0
        %3553 = vmatpush1.msra.mxu0 0.0
        %3554 = vmatprep.subr.mxu0 0.0
        %3555 = vmatpush1.msra.mxu0 0.0
        %3556 = vmatprep.subr.mxu0 0.0
        %3557 = vmatpush1.msra.mxu0 0.0
        %3558 = vmatprep.subr.mxu0 0.0
        %3559 = vmatpush1.msra.mxu0 0.0
        %3560 = vmatprep.subr.mxu0 0.0
        %3561 = vmatpush1.msra.mxu0 0.0
        %3562 = vmatprep.subr.mxu0 0.0
        %3563 = vmatpush1.msra.mxu0 0.0
        %3564 = vmatprep.subr.mxu0 0.0
        %3565 = vmatpush1.msra.mxu0 0.0
        %3566 = vmatprep.subr.mxu0 0.0
        %3567 = vmatpush1.msra.mxu0 0.0
        %3568 = vmatprep.subr.mxu0 0.0
        %3569 = vmatpush1.msra.mxu0 0.0
        %3570 = vmatprep.mubr.f32.mxu0 0.0
        %3571 = vmatmul.mubr.f32.gmra.mrb[0].mxu0 %v3501
        %v3572 = vpop.f32.mrb[0].mxu0
        %v3573 = vadd.f32 0.0, %v3572
        %v3574 = vpop.f32.mrb[0].mxu0
        %v3575 = vadd.f32 0.0, %v3574
        %3576 = vdwg.mxu0
        %3577 = vmatprep.subr.mxu0 %v3097
        %3578 = vmatpush1.msra.mxu0 %v3096
        %3579 = vmatprep.subr.mxu0 %v3101
        %3580 = vmatpush1.msra.mxu0 %v3100
        %3581 = vmatprep.subr.mxu0 %v3105
        %3582 = vmatpush1.msra.mxu0 %v3104
        %3583 = vmatprep.subr.mxu0 %v3109
        %3584 = vmatpush1.msra.mxu0 %v3108
        %3585 = vmatprep.subr.mxu0 %v3113
        %3586 = vmatpush1.msra.mxu0 %v3112
        %3587 = vmatprep.subr.mxu0 %v3117
        %3588 = vmatpush1.msra.mxu0 %v3116
        %3589 = vmatprep.subr.mxu0 %v3121
        %3590 = vmatpush1.msra.mxu0 %v3120
        %3591 = vmatprep.subr.mxu0 %v3125
        %3592 = vmatpush1.msra.mxu0 %v3124
        %3593 = vmatprep.subr.mxu0 %v3129
        %3594 = vmatpush1.msra.mxu0 %v3128
        %3595 = vmatprep.subr.mxu0 %v3133
        %3596 = vmatpush1.msra.mxu0 %v3132
        %3597 = vmatprep.subr.mxu0 %v3137
        %3598 = vmatpush1.msra.mxu0 %v3136
        %3599 = vmatprep.subr.mxu0 %v3141
        %3600 = vmatpush1.msra.mxu0 %v3140
        %3601 = vmatprep.subr.mxu0 %v3145
        %3602 = vmatpush1.msra.mxu0 %v3144
        %3603 = vmatprep.subr.mxu0 %v3149
        %3604 = vmatpush1.msra.mxu0 %v3148
        %3605 = vmatprep.subr.mxu0 %v3153
        %3606 = vmatpush1.msra.mxu0 %v3152
        %3607 = vmatprep.subr.mxu0 %v3157
        %3608 = vmatpush1.msra.mxu0 %v3156
        %3609 = vmatprep.subr.mxu0 0.0
        %3610 = vmatpush1.msra.mxu0 0.0
        %3611 = vmatprep.subr.mxu0 0.0
        %3612 = vmatpush1.msra.mxu0 0.0
        %3613 = vmatprep.subr.mxu0 0.0
        %3614 = vmatpush1.msra.mxu0 0.0
        %3615 = vmatprep.subr.mxu0 0.0
        %3616 = vmatpush1.msra.mxu0 0.0
        %3617 = vmatprep.subr.mxu0 0.0
        %3618 = vmatpush1.msra.mxu0 0.0
        %3619 = vmatprep.subr.mxu0 0.0
        %3620 = vmatpush1.msra.mxu0 0.0
        %3621 = vmatprep.subr.mxu0 0.0
        %3622 = vmatpush1.msra.mxu0 0.0
        %3623 = vmatprep.subr.mxu0 0.0
        %3624 = vmatpush1.msra.mxu0 0.0
        %3625 = vmatprep.subr.mxu0 0.0
        %3626 = vmatpush1.msra.mxu0 0.0
        %3627 = vmatprep.subr.mxu0 0.0
        %3628 = vmatpush1.msra.mxu0 0.0
        %3629 = vmatprep.subr.mxu0 0.0
        %3630 = vmatpush1.msra.mxu0 0.0
        %3631 = vmatprep.subr.mxu0 0.0
        %3632 = vmatpush1.msra.mxu0 0.0
        %3633 = vmatprep.subr.mxu0 0.0
        %3634 = vmatpush1.msra.mxu0 0.0
        %3635 = vmatprep.subr.mxu0 0.0
        %3636 = vmatpush1.msra.mxu0 0.0
        %3637 = vmatprep.subr.mxu0 0.0
        %3638 = vmatpush1.msra.mxu0 0.0
        %3639 = vmatprep.subr.mxu0 0.0
        %3640 = vmatpush1.msra.mxu0 0.0
        %3641 = vmatprep.mubr.f32.mxu0 0.0
        %3642 = vmatmul.mubr.f32.gmra.mrb[0].mxu0 %v3501
        %v3643 = vpop.f32.mrb[0].mxu0
        %v3644 = vadd.f32 0.0, %v3643
        %v3645 = vpop.f32.mrb[0].mxu0
        %v3646 = vadd.f32 0.0, %v3645
        %3647 = vdwg.mxu0
        %v3648 = vadd.f32 %v3502, %v3573
        %v3649 = vadd.f32 %v3503, %v3575
        %v3650 = vadd.f32 %v3504, %v3644
        %v3651 = vadd.f32 %v3505, %v3646
        %v3652 = vxor.u32 %v3648, 2147483648
        %v3653 = vmul.f32 %v3652, 1.442695
        %v3654 = vpow.pop %v3653
        %v3655 = vadd.f32 %v3654, 1.0
        %v3656 = vrcp.pop %v3655
        %v3657 = vmul.f32 1.0, %v3656
        %v3658 = vxor.u32 %v3649, 2147483648
        %v3659 = vmul.f32 %v3658, 1.442695
        %v3660 = vpow.pop %v3659
        %v3661 = vadd.f32 %v3660, 1.0
        %v3662 = vrcp.pop %v3661
        %v3663 = vmul.f32 1.0, %v3662
        %v3664 = vtanh.pop %v3650
        %v3665 = vxor.u32 %v3651, 2147483648
        %v3666 = vmul.f32 %v3665, 1.442695
        %v3667 = vpow.pop %v3666
        %v3668 = vadd.f32 %v3667, 1.0
        %v3669 = vrcp.pop %v3668
        %v3670 = vmul.f32 1.0, %v3669
        %v3671 = vmul.f32 %v3663, %v3499
        %v3672 = vmul.f32 %v3657, %v3664
        %v3673 = vadd.f32 %v3671, %v3672
        %v3674 = vtanh.pop %v3673
        %v3675 = vmul.f32 %v3670, %v3674
        %v3676 = vld [vmem:[%s1533] sm:$0xff]
        %v3677 = vld [vmem:[%s1533 + $0x8] sm:$0xff]
        %v3678 = vld [vmem:[%s1533 + $0x10] sm:$0xff]
        %v3679 = vld [vmem:[%s1533 + $0x18] sm:$0xff]
        %3680 = vmatprep.subr.mxu0 %v3095
        %3681 = vmatpush1.msra.mxu0 %v3094
        %3682 = vmatprep.subr.mxu0 %v3099
        %3683 = vmatpush1.msra.mxu0 %v3098
        %3684 = vmatprep.subr.mxu0 %v3103
        %3685 = vmatpush1.msra.mxu0 %v3102
        %3686 = vmatprep.subr.mxu0 %v3107
        %3687 = vmatpush1.msra.mxu0 %v3106
        %3688 = vmatprep.subr.mxu0 %v3111
        %3689 = vmatpush1.msra.mxu0 %v3110
        %3690 = vmatprep.subr.mxu0 %v3115
        %3691 = vmatpush1.msra.mxu0 %v3114
        %3692 = vmatprep.subr.mxu0 %v3119
        %3693 = vmatpush1.msra.mxu0 %v3118
        %3694 = vmatprep.subr.mxu0 %v3123
        %3695 = vmatpush1.msra.mxu0 %v3122
        %3696 = vmatprep.subr.mxu0 %v3127
        %3697 = vmatpush1.msra.mxu0 %v3126
        %3698 = vmatprep.subr.mxu0 %v3131
        %3699 = vmatpush1.msra.mxu0 %v3130
        %3700 = vmatprep.subr.mxu0 %v3135
        %3701 = vmatpush1.msra.mxu0 %v3134
        %3702 = vmatprep.subr.mxu0 %v3139
        %3703 = vmatpush1.msra.mxu0 %v3138
        %3704 = vmatprep.subr.mxu0 %v3143
        %3705 = vmatpush1.msra.mxu0 %v3142
        %3706 = vmatprep.subr.mxu0 %v3147
        %3707 = vmatpush1.msra.mxu0 %v3146
        %3708 = vmatprep.subr.mxu0 %v3151
        %3709 = vmatpush1.msra.mxu0 %v3150
        %3710 = vmatprep.subr.mxu0 %v3155
        %3711 = vmatpush1.msra.mxu0 %v3154
        %3712 = vmatprep.subr.mxu0 0.0
        %3713 = vmatpush1.msra.mxu0 0.0
        %3714 = vmatprep.subr.mxu0 0.0
        %3715 = vmatpush1.msra.mxu0 0.0
        %3716 = vmatprep.subr.mxu0 0.0
        %3717 = vmatpush1.msra.mxu0 0.0
        %3718 = vmatprep.subr.mxu0 0.0
        %3719 = vmatpush1.msra.mxu0 0.0
        %3720 = vmatprep.subr.mxu0 0.0
        %3721 = vmatpush1.msra.mxu0 0.0
        %3722 = vmatprep.subr.mxu0 0.0
        %3723 = vmatpush1.msra.mxu0 0.0
        %3724 = vmatprep.subr.mxu0 0.0
        %3725 = vmatpush1.msra.mxu0 0.0
        %3726 = vmatprep.subr.mxu0 0.0
        %3727 = vmatpush1.msra.mxu0 0.0
        %3728 = vmatprep.subr.mxu0 0.0
        %3729 = vmatpush1.msra.mxu0 0.0
        %3730 = vmatprep.subr.mxu0 0.0
        %3731 = vmatpush1.msra.mxu0 0.0
        %3732 = vmatprep.subr.mxu0 0.0
        %3733 = vmatpush1.msra.mxu0 0.0
        %3734 = vmatprep.subr.mxu0 0.0
        %3735 = vmatpush1.msra.mxu0 0.0
        %3736 = vmatprep.subr.mxu0 0.0
        %3737 = vmatpush1.msra.mxu0 0.0
        %3738 = vmatprep.subr.mxu0 0.0
        %3739 = vmatpush1.msra.mxu0 0.0
        %3740 = vmatprep.subr.mxu0 0.0
        %3741 = vmatpush1.msra.mxu0 0.0
        %3742 = vmatprep.subr.mxu0 0.0
        %3743 = vmatpush1.msra.mxu0 0.0
        %3744 = vmatprep.mubr.f32.mxu0 0.0
        %3745 = vmatmul.mubr.f32.gmra.mrb[0].mxu0 %v3675
        %v3746 = vpop.f32.mrb[0].mxu0
        %v3747 = vadd.f32 0.0, %v3746
        %v3748 = vpop.f32.mrb[0].mxu0
        %v3749 = vadd.f32 0.0, %v3748
        %3750 = vdwg.mxu0
        %3751 = vmatprep.subr.mxu0 %v3097
        %3752 = vmatpush1.msra.mxu0 %v3096
        %3753 = vmatprep.subr.mxu0 %v3101
        %3754 = vmatpush1.msra.mxu0 %v3100
        %3755 = vmatprep.subr.mxu0 %v3105
        %3756 = vmatpush1.msra.mxu0 %v3104
        %3757 = vmatprep.subr.mxu0 %v3109
        %3758 = vmatpush1.msra.mxu0 %v3108
        %3759 = vmatprep.subr.mxu0 %v3113
        %3760 = vmatpush1.msra.mxu0 %v3112
        %3761 = vmatprep.subr.mxu0 %v3117
        %3762 = vmatpush1.msra.mxu0 %v3116
        %3763 = vmatprep.subr.mxu0 %v3121
        %3764 = vmatpush1.msra.mxu0 %v3120
        %3765 = vmatprep.subr.mxu0 %v3125
        %3766 = vmatpush1.msra.mxu0 %v3124
        %3767 = vmatprep.subr.mxu0 %v3129
        %3768 = vmatpush1.msra.mxu0 %v3128
        %3769 = vmatprep.subr.mxu0 %v3133
        %3770 = vmatpush1.msra.mxu0 %v3132
        %3771 = vmatprep.subr.mxu0 %v3137
        %3772 = vmatpush1.msra.mxu0 %v3136
        %3773 = vmatprep.subr.mxu0 %v3141
        %3774 = vmatpush1.msra.mxu0 %v3140
        %3775 = vmatprep.subr.mxu0 %v3145
        %3776 = vmatpush1.msra.mxu0 %v3144
        %3777 = vmatprep.subr.mxu0 %v3149
        %3778 = vmatpush1.msra.mxu0 %v3148
        %3779 = vmatprep.subr.mxu0 %v3153
        %3780 = vmatpush1.msra.mxu0 %v3152
        %3781 = vmatprep.subr.mxu0 %v3157
        %3782 = vmatpush1.msra.mxu0 %v3156
        %3783 = vmatprep.subr.mxu0 0.0
        %3784 = vmatpush1.msra.mxu0 0.0
        %3785 = vmatprep.subr.mxu0 0.0
        %3786 = vmatpush1.msra.mxu0 0.0
        %3787 = vmatprep.subr.mxu0 0.0
        %3788 = vmatpush1.msra.mxu0 0.0
        %3789 = vmatprep.subr.mxu0 0.0
        %3790 = vmatpush1.msra.mxu0 0.0
        %3791 = vmatprep.subr.mxu0 0.0
        %3792 = vmatpush1.msra.mxu0 0.0
        %3793 = vmatprep.subr.mxu0 0.0
        %3794 = vmatpush1.msra.mxu0 0.0
        %3795 = vmatprep.subr.mxu0 0.0
        %3796 = vmatpush1.msra.mxu0 0.0
        %3797 = vmatprep.subr.mxu0 0.0
        %3798 = vmatpush1.msra.mxu0 0.0
        %3799 = vmatprep.subr.mxu0 0.0
        %3800 = vmatpush1.msra.mxu0 0.0
        %3801 = vmatprep.subr.mxu0 0.0
        %3802 = vmatpush1.msra.mxu0 0.0
        %3803 = vmatprep.subr.mxu0 0.0
        %3804 = vmatpush1.msra.mxu0 0.0
        %3805 = vmatprep.subr.mxu0 0.0
        %3806 = vmatpush1.msra.mxu0 0.0
        %3807 = vmatprep.subr.mxu0 0.0
        %3808 = vmatpush1.msra.mxu0 0.0
        %3809 = vmatprep.subr.mxu0 0.0
        %3810 = vmatpush1.msra.mxu0 0.0
        %3811 = vmatprep.subr.mxu0 0.0
        %3812 = vmatpush1.msra.mxu0 0.0
        %3813 = vmatprep.subr.mxu0 0.0
        %3814 = vmatpush1.msra.mxu0 0.0
        %3815 = vmatprep.mubr.f32.mxu0 0.0
        %3816 = vmatmul.mubr.f32.gmra.mrb[0].mxu0 %v3675
        %v3817 = vpop.f32.mrb[0].mxu0
        %v3818 = vadd.f32 0.0, %v3817
        %v3819 = vpop.f32.mrb[0].mxu0
        %v3820 = vadd.f32 0.0, %v3819
        %3821 = vdwg.mxu0
        %v3822 = vadd.f32 %v3676, %v3747
        %v3823 = vadd.f32 %v3677, %v3749
        %v3824 = vadd.f32 %v3678, %v3818
        %v3825 = vadd.f32 %v3679, %v3820
        %v3826 = vxor.u32 %v3822, 2147483648
        %v3827 = vmul.f32 %v3826, 1.442695
        %v3828 = vpow.pop %v3827
        %v3829 = vadd.f32 %v3828, 1.0
        %v3830 = vrcp.pop %v3829
        %v3831 = vmul.f32 1.0, %v3830
        %v3832 = vxor.u32 %v3823, 2147483648
        %v3833 = vmul.f32 %v3832, 1.442695
        %v3834 = vpow.pop %v3833
        %v3835 = vadd.f32 %v3834, 1.0
        %v3836 = vrcp.pop %v3835
        %v3837 = vmul.f32 1.0, %v3836
        %v3838 = vtanh.pop %v3824
        %v3839 = vxor.u32 %v3825, 2147483648
        %v3840 = vmul.f32 %v3839, 1.442695
        %v3841 = vpow.pop %v3840
        %v3842 = vadd.f32 %v3841, 1.0
        %v3843 = vrcp.pop %v3842
        %v3844 = vmul.f32 1.0, %v3843
        %v3845 = vmul.f32 %v3837, %v3673
        %v3846 = vmul.f32 %v3831, %v3838
        %v3847 = vadd.f32 %v3845, %v3846
        %v3848 = vtanh.pop %v3847
        %v3849 = vmul.f32 %v3844, %v3848
        %v3850 = vld [vmem:[%s1774] sm:$0xff]
        %v3851 = vld [vmem:[%s1774 + $0x8] sm:$0xff]
        %v3852 = vld [vmem:[%s1774 + $0x10] sm:$0xff]
        %v3853 = vld [vmem:[%s1774 + $0x18] sm:$0xff]
        %3854 = vmatprep.subr.mxu0 %v3095
        %3855 = vmatpush1.msra.mxu0 %v3094
        %3856 = vmatprep.subr.mxu0 %v3099
        %3857 = vmatpush1.msra.mxu0 %v3098
        %3858 = vmatprep.subr.mxu0 %v3103
        %3859 = vmatpush1.msra.mxu0 %v3102
        %3860 = vmatprep.subr.mxu0 %v3107
        %3861 = vmatpush1.msra.mxu0 %v3106
        %3862 = vmatprep.subr.mxu0 %v3111
        %3863 = vmatpush1.msra.mxu0 %v3110
        %3864 = vmatprep.subr.mxu0 %v3115
        %3865 = vmatpush1.msra.mxu0 %v3114
        %3866 = vmatprep.subr.mxu0 %v3119
        %3867 = vmatpush1.msra.mxu0 %v3118
        %3868 = vmatprep.subr.mxu0 %v3123
        %3869 = vmatpush1.msra.mxu0 %v3122
        %3870 = vmatprep.subr.mxu0 %v3127
        %3871 = vmatpush1.msra.mxu0 %v3126
        %3872 = vmatprep.subr.mxu0 %v3131
        %3873 = vmatpush1.msra.mxu0 %v3130
        %3874 = vmatprep.subr.mxu0 %v3135
        %3875 = vmatpush1.msra.mxu0 %v3134
        %3876 = vmatprep.subr.mxu0 %v3139
        %3877 = vmatpush1.msra.mxu0 %v3138
        %3878 = vmatprep.subr.mxu0 %v3143
        %3879 = vmatpush1.msra.mxu0 %v3142
        %3880 = vmatprep.subr.mxu0 %v3147
        %3881 = vmatpush1.msra.mxu0 %v3146
        %3882 = vmatprep.subr.mxu0 %v3151
        %3883 = vmatpush1.msra.mxu0 %v3150
        %3884 = vmatprep.subr.mxu0 %v3155
        %3885 = vmatpush1.msra.mxu0 %v3154
        %3886 = vmatprep.subr.mxu0 0.0
        %3887 = vmatpush1.msra.mxu0 0.0
        %3888 = vmatprep.subr.mxu0 0.0
        %3889 = vmatpush1.msra.mxu0 0.0
        %3890 = vmatprep.subr.mxu0 0.0
        %3891 = vmatpush1.msra.mxu0 0.0
        %3892 = vmatprep.subr.mxu0 0.0
        %3893 = vmatpush1.msra.mxu0 0.0
        %3894 = vmatprep.subr.mxu0 0.0
        %3895 = vmatpush1.msra.mxu0 0.0
        %3896 = vmatprep.subr.mxu0 0.0
        %3897 = vmatpush1.msra.mxu0 0.0
        %3898 = vmatprep.subr.mxu0 0.0
        %3899 = vmatpush1.msra.mxu0 0.0
        %3900 = vmatprep.subr.mxu0 0.0
        %3901 = vmatpush1.msra.mxu0 0.0
        %3902 = vmatprep.subr.mxu0 0.0
        %3903 = vmatpush1.msra.mxu0 0.0
        %3904 = vmatprep.subr.mxu0 0.0
        %3905 = vmatpush1.msra.mxu0 0.0
        %3906 = vmatprep.subr.mxu0 0.0
        %3907 = vmatpush1.msra.mxu0 0.0
        %3908 = vmatprep.subr.mxu0 0.0
        %3909 = vmatpush1.msra.mxu0 0.0
        %3910 = vmatprep.subr.mxu0 0.0
        %3911 = vmatpush1.msra.mxu0 0.0
        %3912 = vmatprep.subr.mxu0 0.0
        %3913 = vmatpush1.msra.mxu0 0.0
        %3914 = vmatprep.subr.mxu0 0.0
        %3915 = vmatpush1.msra.mxu0 0.0
        %3916 = vmatprep.subr.mxu0 0.0
        %3917 = vmatpush1.msra.mxu0 0.0
        %3918 = vmatprep.mubr.f32.mxu0 0.0
        %3919 = vmatmul.mubr.f32.gmra.mrb[0].mxu0 %v3849
        %v3920 = vpop.f32.mrb[0].mxu0
        %v3921 = vadd.f32 0.0, %v3920
        %v3922 = vpop.f32.mrb[0].mxu0
        %v3923 = vadd.f32 0.0, %v3922
        %3924 = vdwg.mxu0
        %3925 = vmatprep.subr.mxu0 %v3097
        %3926 = vmatpush1.msra.mxu0 %v3096
        %3927 = vmatprep.subr.mxu0 %v3101
        %3928 = vmatpush1.msra.mxu0 %v3100
        %3929 = vmatprep.subr.mxu0 %v3105
        %3930 = vmatpush1.msra.mxu0 %v3104
        %3931 = vmatprep.subr.mxu0 %v3109
        %3932 = vmatpush1.msra.mxu0 %v3108
        %3933 = vmatprep.subr.mxu0 %v3113
        %3934 = vmatpush1.msra.mxu0 %v3112
        %3935 = vmatprep.subr.mxu0 %v3117
        %3936 = vmatpush1.msra.mxu0 %v3116
        %3937 = vmatprep.subr.mxu0 %v3121
        %3938 = vmatpush1.msra.mxu0 %v3120
        %3939 = vmatprep.subr.mxu0 %v3125
        %3940 = vmatpush1.msra.mxu0 %v3124
        %3941 = vmatprep.subr.mxu0 %v3129
        %3942 = vmatpush1.msra.mxu0 %v3128
        %3943 = vmatprep.subr.mxu0 %v3133
        %3944 = vmatpush1.msra.mxu0 %v3132
        %3945 = vmatprep.subr.mxu0 %v3137
        %3946 = vmatpush1.msra.mxu0 %v3136
        %3947 = vmatprep.subr.mxu0 %v3141
        %3948 = vmatpush1.msra.mxu0 %v3140
        %3949 = vmatprep.subr.mxu0 %v3145
        %3950 = vmatpush1.msra.mxu0 %v3144
        %3951 = vmatprep.subr.mxu0 %v3149
        %3952 = vmatpush1.msra.mxu0 %v3148
        %3953 = vmatprep.subr.mxu0 %v3153
        %3954 = vmatpush1.msra.mxu0 %v3152
        %3955 = vmatprep.subr.mxu0 %v3157
        %3956 = vmatpush1.msra.mxu0 %v3156
        %3957 = vmatprep.subr.mxu0 0.0
        %3958 = vmatpush1.msra.mxu0 0.0
        %3959 = vmatprep.subr.mxu0 0.0
        %3960 = vmatpush1.msra.mxu0 0.0
        %3961 = vmatprep.subr.mxu0 0.0
        %3962 = vmatpush1.msra.mxu0 0.0
        %3963 = vmatprep.subr.mxu0 0.0
        %3964 = vmatpush1.msra.mxu0 0.0
        %3965 = vmatprep.subr.mxu0 0.0
        %3966 = vmatpush1.msra.mxu0 0.0
        %3967 = vmatprep.subr.mxu0 0.0
        %3968 = vmatpush1.msra.mxu0 0.0
        %3969 = vmatprep.subr.mxu0 0.0
        %3970 = vmatpush1.msra.mxu0 0.0
        %3971 = vmatprep.subr.mxu0 0.0
        %3972 = vmatpush1.msra.mxu0 0.0
        %3973 = vmatprep.subr.mxu0 0.0
        %3974 = vmatpush1.msra.mxu0 0.0
        %3975 = vmatprep.subr.mxu0 0.0
        %3976 = vmatpush1.msra.mxu0 0.0
        %3977 = vmatprep.subr.mxu0 0.0
        %3978 = vmatpush1.msra.mxu0 0.0
        %3979 = vmatprep.subr.mxu0 0.0
        %3980 = vmatpush1.msra.mxu0 0.0
        %3981 = vmatprep.subr.mxu0 0.0
        %3982 = vmatpush1.msra.mxu0 0.0
        %3983 = vmatprep.subr.mxu0 0.0
        %3984 = vmatpush1.msra.mxu0 0.0
        %3985 = vmatprep.subr.mxu0 0.0
        %3986 = vmatpush1.msra.mxu0 0.0
        %3987 = vmatprep.subr.mxu0 0.0
        %3988 = vmatpush1.msra.mxu0 0.0
        %3989 = vmatprep.mubr.f32.mxu0 0.0
        %3990 = vmatmul.mubr.f32.gmra.mrb[0].mxu0 %v3849
        %v3991 = vpop.f32.mrb[0].mxu0
        %v3992 = vadd.f32 0.0, %v3991
        %v3993 = vpop.f32.mrb[0].mxu0
        %v3994 = vadd.f32 0.0, %v3993
        %3995 = vdwg.mxu0
        %v3996 = vadd.f32 %v3850, %v3921
        %v3997 = vadd.f32 %v3851, %v3923
        %v3998 = vadd.f32 %v3852, %v3992
        %v3999 = vadd.f32 %v3853, %v3994
        %v4000 = vxor.u32 %v3996, 2147483648
        %v4001 = vmul.f32 %v4000, 1.442695
        %v4002 = vpow.pop %v4001
        %v4003 = vadd.f32 %v4002, 1.0
        %v4004 = vrcp.pop %v4003
        %v4005 = vmul.f32 1.0, %v4004
        %v4006 = vxor.u32 %v3997, 2147483648
        %v4007 = vmul.f32 %v4006, 1.442695
        %v4008 = vpow.pop %v4007
        %v4009 = vadd.f32 %v4008, 1.0
        %v4010 = vrcp.pop %v4009
        %v4011 = vmul.f32 1.0, %v4010
        %v4012 = vtanh.pop %v3998
        %v4013 = vxor.u32 %v3999, 2147483648
        %v4014 = vmul.f32 %v4013, 1.442695
        %v4015 = vpow.pop %v4014
        %v4016 = vadd.f32 %v4015, 1.0
        %v4017 = vrcp.pop %v4016
        %v4018 = vmul.f32 1.0, %v4017
        %v4019 = vmul.f32 %v4011, %v3847
        %v4020 = vmul.f32 %v4005, %v4012
        %v4021 = vadd.f32 %v4019, %v4020
        %v4022 = vtanh.pop %v4021
        %v4023 = vmul.f32 %v4018, %v4022
        %v4024 = vld [vmem:[%s2015] sm:$0xff]
        %v4025 = vld [vmem:[%s2015 + $0x8] sm:$0xff]
        %v4026 = vld [vmem:[%s2015 + $0x10] sm:$0xff]
        %v4027 = vld [vmem:[%s2015 + $0x18] sm:$0xff]
        %4028 = vmatprep.subr.mxu0 %v3095
        %4029 = vmatpush1.msra.mxu0 %v3094
        %4030 = vmatprep.subr.mxu0 %v3099
        %4031 = vmatpush1.msra.mxu0 %v3098
        %4032 = vmatprep.subr.mxu0 %v3103
        %4033 = vmatpush1.msra.mxu0 %v3102
        %4034 = vmatprep.subr.mxu0 %v3107
        %4035 = vmatpush1.msra.mxu0 %v3106
        %4036 = vmatprep.subr.mxu0 %v3111
        %4037 = vmatpush1.msra.mxu0 %v3110
        %4038 = vmatprep.subr.mxu0 %v3115
        %4039 = vmatpush1.msra.mxu0 %v3114
        %4040 = vmatprep.subr.mxu0 %v3119
        %4041 = vmatpush1.msra.mxu0 %v3118
        %4042 = vmatprep.subr.mxu0 %v3123
        %4043 = vmatpush1.msra.mxu0 %v3122
        %4044 = vmatprep.subr.mxu0 %v3127
        %4045 = vmatpush1.msra.mxu0 %v3126
        %4046 = vmatprep.subr.mxu0 %v3131
        %4047 = vmatpush1.msra.mxu0 %v3130
        %4048 = vmatprep.subr.mxu0 %v3135
        %4049 = vmatpush1.msra.mxu0 %v3134
        %4050 = vmatprep.subr.mxu0 %v3139
        %4051 = vmatpush1.msra.mxu0 %v3138
        %4052 = vmatprep.subr.mxu0 %v3143
        %4053 = vmatpush1.msra.mxu0 %v3142
        %4054 = vmatprep.subr.mxu0 %v3147
        %4055 = vmatpush1.msra.mxu0 %v3146
        %4056 = vmatprep.subr.mxu0 %v3151
        %4057 = vmatpush1.msra.mxu0 %v3150
        %4058 = vmatprep.subr.mxu0 %v3155
        %4059 = vmatpush1.msra.mxu0 %v3154
        %4060 = vmatprep.subr.mxu0 0.0
        %4061 = vmatpush1.msra.mxu0 0.0
        %4062 = vmatprep.subr.mxu0 0.0
        %4063 = vmatpush1.msra.mxu0 0.0
        %4064 = vmatprep.subr.mxu0 0.0
        %4065 = vmatpush1.msra.mxu0 0.0
        %4066 = vmatprep.subr.mxu0 0.0
        %4067 = vmatpush1.msra.mxu0 0.0
        %4068 = vmatprep.subr.mxu0 0.0
        %4069 = vmatpush1.msra.mxu0 0.0
        %4070 = vmatprep.subr.mxu0 0.0
        %4071 = vmatpush1.msra.mxu0 0.0
        %4072 = vmatprep.subr.mxu0 0.0
        %4073 = vmatpush1.msra.mxu0 0.0
        %4074 = vmatprep.subr.mxu0 0.0
        %4075 = vmatpush1.msra.mxu0 0.0
        %4076 = vmatprep.subr.mxu0 0.0
        %4077 = vmatpush1.msra.mxu0 0.0
        %4078 = vmatprep.subr.mxu0 0.0
        %4079 = vmatpush1.msra.mxu0 0.0
        %4080 = vmatprep.subr.mxu0 0.0
        %4081 = vmatpush1.msra.mxu0 0.0
        %4082 = vmatprep.subr.mxu0 0.0
        %4083 = vmatpush1.msra.mxu0 0.0
        %4084 = vmatprep.subr.mxu0 0.0
        %4085 = vmatpush1.msra.mxu0 0.0
        %4086 = vmatprep.subr.mxu0 0.0
        %4087 = vmatpush1.msra.mxu0 0.0
        %4088 = vmatprep.subr.mxu0 0.0
        %4089 = vmatpush1.msra.mxu0 0.0
        %4090 = vmatprep.subr.mxu0 0.0
        %4091 = vmatpush1.msra.mxu0 0.0
        %4092 = vmatprep.mubr.f32.mxu0 0.0
        %4093 = vmatmul.mubr.f32.gmra.mrb[0].mxu0 %v4023
        %v4094 = vpop.f32.mrb[0].mxu0
        %v4095 = vadd.f32 0.0, %v4094
        %v4096 = vpop.f32.mrb[0].mxu0
        %v4097 = vadd.f32 0.0, %v4096
        %4098 = vdwg.mxu0
        %4099 = vmatprep.subr.mxu0 %v3097
        %4100 = vmatpush1.msra.mxu0 %v3096
        %4101 = vmatprep.subr.mxu0 %v3101
        %4102 = vmatpush1.msra.mxu0 %v3100
        %4103 = vmatprep.subr.mxu0 %v3105
        %4104 = vmatpush1.msra.mxu0 %v3104
        %4105 = vmatprep.subr.mxu0 %v3109
        %4106 = vmatpush1.msra.mxu0 %v3108
        %4107 = vmatprep.subr.mxu0 %v3113
        %4108 = vmatpush1.msra.mxu0 %v3112
        %4109 = vmatprep.subr.mxu0 %v3117
        %4110 = vmatpush1.msra.mxu0 %v3116
        %4111 = vmatprep.subr.mxu0 %v3121
        %4112 = vmatpush1.msra.mxu0 %v3120
        %4113 = vmatprep.subr.mxu0 %v3125
        %4114 = vmatpush1.msra.mxu0 %v3124
        %4115 = vmatprep.subr.mxu0 %v3129
        %4116 = vmatpush1.msra.mxu0 %v3128
        %4117 = vmatprep.subr.mxu0 %v3133
        %4118 = vmatpush1.msra.mxu0 %v3132
        %4119 = vmatprep.subr.mxu0 %v3137
        %4120 = vmatpush1.msra.mxu0 %v3136
        %4121 = vmatprep.subr.mxu0 %v3141
        %4122 = vmatpush1.msra.mxu0 %v3140
        %4123 = vmatprep.subr.mxu0 %v3145
        %4124 = vmatpush1.msra.mxu0 %v3144
        %4125 = vmatprep.subr.mxu0 %v3149
        %4126 = vmatpush1.msra.mxu0 %v3148
        %4127 = vmatprep.subr.mxu0 %v3153
        %4128 = vmatpush1.msra.mxu0 %v3152
        %4129 = vmatprep.subr.mxu0 %v3157
        %4130 = vmatpush1.msra.mxu0 %v3156
        %4131 = vmatprep.subr.mxu0 0.0
        %4132 = vmatpush1.msra.mxu0 0.0
        %4133 = vmatprep.subr.mxu0 0.0
        %4134 = vmatpush1.msra.mxu0 0.0
        %4135 = vmatprep.subr.mxu0 0.0
        %4136 = vmatpush1.msra.mxu0 0.0
        %4137 = vmatprep.subr.mxu0 0.0
        %4138 = vmatpush1.msra.mxu0 0.0
        %4139 = vmatprep.subr.mxu0 0.0
        %4140 = vmatpush1.msra.mxu0 0.0
        %4141 = vmatprep.subr.mxu0 0.0
        %4142 = vmatpush1.msra.mxu0 0.0
        %4143 = vmatprep.subr.mxu0 0.0
        %4144 = vmatpush1.msra.mxu0 0.0
        %4145 = vmatprep.subr.mxu0 0.0
        %4146 = vmatpush1.msra.mxu0 0.0
        %4147 = vmatprep.subr.mxu0 0.0
        %4148 = vmatpush1.msra.mxu0 0.0
        %4149 = vmatprep.subr.mxu0 0.0
        %4150 = vmatpush1.msra.mxu0 0.0
        %4151 = vmatprep.subr.mxu0 0.0
        %4152 = vmatpush1.msra.mxu0 0.0
        %4153 = vmatprep.subr.mxu0 0.0
        %4154 = vmatpush1.msra.mxu0 0.0
        %4155 = vmatprep.subr.mxu0 0.0
        %4156 = vmatpush1.msra.mxu0 0.0
        %4157 = vmatprep.subr.mxu0 0.0
        %4158 = vmatpush1.msra.mxu0 0.0
        %4159 = vmatprep.subr.mxu0 0.0
        %4160 = vmatpush1.msra.mxu0 0.0
        %4161 = vmatprep.subr.mxu0 0.0
        %4162 = vmatpush1.msra.mxu0 0.0
        %4163 = vmatprep.mubr.f32.mxu0 0.0
        %4164 = vmatmul.mubr.f32.gmra.mrb[0].mxu0 %v4023
        %v4165 = vpop.f32.mrb[0].mxu0
        %v4166 = vadd.f32 0.0, %v4165
        %v4167 = vpop.f32.mrb[0].mxu0
        %v4168 = vadd.f32 0.0, %v4167
        %4169 = vdwg.mxu0
        %v4170 = vadd.f32 %v4024, %v4095
        %v4171 = vadd.f32 %v4025, %v4097
        %v4172 = vadd.f32 %v4026, %v4166
        %v4173 = vadd.f32 %v4027, %v4168
        %v4174 = vxor.u32 %v4170, 2147483648
        %v4175 = vmul.f32 %v4174, 1.442695
        %v4176 = vpow.pop %v4175
        %v4177 = vadd.f32 %v4176, 1.0
        %v4178 = vrcp.pop %v4177
        %v4179 = vmul.f32 1.0, %v4178
        %v4180 = vxor.u32 %v4171, 2147483648
        %v4181 = vmul.f32 %v4180, 1.442695
        %v4182 = vpow.pop %v4181
        %v4183 = vadd.f32 %v4182, 1.0
        %v4184 = vrcp.pop %v4183
        %v4185 = vmul.f32 1.0, %v4184
        %v4186 = vtanh.pop %v4172
        %v4187 = vxor.u32 %v4173, 2147483648
        %v4188 = vmul.f32 %v4187, 1.442695
        %v4189 = vpow.pop %v4188
        %v4190 = vadd.f32 %v4189, 1.0
        %v4191 = vrcp.pop %v4190
        %v4192 = vmul.f32 1.0, %v4191
        %v4193 = vmul.f32 %v4185, %v4021
        %v4194 = vmul.f32 %v4179, %v4186
        %v4195 = vadd.f32 %v4193, %v4194
        %v4196 = vtanh.pop %v4195
        %v4197 = vmul.f32 %v4192, %v4196
        %v4198 = vld [vmem:[%s2256] sm:$0xff]
        %v4199 = vld [vmem:[%s2256 + $0x8] sm:$0xff]
        %v4200 = vld [vmem:[%s2256 + $0x10] sm:$0xff]
        %v4201 = vld [vmem:[%s2256 + $0x18] sm:$0xff]
        %4202 = vmatprep.subr.mxu0 %v3095
        %4203 = vmatpush1.msra.mxu0 %v3094
        %4204 = vmatprep.subr.mxu0 %v3099
        %4205 = vmatpush1.msra.mxu0 %v3098
        %4206 = vmatprep.subr.mxu0 %v3103
        %4207 = vmatpush1.msra.mxu0 %v3102
        %4208 = vmatprep.subr.mxu0 %v3107
        %4209 = vmatpush1.msra.mxu0 %v3106
        %4210 = vmatprep.subr.mxu0 %v3111
        %4211 = vmatpush1.msra.mxu0 %v3110
        %4212 = vmatprep.subr.mxu0 %v3115
        %4213 = vmatpush1.msra.mxu0 %v3114
        %4214 = vmatprep.subr.mxu0 %v3119
        %4215 = vmatpush1.msra.mxu0 %v3118
        %4216 = vmatprep.subr.mxu0 %v3123
        %4217 = vmatpush1.msra.mxu0 %v3122
        %4218 = vmatprep.subr.mxu0 %v3127
        %4219 = vmatpush1.msra.mxu0 %v3126
        %4220 = vmatprep.subr.mxu0 %v3131
        %4221 = vmatpush1.msra.mxu0 %v3130
        %4222 = vmatprep.subr.mxu0 %v3135
        %4223 = vmatpush1.msra.mxu0 %v3134
        %4224 = vmatprep.subr.mxu0 %v3139
        %4225 = vmatpush1.msra.mxu0 %v3138
        %4226 = vmatprep.subr.mxu0 %v3143
        %4227 = vmatpush1.msra.mxu0 %v3142
        %4228 = vmatprep.subr.mxu0 %v3147
        %4229 = vmatpush1.msra.mxu0 %v3146
        %4230 = vmatprep.subr.mxu0 %v3151
        %4231 = vmatpush1.msra.mxu0 %v3150
        %4232 = vmatprep.subr.mxu0 %v3155
        %4233 = vmatpush1.msra.mxu0 %v3154
        %4234 = vmatprep.subr.mxu0 0.0
        %4235 = vmatpush1.msra.mxu0 0.0
        %4236 = vmatprep.subr.mxu0 0.0
        %4237 = vmatpush1.msra.mxu0 0.0
        %4238 = vmatprep.subr.mxu0 0.0
        %4239 = vmatpush1.msra.mxu0 0.0
        %4240 = vmatprep.subr.mxu0 0.0
        %4241 = vmatpush1.msra.mxu0 0.0
        %4242 = vmatprep.subr.mxu0 0.0
        %4243 = vmatpush1.msra.mxu0 0.0
        %4244 = vmatprep.subr.mxu0 0.0
        %4245 = vmatpush1.msra.mxu0 0.0
        %4246 = vmatprep.subr.mxu0 0.0
        %4247 = vmatpush1.msra.mxu0 0.0
        %4248 = vmatprep.subr.mxu0 0.0
        %4249 = vmatpush1.msra.mxu0 0.0
        %4250 = vmatprep.subr.mxu0 0.0
        %4251 = vmatpush1.msra.mxu0 0.0
        %4252 = vmatprep.subr.mxu0 0.0
        %4253 = vmatpush1.msra.mxu0 0.0
        %4254 = vmatprep.subr.mxu0 0.0
        %4255 = vmatpush1.msra.mxu0 0.0
        %4256 = vmatprep.subr.mxu0 0.0
        %4257 = vmatpush1.msra.mxu0 0.0
        %4258 = vmatprep.subr.mxu0 0.0
        %4259 = vmatpush1.msra.mxu0 0.0
        %4260 = vmatprep.subr.mxu0 0.0
        %4261 = vmatpush1.msra.mxu0 0.0
        %4262 = vmatprep.subr.mxu0 0.0
        %4263 = vmatpush1.msra.mxu0 0.0
        %4264 = vmatprep.subr.mxu0 0.0
        %4265 = vmatpush1.msra.mxu0 0.0
        %4266 = vmatprep.mubr.f32.mxu0 0.0
        %4267 = vmatmul.mubr.f32.gmra.mrb[0].mxu0 %v4197
        %v4268 = vpop.f32.mrb[0].mxu0
        %v4269 = vadd.f32 0.0, %v4268
        %v4270 = vpop.f32.mrb[0].mxu0
        %v4271 = vadd.f32 0.0, %v4270
        %4272 = vdwg.mxu0
        %4273 = vmatprep.subr.mxu0 %v3097
        %4274 = vmatpush1.msra.mxu0 %v3096
        %4275 = vmatprep.subr.mxu0 %v3101
        %4276 = vmatpush1.msra.mxu0 %v3100
        %4277 = vmatprep.subr.mxu0 %v3105
        %4278 = vmatpush1.msra.mxu0 %v3104
        %4279 = vmatprep.subr.mxu0 %v3109
        %4280 = vmatpush1.msra.mxu0 %v3108
        %4281 = vmatprep.subr.mxu0 %v3113
        %4282 = vmatpush1.msra.mxu0 %v3112
        %4283 = vmatprep.subr.mxu0 %v3117
        %4284 = vmatpush1.msra.mxu0 %v3116
        %4285 = vmatprep.subr.mxu0 %v3121
        %4286 = vmatpush1.msra.mxu0 %v3120
        %4287 = vmatprep.subr.mxu0 %v3125
        %4288 = vmatpush1.msra.mxu0 %v3124
        %4289 = vmatprep.subr.mxu0 %v3129
        %4290 = vmatpush1.msra.mxu0 %v3128
        %4291 = vmatprep.subr.mxu0 %v3133
        %4292 = vmatpush1.msra.mxu0 %v3132
        %4293 = vmatprep.subr.mxu0 %v3137
        %4294 = vmatpush1.msra.mxu0 %v3136
        %4295 = vmatprep.subr.mxu0 %v3141
        %4296 = vmatpush1.msra.mxu0 %v3140
        %4297 = vmatprep.subr.mxu0 %v3145
        %4298 = vmatpush1.msra.mxu0 %v3144
        %4299 = vmatprep.subr.mxu0 %v3149
        %4300 = vmatpush1.msra.mxu0 %v3148
        %4301 = vmatprep.subr.mxu0 %v3153
        %4302 = vmatpush1.msra.mxu0 %v3152
        %4303 = vmatprep.subr.mxu0 %v3157
        %4304 = vmatpush1.msra.mxu0 %v3156
        %4305 = vmatprep.subr.mxu0 0.0
        %4306 = vmatpush1.msra.mxu0 0.0
        %4307 = vmatprep.subr.mxu0 0.0
        %4308 = vmatpush1.msra.mxu0 0.0
        %4309 = vmatprep.subr.mxu0 0.0
        %4310 = vmatpush1.msra.mxu0 0.0
        %4311 = vmatprep.subr.mxu0 0.0
        %4312 = vmatpush1.msra.mxu0 0.0
        %4313 = vmatprep.subr.mxu0 0.0
        %4314 = vmatpush1.msra.mxu0 0.0
        %4315 = vmatprep.subr.mxu0 0.0
        %4316 = vmatpush1.msra.mxu0 0.0
        %4317 = vmatprep.subr.mxu0 0.0
        %4318 = vmatpush1.msra.mxu0 0.0
        %4319 = vmatprep.subr.mxu0 0.0
        %4320 = vmatpush1.msra.mxu0 0.0
        %4321 = vmatprep.subr.mxu0 0.0
        %4322 = vmatpush1.msra.mxu0 0.0
        %4323 = vmatprep.subr.mxu0 0.0
        %4324 = vmatpush1.msra.mxu0 0.0
        %4325 = vmatprep.subr.mxu0 0.0
        %4326 = vmatpush1.msra.mxu0 0.0
        %4327 = vmatprep.subr.mxu0 0.0
        %4328 = vmatpush1.msra.mxu0 0.0
        %4329 = vmatprep.subr.mxu0 0.0
        %4330 = vmatpush1.msra.mxu0 0.0
        %4331 = vmatprep.subr.mxu0 0.0
        %4332 = vmatpush1.msra.mxu0 0.0
        %4333 = vmatprep.subr.mxu0 0.0
        %4334 = vmatpush1.msra.mxu0 0.0
        %4335 = vmatprep.subr.mxu0 0.0
        %4336 = vmatpush1.msra.mxu0 0.0
        %4337 = vmatprep.mubr.f32.mxu0 0.0
        %4338 = vmatmul.mubr.f32.gmra.mrb[0].mxu0 %v4197
        %v4339 = vpop.f32.mrb[0].mxu0
        %v4340 = vadd.f32 0.0, %v4339
        %v4341 = vpop.f32.mrb[0].mxu0
        %v4342 = vadd.f32 0.0, %v4341
        %4343 = vdwg.mxu0
        %v4344 = vadd.f32 %v4198, %v4269
        %v4345 = vadd.f32 %v4199, %v4271
        %v4346 = vadd.f32 %v4200, %v4340
        %v4347 = vadd.f32 %v4201, %v4342
        %v4348 = vxor.u32 %v4344, 2147483648
        %v4349 = vmul.f32 %v4348, 1.442695
        %v4350 = vpow.pop %v4349
        %v4351 = vadd.f32 %v4350, 1.0
        %v4352 = vrcp.pop %v4351
        %v4353 = vmul.f32 1.0, %v4352
        %v4354 = vxor.u32 %v4345, 2147483648
        %v4355 = vmul.f32 %v4354, 1.442695
        %v4356 = vpow.pop %v4355
        %v4357 = vadd.f32 %v4356, 1.0
        %v4358 = vrcp.pop %v4357
        %v4359 = vmul.f32 1.0, %v4358
        %v4360 = vtanh.pop %v4346
        %v4361 = vxor.u32 %v4347, 2147483648
        %v4362 = vmul.f32 %v4361, 1.442695
        %v4363 = vpow.pop %v4362
        %v4364 = vadd.f32 %v4363, 1.0
        %v4365 = vrcp.pop %v4364
        %v4366 = vmul.f32 1.0, %v4365
        %v4367 = vmul.f32 %v4359, %v4195
        %v4368 = vmul.f32 %v4353, %v4360
        %v4369 = vadd.f32 %v4367, %v4368
        %v4370 = vtanh.pop %v4369
        %v4371 = vmul.f32 %v4366, %v4370
        %v4372 = vld [vmem:[%s2497] sm:$0xff]
        %v4373 = vld [vmem:[%s2497 + $0x8] sm:$0xff]
        %v4374 = vld [vmem:[%s2497 + $0x10] sm:$0xff]
        %v4375 = vld [vmem:[%s2497 + $0x18] sm:$0xff]
        %4376 = vmatprep.subr.mxu0 %v3095
        %4377 = vmatpush1.msra.mxu0 %v3094
        %4378 = vmatprep.subr.mxu0 %v3099
        %4379 = vmatpush1.msra.mxu0 %v3098
        %4380 = vmatprep.subr.mxu0 %v3103
        %4381 = vmatpush1.msra.mxu0 %v3102
        %4382 = vmatprep.subr.mxu0 %v3107
        %4383 = vmatpush1.msra.mxu0 %v3106
        %4384 = vmatprep.subr.mxu0 %v3111
        %4385 = vmatpush1.msra.mxu0 %v3110
        %4386 = vmatprep.subr.mxu0 %v3115
        %4387 = vmatpush1.msra.mxu0 %v3114
        %4388 = vmatprep.subr.mxu0 %v3119
        %4389 = vmatpush1.msra.mxu0 %v3118
        %4390 = vmatprep.subr.mxu0 %v3123
        %4391 = vmatpush1.msra.mxu0 %v3122
        %4392 = vmatprep.subr.mxu0 %v3127
        %4393 = vmatpush1.msra.mxu0 %v3126
        %4394 = vmatprep.subr.mxu0 %v3131
        %4395 = vmatpush1.msra.mxu0 %v3130
        %4396 = vmatprep.subr.mxu0 %v3135
        %4397 = vmatpush1.msra.mxu0 %v3134
        %4398 = vmatprep.subr.mxu0 %v3139
        %4399 = vmatpush1.msra.mxu0 %v3138
        %4400 = vmatprep.subr.mxu0 %v3143
        %4401 = vmatpush1.msra.mxu0 %v3142
        %4402 = vmatprep.subr.mxu0 %v3147
        %4403 = vmatpush1.msra.mxu0 %v3146
        %4404 = vmatprep.subr.mxu0 %v3151
        %4405 = vmatpush1.msra.mxu0 %v3150
        %4406 = vmatprep.subr.mxu0 %v3155
        %4407 = vmatpush1.msra.mxu0 %v3154
        %4408 = vmatprep.subr.mxu0 0.0
        %4409 = vmatpush1.msra.mxu0 0.0
        %4410 = vmatprep.subr.mxu0 0.0
        %4411 = vmatpush1.msra.mxu0 0.0
        %4412 = vmatprep.subr.mxu0 0.0
        %4413 = vmatpush1.msra.mxu0 0.0
        %4414 = vmatprep.subr.mxu0 0.0
        %4415 = vmatpush1.msra.mxu0 0.0
        %4416 = vmatprep.subr.mxu0 0.0
        %4417 = vmatpush1.msra.mxu0 0.0
        %4418 = vmatprep.subr.mxu0 0.0
        %4419 = vmatpush1.msra.mxu0 0.0
        %4420 = vmatprep.subr.mxu0 0.0
        %4421 = vmatpush1.msra.mxu0 0.0
        %4422 = vmatprep.subr.mxu0 0.0
        %4423 = vmatpush1.msra.mxu0 0.0
        %4424 = vmatprep.subr.mxu0 0.0
        %4425 = vmatpush1.msra.mxu0 0.0
        %4426 = vmatprep.subr.mxu0 0.0
        %4427 = vmatpush1.msra.mxu0 0.0
        %4428 = vmatprep.subr.mxu0 0.0
        %4429 = vmatpush1.msra.mxu0 0.0
        %4430 = vmatprep.subr.mxu0 0.0
        %4431 = vmatpush1.msra.mxu0 0.0
        %4432 = vmatprep.subr.mxu0 0.0
        %4433 = vmatpush1.msra.mxu0 0.0
        %4434 = vmatprep.subr.mxu0 0.0
        %4435 = vmatpush1.msra.mxu0 0.0
        %4436 = vmatprep.subr.mxu0 0.0
        %4437 = vmatpush1.msra.mxu0 0.0
        %4438 = vmatprep.subr.mxu0 0.0
        %4439 = vmatpush1.msra.mxu0 0.0
        %4440 = vmatprep.mubr.f32.mxu0 0.0
        %4441 = vmatmul.mubr.f32.gmra.mrb[0].mxu0 %v4371
        %v4442 = vpop.f32.mrb[0].mxu0
        %v4443 = vadd.f32 0.0, %v4442
        %v4444 = vpop.f32.mrb[0].mxu0
        %v4445 = vadd.f32 0.0, %v4444
        %4446 = vdwg.mxu0
        %4447 = vmatprep.subr.mxu0 %v3097
        %4448 = vmatpush1.msra.mxu0 %v3096
        %4449 = vmatprep.subr.mxu0 %v3101
        %4450 = vmatpush1.msra.mxu0 %v3100
        %4451 = vmatprep.subr.mxu0 %v3105
        %4452 = vmatpush1.msra.mxu0 %v3104
        %4453 = vmatprep.subr.mxu0 %v3109
        %4454 = vmatpush1.msra.mxu0 %v3108
        %4455 = vmatprep.subr.mxu0 %v3113
        %4456 = vmatpush1.msra.mxu0 %v3112
        %4457 = vmatprep.subr.mxu0 %v3117
        %4458 = vmatpush1.msra.mxu0 %v3116
        %4459 = vmatprep.subr.mxu0 %v3121
        %4460 = vmatpush1.msra.mxu0 %v3120
        %4461 = vmatprep.subr.mxu0 %v3125
        %4462 = vmatpush1.msra.mxu0 %v3124
        %4463 = vmatprep.subr.mxu0 %v3129
        %4464 = vmatpush1.msra.mxu0 %v3128
        %4465 = vmatprep.subr.mxu0 %v3133
        %4466 = vmatpush1.msra.mxu0 %v3132
        %4467 = vmatprep.subr.mxu0 %v3137
        %4468 = vmatpush1.msra.mxu0 %v3136
        %4469 = vmatprep.subr.mxu0 %v3141
        %4470 = vmatpush1.msra.mxu0 %v3140
        %4471 = vmatprep.subr.mxu0 %v3145
        %4472 = vmatpush1.msra.mxu0 %v3144
        %4473 = vmatprep.subr.mxu0 %v3149
        %4474 = vmatpush1.msra.mxu0 %v3148
        %4475 = vmatprep.subr.mxu0 %v3153
        %4476 = vmatpush1.msra.mxu0 %v3152
        %4477 = vmatprep.subr.mxu0 %v3157
        %4478 = vmatpush1.msra.mxu0 %v3156
        %4479 = vmatprep.subr.mxu0 0.0
        %4480 = vmatpush1.msra.mxu0 0.0
        %4481 = vmatprep.subr.mxu0 0.0
        %4482 = vmatpush1.msra.mxu0 0.0
        %4483 = vmatprep.subr.mxu0 0.0
        %4484 = vmatpush1.msra.mxu0 0.0
        %4485 = vmatprep.subr.mxu0 0.0
        %4486 = vmatpush1.msra.mxu0 0.0
        %4487 = vmatprep.subr.mxu0 0.0
        %4488 = vmatpush1.msra.mxu0 0.0
        %4489 = vmatprep.subr.mxu0 0.0
        %4490 = vmatpush1.msra.mxu0 0.0
        %4491 = vmatprep.subr.mxu0 0.0
        %4492 = vmatpush1.msra.mxu0 0.0
        %4493 = vmatprep.subr.mxu0 0.0
        %4494 = vmatpush1.msra.mxu0 0.0
        %4495 = vmatprep.subr.mxu0 0.0
        %4496 = vmatpush1.msra.mxu0 0.0
        %4497 = vmatprep.subr.mxu0 0.0
        %4498 = vmatpush1.msra.mxu0 0.0
        %4499 = vmatprep.subr.mxu0 0.0
        %4500 = vmatpush1.msra.mxu0 0.0
        %4501 = vmatprep.subr.mxu0 0.0
        %4502 = vmatpush1.msra.mxu0 0.0
        %4503 = vmatprep.subr.mxu0 0.0
        %4504 = vmatpush1.msra.mxu0 0.0
        %4505 = vmatprep.subr.mxu0 0.0
        %4506 = vmatpush1.msra.mxu0 0.0
        %4507 = vmatprep.subr.mxu0 0.0
        %4508 = vmatpush1.msra.mxu0 0.0
        %4509 = vmatprep.subr.mxu0 0.0
        %4510 = vmatpush1.msra.mxu0 0.0
        %4511 = vmatprep.mubr.f32.mxu0 0.0
        %4512 = vmatmul.mubr.f32.gmra.mrb[0].mxu0 %v4371
        %v4513 = vpop.f32.mrb[0].mxu0
        %v4514 = vadd.f32 0.0, %v4513
        %v4515 = vpop.f32.mrb[0].mxu0
        %v4516 = vadd.f32 0.0, %v4515
        %4517 = vdwg.mxu0
        %v4518 = vadd.f32 %v4372, %v4443
        %v4519 = vadd.f32 %v4373, %v4445
        %v4520 = vadd.f32 %v4374, %v4514
        %v4521 = vadd.f32 %v4375, %v4516
        %v4522 = vxor.u32 %v4518, 2147483648
        %v4523 = vmul.f32 %v4522, 1.442695
        %v4524 = vpow.pop %v4523
        %v4525 = vadd.f32 %v4524, 1.0
        %v4526 = vrcp.pop %v4525
        %v4527 = vmul.f32 1.0, %v4526
        %v4528 = vxor.u32 %v4519, 2147483648
        %v4529 = vmul.f32 %v4528, 1.442695
        %v4530 = vpow.pop %v4529
        %v4531 = vadd.f32 %v4530, 1.0
        %v4532 = vrcp.pop %v4531
        %v4533 = vmul.f32 1.0, %v4532
        %v4534 = vtanh.pop %v4520
        %v4535 = vxor.u32 %v4521, 2147483648
        %v4536 = vmul.f32 %v4535, 1.442695
        %v4537 = vpow.pop %v4536
        %v4538 = vadd.f32 %v4537, 1.0
        %v4539 = vrcp.pop %v4538
        %v4540 = vmul.f32 1.0, %v4539
        %v4541 = vmul.f32 %v4533, %v4369
        %v4542 = vmul.f32 %v4527, %v4534
        %v4543 = vadd.f32 %v4541, %v4542
        %v4544 = vtanh.pop %v4543
        %v4545 = vmul.f32 %v4540, %v4544
        %v4546 = vmax.f32 %v4545, 0.0
        %v4547 = vld [vmem:[#allocation17] sm:$0xff]
        %v4548 = vld [vmem:[#allocation17 + $0x8] sm:$0xff]
        %v4549 = vld [vmem:[#allocation17 + $0x10] sm:$0xff]
        %v4550 = vld [vmem:[#allocation17 + $0x18] sm:$0xff]
        %v4551 = vld [vmem:[#allocation17 + $0x20] sm:$0xff]
        %v4552 = vld [vmem:[#allocation17 + $0x28] sm:$0xff]
        %v4553 = vld [vmem:[#allocation17 + $0x30] sm:$0xff]
        %v4554 = vld [vmem:[#allocation17 + $0x38] sm:$0xff]
        %v4555 = vld [vmem:[#allocation17 + $0x40] sm:$0xff]
        %v4556 = vld [vmem:[#allocation17 + $0x48] sm:$0xff]
        %v4557 = vld [vmem:[#allocation17 + $0x50] sm:$0xff]
        %v4558 = vld [vmem:[#allocation17 + $0x58] sm:$0xff]
        %v4559 = vld [vmem:[#allocation17 + $0x60] sm:$0xff]
        %v4560 = vld [vmem:[#allocation17 + $0x68] sm:$0xff]
        %v4561 = vld [vmem:[#allocation17 + $0x70] sm:$0xff]
        %v4562 = vld [vmem:[#allocation17 + $0x78] sm:$0xff]
        %v4563 = vld [vmem:[#allocation19] sm:$0x1]
        %v4565 = vlaneseq
        %v4566 = vshrl.u32 %v4565, 7
        %v4567 = vsub.s32 0, %v4566
        %v4568 = vrot.slane %v4563, %v4567
        %4570 = vmatprep.subr.mxu0 0.0
        %4571 = vmatpush1.msra.mxu0 %v4547
        %4572 = vmatprep.subr.mxu0 0.0
        %4573 = vmatpush1.msra.mxu0 %v4548
        %4574 = vmatprep.subr.mxu0 0.0
        %4575 = vmatpush1.msra.mxu0 %v4549
        %4576 = vmatprep.subr.mxu0 0.0
        %4577 = vmatpush1.msra.mxu0 %v4550
        %4578 = vmatprep.subr.mxu0 0.0
        %4579 = vmatpush1.msra.mxu0 %v4551
        %4580 = vmatprep.subr.mxu0 0.0
        %4581 = vmatpush1.msra.mxu0 %v4552
        %4582 = vmatprep.subr.mxu0 0.0
        %4583 = vmatpush1.msra.mxu0 %v4553
        %4584 = vmatprep.subr.mxu0 0.0
        %4585 = vmatpush1.msra.mxu0 %v4554
        %4586 = vmatprep.subr.mxu0 0.0
        %4587 = vmatpush1.msra.mxu0 %v4555
        %4588 = vmatprep.subr.mxu0 0.0
        %4589 = vmatpush1.msra.mxu0 %v4556
        %4590 = vmatprep.subr.mxu0 0.0
        %4591 = vmatpush1.msra.mxu0 %v4557
        %4592 = vmatprep.subr.mxu0 0.0
        %4593 = vmatpush1.msra.mxu0 %v4558
        %4594 = vmatprep.subr.mxu0 0.0
        %4595 = vmatpush1.msra.mxu0 %v4559
        %4596 = vmatprep.subr.mxu0 0.0
        %4597 = vmatpush1.msra.mxu0 %v4560
        %4598 = vmatprep.subr.mxu0 0.0
        %4599 = vmatpush1.msra.mxu0 %v4561
        %4600 = vmatprep.subr.mxu0 0.0
        %4601 = vmatpush1.msra.mxu0 %v4562
        %4602 = vmatprep.subr.mxu0 0.0
        %4603 = vmatpush1.msra.mxu0 0.0
        %4604 = vmatprep.subr.mxu0 0.0
        %4605 = vmatpush1.msra.mxu0 0.0
        %4606 = vmatprep.subr.mxu0 0.0
        %4607 = vmatpush1.msra.mxu0 0.0
        %4608 = vmatprep.subr.mxu0 0.0
        %4609 = vmatpush1.msra.mxu0 0.0
        %4610 = vmatprep.subr.mxu0 0.0
        %4611 = vmatpush1.msra.mxu0 0.0
        %4612 = vmatprep.subr.mxu0 0.0
        %4613 = vmatpush1.msra.mxu0 0.0
        %4614 = vmatprep.subr.mxu0 0.0
        %4615 = vmatpush1.msra.mxu0 0.0
        %4616 = vmatprep.subr.mxu0 0.0
        %4617 = vmatpush1.msra.mxu0 0.0
        %4618 = vmatprep.subr.mxu0 0.0
        %4619 = vmatpush1.msra.mxu0 0.0
        %4620 = vmatprep.subr.mxu0 0.0
        %4621 = vmatpush1.msra.mxu0 0.0
        %4622 = vmatprep.subr.mxu0 0.0
        %4623 = vmatpush1.msra.mxu0 0.0
        %4624 = vmatprep.subr.mxu0 0.0
        %4625 = vmatpush1.msra.mxu0 0.0
        %4626 = vmatprep.subr.mxu0 0.0
        %4627 = vmatpush1.msra.mxu0 0.0
        %4628 = vmatprep.subr.mxu0 0.0
        %4629 = vmatpush1.msra.mxu0 0.0
        %4630 = vmatprep.subr.mxu0 0.0
        %4631 = vmatpush1.msra.mxu0 0.0
        %4632 = vmatprep.subr.mxu0 0.0
        %4633 = vmatpush1.msra.mxu0 0.0
        %4634 = vmatprep.mubr.f32.mxu0 0.0
        %4635 = vmatmul.mubr.f32.gmra.mrb[0].mxu0 %v4546
        %v4636 = vpop.f32.mrb[0].mxu0
        %v4637 = vadd.f32 %v4568, %v4636
        %v4638 = vpop.f32.mrb[0].mxu0
        %4639 = vdwg.mxu0
        %4640 = vst [vmem:[%s459] sm:$0xff] %v4637
        %s4641 = sand.u32 %s232, 1
        %s4642 = scalar_lea.sflag [#allocation7], %s4641
        %s4643 = sand.u32 %s232, 1
        %s4644 = smul.addr %s4643, 8
        %s4645 = scalar_lea.vmem [#allocation20], %s4644
        // Predicated region
        $region93: #{_lstm_srs_forward.1} parent=55 // pred_check
          %p4646 = pneg %p242
        $region94: #{_lstm_srs_forward.1} parent=55 // pred_check_branch
          %4648 = sbr.rel (%p4646) target = $region96
        $region95: #{_lstm_srs_forward.1} parent=55 // pred_region
          %s4650 = ssub.s32 128, 128
          %4651 = vsyncadd %s4642, %s4650
          %s4652 = smul.addr %s30, 128
          %s4653 = scalar_lea.hbm %s9, %s4652
          %s4655 = sshll.u32 %s4645, 4
          %s4656 = int_to_ptr.vmem [resolvable:$true] %s4655
          %4658 = dma.vmem_to_hbm [thread:$0]  %s4656, 128, %s4653, %s4642
        $region96: #{_lstm_srs_forward.1} parent=55 // pred_fallthru
          _
      $region56: #{_lstm_srs_forward.1} parent=5 // pred_fallthru
        _
      %p4659 = scmp.le.s32.totalorder 2, %s25
      // Predicated region
      $region97: #{_lstm_srs_forward.1} parent=5 // pred_check
        %p4660 = pneg %p4659
      $region98: #{_lstm_srs_forward.1} parent=5 // pred_check_branch
        %4662 = sbr.rel (%p4660) target = $region100
      $region99: #{_lstm_srs_forward.1} parent=5 // pred_region
        %s4663 = ssub.s32 %s25, 2
        // Predicated region
        $region101: #{_lstm_srs_forward.1} parent=99 // pred_check
          %p4664 = pneg %p248
        $region102: #{_lstm_srs_forward.1} parent=99 // pred_check_branch
          %4666 = sbr.rel (%p4664) target = $region104
        $region103: #{_lstm_srs_forward.1} parent=99 // pred_region
          %s4667 = sand.u32 %s233, 1
          %s4668 = scalar_lea.sflag [#allocation7], %s4667
          %s4669 = sand.u32 %s233, 1
          %s4670 = smul.addr %s4669, 8
          %s4671 = scalar_lea.vmem [#allocation20], %s4670
          %4672 = dma.done %s4668, 128
        $region104: #{_lstm_srs_forward.1} parent=99 // pred_fallthru
          _
      $region100: #{_lstm_srs_forward.1} parent=5 // pred_fallthru
        _
    $region6: #{_lstm_srs_forward.1} parent=1 // loop_footer
      %s29 = sadd.s32 1, %s25
    $region7: #{_lstm_srs_forward.1} parent=1 // loop_footer_branch
      %24 = sbr.rel target = $region3
    $region8: #{_lstm_srs_forward.1} parent=1 // loop_exit
      _
    %4673 = vsyncpa [#allocation6], 1
    %s4674 = scalar_lea.sflag [#allocation6], 1
    %4675 = vsyncpa %s4674, 1
    %4676 = vsyncpa [#allocation9], 1
    %4677 = vsyncpa [#allocation12], 1
    %4678 = vsyncpa [#allocation15], 1
    %4679 = vsyncpa [#allocation18], 1
    %4680 = vsyncpa [#allocation7], 1
    %s4681 = scalar_lea.sflag [#allocation7], 1
    %4682 = vsyncpa %s4681, 1

</llo_original>
